<compile_context>
chip_gen: v5e
topology: v5e:2x2
jax: 0.10.0
libtpu: 0.0.40
codegen_flags: <defaults>
</compile_context>

<pallas_src>
import math

import numpy as np
import jax
import jax.numpy as jnp
from jax.experimental import pallas as pl
from jax.experimental.pallas import tpu as pltpu

BP = 8  # padded rows per timestep (sublane tile height)


# ----------------------------------------------------------------------------
# Fused kernel: layer0 + layer1 (both branches, both directions) + FC head.
# ----------------------------------------------------------------------------
def make_fused_kernel(T, B, H):
    H2, H4, H12, H16 = 2 * H, 4 * H, 12 * H, 16 * H

    def kernel(x_ref, wih0_ref, whh0_ref, b0_ref,
               wih1_ref, whh1_ref, b1_ref,
               w1_ref, fb1_ref, w2_ref, fb2_ref,
               o_ref, x1_sc):
        # x_ref:   (T*BP, 4E)   augmented, row-padded layer-0 input (processing order)
        # wih*:    (Din, 16H)   block-structured input->gate weights (gate order I|F|O|G)
        # whh*:    (4H, 16H)    block-diagonal hidden->gate weights
        # b*:      (1, 16H)     combined bias (b_ih + b_hh) for all 4 cells
        # w1/fb1:  (8H, 2H*L),(1, 2H*L)  fc layer 1 (rows pre-permuted to kernel layout)
        # w2/fb2:  (2H*L, 2),(1, 2)      fc layer 2
        # o_ref:   (B, 2)        softmax output
        # x1_sc:   VMEM (T*BP, 8H) layer-1 augmented input, built during the layer-0 loop

        def run_layer(x_val, wih_ref, whh_ref, b_ref, emit):
            # Hoisted input projection for the whole (augmented) sequence.
            gx = jnp.dot(x_val, wih_ref[...],
                         preferred_element_type=jnp.float32) + b_ref[...]
            whh = whh_ref[...]
            h = jnp.zeros((BP, H4), jnp.float32)   # [b0fwd | b1fwd | b0rev | b1rev]
            c = jnp.zeros((BP, H4), jnp.float32)
            # Static fully-unrolled recurrence (T is small).  fwd and rev directions of
            # BOTH branches advance in the same iteration via one block-diag matmul.
            for s in range(T):
                g = gx[s * BP:(s + 1) * BP, :] + jnp.dot(
                    h, whh, preferred_element_type=jnp.float32)      # (BP, 16H)
                sg = jax.nn.sigmoid(g[:, :H12])                      # I | F | O
                gg = jnp.tanh(g[:, H12:])                            # G
                c = sg[:, H4:2 * H4] * c + sg[:, :H4] * gg
                h = sg[:, 2 * H4:H12] * jnp.tanh(c)
                if emit is not None:
                    emit(s, h)
            return h  # final hidden states of all 4 cells

        def emit_layer0(s, h):
            # h (iteration s) = [fwd@s | rev@(T-1-s)] for both branches.
            # Layer-1 input row block s holds [h(iter s) | h(iter T-1-s)]  (whole-tile stores).
            r = T - 1 - s
            x1_sc[s * BP:(s + 1) * BP, 0:H4] = h
            x1_sc[r * BP:(r + 1) * BP, H4:2 * H4] = h

        h_l0 = run_layer(x_ref[...], wih0_ref, whh0_ref, b0_ref, emit_layer0)
        h_l1 = run_layer(x1_sc[...], wih1_ref, whh1_ref, b1_ref, None)

        # Feature map: lane-dense (BP, 8H); fc_w1 rows are pre-permuted to this layout.
        feat = jnp.concatenate([h_l0, h_l1], axis=-1)
        z = jax.nn.sigmoid(
            jnp.dot(feat, w1_ref[...], preferred_element_type=jnp.float32) + fb1_ref[...])
        logits = jnp.dot(z, w2_ref[...], preferred_element_type=jnp.float32) + fb2_ref[...]
        m = jnp.max(logits, axis=-1, keepdims=True)
        e = jnp.exp(logits - m)
        probs = e / jnp.sum(e, axis=-1, keepdims=True)
        o_ref[...] = probs[:B, :]

    return kernel


# ----------------------------------------------------------------------------
# Parameter construction: torch-layout xavier params -> fused block matrices.
# Cell ordering k: 0=(branch0,fwd) 1=(branch1,fwd) 2=(branch0,rev) 3=(branch1,rev)
# Global gate order: [i, f, o, g]  (torch order is [i, f, g, o]).
# ----------------------------------------------------------------------------
GATE_PERM = (0, 1, 3, 2)                       # global gate block -> torch gate index
RECS = ((0, 0), (1, 0), (0, 1), (1, 1))        # (branch, direction) per cell k


def _xavier(key, shape):
    fan_out, fan_in = shape
    a = math.sqrt(6.0 / (fan_in + fan_out))
    return np.asarray(jax.random.uniform(key, shape, jnp.float32, -a, a))


def build_params(key, E, H, L=2):
    # Raw torch-layout LSTM weights, biases = 0 (as in the module's init).
    wih, whh = {}, {}
    for nb in range(2):
        for layer in range(L):
            din = E if layer == 0 else 2 * H
            for d in range(2):
                key, k1, k2 = jax.random.split(key, 3)
                wih[(nb, layer, d)] = _xavier(k1, (4 * H, din))
                whh[(nb, layer, d)] = _xavier(k2, (4 * H, H))

    H4 = 4 * H

    def hh_block(layer):
        w = np.zeros((H4, 4 * H4), np.float32)
        for k, (nb, d) in enumerate(RECS):
            for G, tg in enumerate(GATE_PERM):
                w[k * H:(k + 1) * H, G * H4 + k * H:G * H4 + (k + 1) * H] = \
                    whh[(nb, layer, d)][tg * H:(tg + 1) * H, :].T
        return w

    def ih_block0():
        # layer-0 input columns: [b0@s | b1@s | b0@(T-1-s) | b1@(T-1-s)], each E
        w = np.zeros((4 * E, 4 * H4), np.float32)
        for k, (nb, d) in enumerate(RECS):
            r = d * 2 * E + nb * E
            for G, tg in enumerate(GATE_PERM):
                w[r:r + E, G * H4 + k * H:G * H4 + (k + 1) * H] = \
                    wih[(nb, 0, d)][tg * H:(tg + 1) * H, :].T
        return w

    def ih_block1():
        # layer-1 input columns (see emit_layer0):
        #   0:4H  = h(iter s)       = [b0fwd@s,      b1fwd@s,      b0rev@(T-1-s), b1rev@(T-1-s)]
        #   4H:8H = h(iter T-1-s)   = [b0fwd@(T-1-s), b1fwd@(T-1-s), b0rev@s,      b1rev@s]
        w = np.zeros((8 * H, 4 * H4), np.float32)
        for k, (nb, d) in enumerate(RECS):
            if d == 0:   # needs layer-0 output at time s
                r_fwd, r_rev = nb * H, (6 + nb) * H
            else:        # needs layer-0 output at time T-1-s
                r_fwd, r_rev = (4 + nb) * H, (2 + nb) * H
            for G, tg in enumerate(GATE_PERM):
                cols = slice(G * H4 + k * H, G * H4 + (k + 1) * H)
                w[r_fwd:r_fwd + H, cols] = wih[(nb, 1, d)][tg * H:(tg + 1) * H, 0:H].T
                w[r_rev:r_rev + H, cols] = wih[(nb, 1, d)][tg * H:(tg + 1) * H, H:2 * H].T
        return w

    # FC head: Linear(H*L*2*2 -> H*L), Sigmoid, Linear(H*L -> 2); xavier, zero bias.
    key, k1, k2 = jax.random.split(key, 3)
    w1_t = _xavier(k1, (H * L, H * L * 2 * 2))      # torch (out, in)
    w2_t = _xavier(k2, (2, H * L))
    # Permute fc1 input rows from torch feature order (branch-major: b*2L + l*2 + d)
    # to the kernel feature order ([L0: k0..k3 | L1: k0..k3]).
    w1 = np.zeros((H * L * 2 * 2, H * L), np.float32)
    jp = 0
    for layer in range(L):
        for (nb, d) in RECS:
            tb = nb * (2 * L) + layer * 2 + d
            w1[jp * H:(jp + 1) * H, :] = w1_t[:, tb * H:(tb + 1) * H].T
            jp += 1

    params = dict(
        wih0=jnp.asarray(ih_block0()), whh0=jnp.asarray(hh_block(0)),
        b0=jnp.zeros((1, 4 * H4), jnp.float32),
        wih1=jnp.asarray(ih_block1()), whh1=jnp.asarray(hh_block(1)),
        b1=jnp.zeros((1, 4 * H4), jnp.float32),
        fcw1=jnp.asarray(w1), fcb1=jnp.zeros((1, H * L), jnp.float32),
        fcw2=jnp.asarray(w2_t.T), fcb2=jnp.zeros((1, 2), jnp.float32),
    )
    return params, key


# ----------------------------------------------------------------------------
# Forward pass: x (B, 2, T, E) -> (B, 2) class probabilities.
# ----------------------------------------------------------------------------
@jax.jit
def my_lstm_forward(x, params):
    B, _, T, E = x.shape
    H = params["whh0"].shape[0] // 4

    # Build the augmented, row-padded, time-major layer-0 input:
    # row (s*BP + b) = [x[b,0,s], x[b,1,s], x[b,0,T-1-s], x[b,1,T-1-s]]; rows b>=B are zero.
    xt = jnp.transpose(x, (2, 0, 1, 3)).reshape(T, B, 2 * E)
    x_aug = jnp.concatenate([xt, xt[::-1]], axis=-1)                     # (T, B, 4E)
    x_pad = jnp.zeros((T, BP, 4 * E), jnp.float32).at[:, :B, :].set(x_aug)
    x_flat = x_pad.reshape(T * BP, 4 * E)

    kernel = make_fused_kernel(T=T, B=B, H=H)
    out = pl.pallas_call(
        kernel,
        out_shape=jax.ShapeDtypeStruct((B, 2), jnp.float32),
        scratch_shapes=[pltpu.VMEM((T * BP, 8 * H), jnp.float32)],
    )(x_flat,
      params["wih0"], params["whh0"], params["b0"],
      params["wih1"], params["whh1"], params["b1"],
      params["fcw1"], params["fcb1"], params["fcw2"], params["fcb2"])
    return out


if __name__ == "__main__":
    # Small deterministic config: batch=2, branches=2, seq=8, embed=16, hidden=32, layers=2
    B, T, E, H, L = 2, 8, 16, 32, 2

    key = jax.random.PRNGKey(0)
    key, kx = jax.random.split(key)
    x = jax.random.normal(kx, (B, 2, T, E), jnp.float32)

    params, key = build_params(key, E, H, L)

    out = jax.block_until_ready(my_lstm_forward(x, params))
    assert out.shape == (B, 2)
    assert bool(jnp.all(jnp.isfinite(out)))
    print("KERNEL_OK")
</pallas_src>

<mosaic_0001>
module attributes {stable_mosaic.version = 11 : i64} {
  func.func @kernel(%arg0: memref<64x64xf32, #tpu.memory_space<vmem>>, %arg1: memref<64x512xf32, #tpu.memory_space<vmem>>, %arg2: memref<128x512xf32, #tpu.memory_space<vmem>>, %arg3: memref<1x512xf32, #tpu.memory_space<vmem>>, %arg4: memref<256x512xf32, #tpu.memory_space<vmem>>, %arg5: memref<128x512xf32, #tpu.memory_space<vmem>>, %arg6: memref<1x512xf32, #tpu.memory_space<vmem>>, %arg7: memref<256x64xf32, #tpu.memory_space<vmem>>, %arg8: memref<1x64xf32, #tpu.memory_space<vmem>>, %arg9: memref<64x2xf32, #tpu.memory_space<vmem>>, %arg10: memref<1x2xf32, #tpu.memory_space<vmem>>, %arg11: memref<2x2xf32, #tpu.memory_space<vmem>>, %arg12: memref<64x256xf32, #tpu.memory_space<vmem>>) attributes {dimension_semantics = [], scalar_prefetch = 0 : i64, scratch_operands = 1 : i64, tpu.core_type = #tpu.core_type<tc>} {
    %c0 = arith.constant 0 : index
    %c0_0 = arith.constant 0 : index
    %0 = vector.load %arg0[%c0, %c0_0] : memref<64x64xf32, #tpu.memory_space<vmem>>, vector<64x64xf32>
    %c0_1 = arith.constant 0 : index
    %c0_2 = arith.constant 0 : index
    %1 = vector.load %arg1[%c0_1, %c0_2] : memref<64x512xf32, #tpu.memory_space<vmem>>, vector<64x512xf32>
    %cst = arith.constant dense<0.000000e+00> : vector<64x512xf32>
    %2 = tpu.matmul %0, %1, %cst {dimension_numbers = #tpu.dot_dimension_numbers<[1], [0], [0], [1], [0, 0, 1, 1], [], []>} : vector<64x64xf32>, vector<64x512xf32>, vector<64x512xf32> -> vector<64x512xf32>
    %c0_3 = arith.constant 0 : index
    %c0_4 = arith.constant 0 : index
    %3 = vector.load %arg3[%c0_3, %c0_4] : memref<1x512xf32, #tpu.memory_space<vmem>>, vector<1x512xf32>
    %4 = vector.broadcast %3 : vector<1x512xf32> to vector<64x512xf32>
    %5 = arith.addf %2, %4 : vector<64x512xf32>
    %c0_5 = arith.constant 0 : index
    %c0_6 = arith.constant 0 : index
    %6 = vector.load %arg2[%c0_5, %c0_6] : memref<128x512xf32, #tpu.memory_space<vmem>>, vector<128x512xf32>
    %cst_7 = arith.constant 0.000000e+00 : f32
    %7 = vector.broadcast %cst_7 : f32 to vector<8x128xf32>
    %cst_8 = arith.constant 0.000000e+00 : f32
    %8 = vector.broadcast %cst_8 : f32 to vector<8x128xf32>
    %9 = vector.extract_strided_slice %5 {offsets = [0, 0], sizes = [8, 512], strides = [1, 1]} : vector<64x512xf32> to vector<8x512xf32>
    %cst_9 = arith.constant dense<0.000000e+00> : vector<8x512xf32>
    %10 = tpu.matmul %7, %6, %cst_9 {dimension_numbers = #tpu.dot_dimension_numbers<[1], [0], [0], [1], [0, 0, 1, 1], [], []>} : vector<8x128xf32>, vector<128x512xf32>, vector<8x512xf32> -> vector<8x512xf32>
    %11 = arith.addf %9, %10 : vector<8x512xf32>
    %12 = vector.extract_strided_slice %11 {offsets = [0, 0], sizes = [8, 384], strides = [1, 1]} : vector<8x512xf32> to vector<8x384xf32>
    %13 = arith.negf %12 : vector<8x384xf32>
    %14 = math.exp %13 : vector<8x384xf32>
    %cst_10 = arith.constant 1.000000e+00 : f32
    %15 = vector.broadcast %cst_10 : f32 to vector<8x384xf32>
    %16 = arith.addf %15, %14 : vector<8x384xf32>
    %17 = arith.divf %15, %16 : vector<8x384xf32>
    %18 = vector.extract_strided_slice %11 {offsets = [0, 384], sizes = [8, 128], strides = [1, 1]} : vector<8x512xf32> to vector<8x128xf32>
    %19 = math.tanh %18 : vector<8x128xf32>
    %20 = vector.extract_strided_slice %17 {offsets = [0, 128], sizes = [8, 128], strides = [1, 1]} : vector<8x384xf32> to vector<8x128xf32>
    %21 = arith.mulf %20, %8 : vector<8x128xf32>
    %22 = vector.extract_strided_slice %17 {offsets = [0, 0], sizes = [8, 128], strides = [1, 1]} : vector<8x384xf32> to vector<8x128xf32>
    %23 = arith.mulf %22, %19 : vector<8x128xf32>
    %24 = arith.addf %21, %23 : vector<8x128xf32>
    %25 = vector.extract_strided_slice %17 {offsets = [0, 256], sizes = [8, 128], strides = [1, 1]} : vector<8x384xf32> to vector<8x128xf32>
    %26 = math.tanh %24 : vector<8x128xf32>
    %27 = arith.mulf %25, %26 : vector<8x128xf32>
    %c0_11 = arith.constant 0 : index
    %c0_12 = arith.constant 0 : index
    %28 = vector.load %arg12[%c0_11, %c0_12] : memref<64x256xf32, #tpu.memory_space<vmem>>, vector<8x128xf32>
    tpu.vector_store %arg12[%c0_11, %c0_12], %27 {strides = array<i32>} : memref<64x256xf32, #tpu.memory_space<vmem>>, vector<8x128xf32>,
    %c56 = arith.constant 56 : index
    %c128 = arith.constant 128 : index
    %29 = vector.load %arg12[%c56, %c128] : memref<64x256xf32, #tpu.memory_space<vmem>>, vector<8x128xf32>
    tpu.vector_store %arg12[%c56, %c128], %27 {strides = array<i32>} : memref<64x256xf32, #tpu.memory_space<vmem>>, vector<8x128xf32>,
    %30 = vector.extract_strided_slice %5 {offsets = [8, 0], sizes = [8, 512], strides = [1, 1]} : vector<64x512xf32> to vector<8x512xf32>
    %cst_13 = arith.constant dense<0.000000e+00> : vector<8x512xf32>
    %31 = tpu.matmul %27, %6, %cst_13 {dimension_numbers = #tpu.dot_dimension_numbers<[1], [0], [0], [1], [0, 0, 1, 1], [], []>} : vector<8x128xf32>, vector<128x512xf32>, vector<8x512xf32> -> vector<8x512xf32>
    %32 = arith.addf %30, %31 : vector<8x512xf32>
    %33 = vector.extract_strided_slice %32 {offsets = [0, 0], sizes = [8, 384], strides = [1, 1]} : vector<8x512xf32> to vector<8x384xf32>
    %34 = arith.negf %33 : vector<8x384xf32>
    %35 = math.exp %34 : vector<8x384xf32>
    %cst_14 = arith.constant 1.000000e+00 : f32
    %36 = vector.broadcast %cst_14 : f32 to vector<8x384xf32>
    %37 = arith.addf %36, %35 : vector<8x384xf32>
    %38 = arith.divf %36, %37 : vector<8x384xf32>
    %39 = vector.extract_strided_slice %32 {offsets = [0, 384], sizes = [8, 128], strides = [1, 1]} : vector<8x512xf32> to vector<8x128xf32>
    %40 = math.tanh %39 : vector<8x128xf32>
    %41 = vector.extract_strided_slice %38 {offsets = [0, 128], sizes = [8, 128], strides = [1, 1]} : vector<8x384xf32> to vector<8x128xf32>
    %42 = arith.mulf %41, %24 : vector<8x128xf32>
    %43 = vector.extract_strided_slice %38 {offsets = [0, 0], sizes = [8, 128], strides = [1, 1]} : vector<8x384xf32> to vector<8x128xf32>
    %44 = arith.mulf %43, %40 : vector<8x128xf32>
    %45 = arith.addf %42, %44 : vector<8x128xf32>
    %46 = vector.extract_strided_slice %38 {offsets = [0, 256], sizes = [8, 128], strides = [1, 1]} : vector<8x384xf32> to vector<8x128xf32>
    %47 = math.tanh %45 : vector<8x128xf32>
    %48 = arith.mulf %46, %47 : vector<8x128xf32>
    %c8 = arith.constant 8 : index
    %c0_15 = arith.constant 0 : index
    %49 = vector.load %arg12[%c8, %c0_15] : memref<64x256xf32, #tpu.memory_space<vmem>>, vector<8x128xf32>
    tpu.vector_store %arg12[%c8, %c0_15], %48 {strides = array<i32>} : memref<64x256xf32, #tpu.memory_space<vmem>>, vector<8x128xf32>,
    %c48 = arith.constant 48 : index
    %c128_16 = arith.constant 128 : index
    %50 = vector.load %arg12[%c48, %c128_16] : memref<64x256xf32, #tpu.memory_space<vmem>>, vector<8x128xf32>
    tpu.vector_store %arg12[%c48, %c128_16], %48 {strides = array<i32>} : memref<64x256xf32, #tpu.memory_space<vmem>>, vector<8x128xf32>,
    %51 = vector.extract_strided_slice %5 {offsets = [16, 0], sizes = [8, 512], strides = [1, 1]} : vector<64x512xf32> to vector<8x512xf32>
    %cst_17 = arith.constant dense<0.000000e+00> : vector<8x512xf32>
    %52 = tpu.matmul %48, %6, %cst_17 {dimension_numbers = #tpu.dot_dimension_numbers<[1], [0], [0], [1], [0, 0, 1, 1], [], []>} : vector<8x128xf32>, vector<128x512xf32>, vector<8x512xf32> -> vector<8x512xf32>
    %53 = arith.addf %51, %52 : vector<8x512xf32>
    %54 = vector.extract_strided_slice %53 {offsets = [0, 0], sizes = [8, 384], strides = [1, 1]} : vector<8x512xf32> to vector<8x384xf32>
    %55 = arith.negf %54 : vector<8x384xf32>
    %56 = math.exp %55 : vector<8x384xf32>
    %cst_18 = arith.constant 1.000000e+00 : f32
    %57 = vector.broadcast %cst_18 : f32 to vector<8x384xf32>
    %58 = arith.addf %57, %56 : vector<8x384xf32>
    %59 = arith.divf %57, %58 : vector<8x384xf32>
    %60 = vector.extract_strided_slice %53 {offsets = [0, 384], sizes = [8, 128], strides = [1, 1]} : vector<8x512xf32> to vector<8x128xf32>
    %61 = math.tanh %60 : vector<8x128xf32>
    %62 = vector.extract_strided_slice %59 {offsets = [0, 128], sizes = [8, 128], strides = [1, 1]} : vector<8x384xf32> to vector<8x128xf32>
    %63 = arith.mulf %62, %45 : vector<8x128xf32>
    %64 = vector.extract_strided_slice %59 {offsets = [0, 0], sizes = [8, 128], strides = [1, 1]} : vector<8x384xf32> to vector<8x128xf32>
    %65 = arith.mulf %64, %61 : vector<8x128xf32>
    %66 = arith.addf %63, %65 : vector<8x128xf32>
    %67 = vector.extract_strided_slice %59 {offsets = [0, 256], sizes = [8, 128], strides = [1, 1]} : vector<8x384xf32> to vector<8x128xf32>
    %68 = math.tanh %66 : vector<8x128xf32>
    %69 = arith.mulf %67, %68 : vector<8x128xf32>
    %c16 = arith.constant 16 : index
    %c0_19 = arith.constant 0 : index
    %70 = vector.load %arg12[%c16, %c0_19] : memref<64x256xf32, #tpu.memory_space<vmem>>, vector<8x128xf32>
    tpu.vector_store %arg12[%c16, %c0_19], %69 {strides = array<i32>} : memref<64x256xf32, #tpu.memory_space<vmem>>, vector<8x128xf32>,
    %c40 = arith.constant 40 : index
    %c128_20 = arith.constant 128 : index
    %71 = vector.load %arg12[%c40, %c128_20] : memref<64x256xf32, #tpu.memory_space<vmem>>, vector<8x128xf32>
    tpu.vector_store %arg12[%c40, %c128_20], %69 {strides = array<i32>} : memref<64x256xf32, #tpu.memory_space<vmem>>, vector<8x128xf32>,
    %72 = vector.extract_strided_slice %5 {offsets = [24, 0], sizes = [8, 512], strides = [1, 1]} : vector<64x512xf32> to vector<8x512xf32>
    %cst_21 = arith.constant dense<0.000000e+00> : vector<8x512xf32>
    %73 = tpu.matmul %69, %6, %cst_21 {dimension_numbers = #tpu.dot_dimension_numbers<[1], [0], [0], [1], [0, 0, 1, 1], [], []>} : vector<8x128xf32>, vector<128x512xf32>, vector<8x512xf32> -> vector<8x512xf32>
    %74 = arith.addf %72, %73 : vector<8x512xf32>
    %75 = vector.extract_strided_slice %74 {offsets = [0, 0], sizes = [8, 384], strides = [1, 1]} : vector<8x512xf32> to vector<8x384xf32>
    %76 = arith.negf %75 : vector<8x384xf32>
    %77 = math.exp %76 : vector<8x384xf32>
    %cst_22 = arith.constant 1.000000e+00 : f32
    %78 = vector.broadcast %cst_22 : f32 to vector<8x384xf32>
    %79 = arith.addf %78, %77 : vector<8x384xf32>
    %80 = arith.divf %78, %79 : vector<8x384xf32>
    %81 = vector.extract_strided_slice %74 {offsets = [0, 384], sizes = [8, 128], strides = [1, 1]} : vector<8x512xf32> to vector<8x128xf32>
    %82 = math.tanh %81 : vector<8x128xf32>
    %83 = vector.extract_strided_slice %80 {offsets = [0, 128], sizes = [8, 128], strides = [1, 1]} : vector<8x384xf32> to vector<8x128xf32>
    %84 = arith.mulf %83, %66 : vector<8x128xf32>
    %85 = vector.extract_strided_slice %80 {offsets = [0, 0], sizes = [8, 128], strides = [1, 1]} : vector<8x384xf32> to vector<8x128xf32>
    %86 = arith.mulf %85, %82 : vector<8x128xf32>
    %87 = arith.addf %84, %86 : vector<8x128xf32>
    %88 = vector.extract_strided_slice %80 {offsets = [0, 256], sizes = [8, 128], strides = [1, 1]} : vector<8x384xf32> to vector<8x128xf32>
    %89 = math.tanh %87 : vector<8x128xf32>
    %90 = arith.mulf %88, %89 : vector<8x128xf32>
    %c24 = arith.constant 24 : index
    %c0_23 = arith.constant 0 : index
    %91 = vector.load %arg12[%c24, %c0_23] : memref<64x256xf32, #tpu.memory_space<vmem>>, vector<8x128xf32>
    tpu.vector_store %arg12[%c24, %c0_23], %90 {strides = array<i32>} : memref<64x256xf32, #tpu.memory_space<vmem>>, vector<8x128xf32>,
    %c32 = arith.constant 32 : index
    %c128_24 = arith.constant 128 : index
    %92 = vector.load %arg12[%c32, %c128_24] : memref<64x256xf32, #tpu.memory_space<vmem>>, vector<8x128xf32>
    tpu.vector_store %arg12[%c32, %c128_24], %90 {strides = array<i32>} : memref<64x256xf32, #tpu.memory_space<vmem>>, vector<8x128xf32>,
    %93 = vector.extract_strided_slice %5 {offsets = [32, 0], sizes = [8, 512], strides = [1, 1]} : vector<64x512xf32> to vector<8x512xf32>
    %cst_25 = arith.constant dense<0.000000e+00> : vector<8x512xf32>
    %94 = tpu.matmul %90, %6, %cst_25 {dimension_numbers = #tpu.dot_dimension_numbers<[1], [0], [0], [1], [0, 0, 1, 1], [], []>} : vector<8x128xf32>, vector<128x512xf32>, vector<8x512xf32> -> vector<8x512xf32>
    %95 = arith.addf %93, %94 : vector<8x512xf32>
    %96 = vector.extract_strided_slice %95 {offsets = [0, 0], sizes = [8, 384], strides = [1, 1]} : vector<8x512xf32> to vector<8x384xf32>
    %97 = arith.negf %96 : vector<8x384xf32>
    %98 = math.exp %97 : vector<8x384xf32>
    %cst_26 = arith.constant 1.000000e+00 : f32
    %99 = vector.broadcast %cst_26 : f32 to vector<8x384xf32>
    %100 = arith.addf %99, %98 : vector<8x384xf32>
    %101 = arith.divf %99, %100 : vector<8x384xf32>
    %102 = vector.extract_strided_slice %95 {offsets = [0, 384], sizes = [8, 128], strides = [1, 1]} : vector<8x512xf32> to vector<8x128xf32>
    %103 = math.tanh %102 : vector<8x128xf32>
    %104 = vector.extract_strided_slice %101 {offsets = [0, 128], sizes = [8, 128], strides = [1, 1]} : vector<8x384xf32> to vector<8x128xf32>
    %105 = arith.mulf %104, %87 : vector<8x128xf32>
    %106 = vector.extract_strided_slice %101 {offsets = [0, 0], sizes = [8, 128], strides = [1, 1]} : vector<8x384xf32> to vector<8x128xf32>
    %107 = arith.mulf %106, %103 : vector<8x128xf32>
    %108 = arith.addf %105, %107 : vector<8x128xf32>
    %109 = vector.extract_strided_slice %101 {offsets = [0, 256], sizes = [8, 128], strides = [1, 1]} : vector<8x384xf32> to vector<8x128xf32>
    %110 = math.tanh %108 : vector<8x128xf32>
    %111 = arith.mulf %109, %110 : vector<8x128xf32>
    %c32_27 = arith.constant 32 : index
    %c0_28 = arith.constant 0 : index
    %112 = vector.load %arg12[%c32_27, %c0_28] : memref<64x256xf32, #tpu.memory_space<vmem>>, vector<8x128xf32>
    tpu.vector_store %arg12[%c32_27, %c0_28], %111 {strides = array<i32>} : memref<64x256xf32, #tpu.memory_space<vmem>>, vector<8x128xf32>,
    %c24_29 = arith.constant 24 : index
    %c128_30 = arith.constant 128 : index
    %113 = vector.load %arg12[%c24_29, %c128_30] : memref<64x256xf32, #tpu.memory_space<vmem>>, vector<8x128xf32>
    tpu.vector_store %arg12[%c24_29, %c128_30], %111 {strides = array<i32>} : memref<64x256xf32, #tpu.memory_space<vmem>>, vector<8x128xf32>,
    %114 = vector.extract_strided_slice %5 {offsets = [40, 0], sizes = [8, 512], strides = [1, 1]} : vector<64x512xf32> to vector<8x512xf32>
    %cst_31 = arith.constant dense<0.000000e+00> : vector<8x512xf32>
    %115 = tpu.matmul %111, %6, %cst_31 {dimension_numbers = #tpu.dot_dimension_numbers<[1], [0], [0], [1], [0, 0, 1, 1], [], []>} : vector<8x128xf32>, vector<128x512xf32>, vector<8x512xf32> -> vector<8x512xf32>
    %116 = arith.addf %114, %115 : vector<8x512xf32>
    %117 = vector.extract_strided_slice %116 {offsets = [0, 0], sizes = [8, 384], strides = [1, 1]} : vector<8x512xf32> to vector<8x384xf32>
    %118 = arith.negf %117 : vector<8x384xf32>
    %119 = math.exp %118 : vector<8x384xf32>
    %cst_32 = arith.constant 1.000000e+00 : f32
    %120 = vector.broadcast %cst_32 : f32 to vector<8x384xf32>
    %121 = arith.addf %120, %119 : vector<8x384xf32>
    %122 = arith.divf %120, %121 : vector<8x384xf32>
    %123 = vector.extract_strided_slice %116 {offsets = [0, 384], sizes = [8, 128], strides = [1, 1]} : vector<8x512xf32> to vector<8x128xf32>
    %124 = math.tanh %123 : vector<8x128xf32>
    %125 = vector.extract_strided_slice %122 {offsets = [0, 128], sizes = [8, 128], strides = [1, 1]} : vector<8x384xf32> to vector<8x128xf32>
    %126 = arith.mulf %125, %108 : vector<8x128xf32>
    %127 = vector.extract_strided_slice %122 {offsets = [0, 0], sizes = [8, 128], strides = [1, 1]} : vector<8x384xf32> to vector<8x128xf32>
    %128 = arith.mulf %127, %124 : vector<8x128xf32>
    %129 = arith.addf %126, %128 : vector<8x128xf32>
    %130 = vector.extract_strided_slice %122 {offsets = [0, 256], sizes = [8, 128], strides = [1, 1]} : vector<8x384xf32> to vector<8x128xf32>
    %131 = math.tanh %129 : vector<8x128xf32>
    %132 = arith.mulf %130, %131 : vector<8x128xf32>
    %c40_33 = arith.constant 40 : index
    %c0_34 = arith.constant 0 : index
    %133 = vector.load %arg12[%c40_33, %c0_34] : memref<64x256xf32, #tpu.memory_space<vmem>>, vector<8x128xf32>
    tpu.vector_store %arg12[%c40_33, %c0_34], %132 {strides = array<i32>} : memref<64x256xf32, #tpu.memory_space<vmem>>, vector<8x128xf32>,
    %c16_35 = arith.constant 16 : index
    %c128_36 = arith.constant 128 : index
    %134 = vector.load %arg12[%c16_35, %c128_36] : memref<64x256xf32, #tpu.memory_space<vmem>>, vector<8x128xf32>
    tpu.vector_store %arg12[%c16_35, %c128_36], %132 {strides = array<i32>} : memref<64x256xf32, #tpu.memory_space<vmem>>, vector<8x128xf32>,
    %135 = vector.extract_strided_slice %5 {offsets = [48, 0], sizes = [8, 512], strides = [1, 1]} : vector<64x512xf32> to vector<8x512xf32>
    %cst_37 = arith.constant dense<0.000000e+00> : vector<8x512xf32>
    %136 = tpu.matmul %132, %6, %cst_37 {dimension_numbers = #tpu.dot_dimension_numbers<[1], [0], [0], [1], [0, 0, 1, 1], [], []>} : vector<8x128xf32>, vector<128x512xf32>, vector<8x512xf32> -> vector<8x512xf32>
    %137 = arith.addf %135, %136 : vector<8x512xf32>
    %138 = vector.extract_strided_slice %137 {offsets = [0, 0], sizes = [8, 384], strides = [1, 1]} : vector<8x512xf32> to vector<8x384xf32>
    %139 = arith.negf %138 : vector<8x384xf32>
    %140 = math.exp %139 : vector<8x384xf32>
    %cst_38 = arith.constant 1.000000e+00 : f32
    %141 = vector.broadcast %cst_38 : f32 to vector<8x384xf32>
    %142 = arith.addf %141, %140 : vector<8x384xf32>
    %143 = arith.divf %141, %142 : vector<8x384xf32>
    %144 = vector.extract_strided_slice %137 {offsets = [0, 384], sizes = [8, 128], strides = [1, 1]} : vector<8x512xf32> to vector<8x128xf32>
    %145 = math.tanh %144 : vector<8x128xf32>
    %146 = vector.extract_strided_slice %143 {offsets = [0, 128], sizes = [8, 128], strides = [1, 1]} : vector<8x384xf32> to vector<8x128xf32>
    %147 = arith.mulf %146, %129 : vector<8x128xf32>
    %148 = vector.extract_strided_slice %143 {offsets = [0, 0], sizes = [8, 128], strides = [1, 1]} : vector<8x384xf32> to vector<8x128xf32>
    %149 = arith.mulf %148, %145 : vector<8x128xf32>
    %150 = arith.addf %147, %149 : vector<8x128xf32>
    %151 = vector.extract_strided_slice %143 {offsets = [0, 256], sizes = [8, 128], strides = [1, 1]} : vector<8x384xf32> to vector<8x128xf32>
    %152 = math.tanh %150 : vector<8x128xf32>
    %153 = arith.mulf %151, %152 : vector<8x128xf32>
    %c48_39 = arith.constant 48 : index
    %c0_40 = arith.constant 0 : index
    %154 = vector.load %arg12[%c48_39, %c0_40] : memref<64x256xf32, #tpu.memory_space<vmem>>, vector<8x128xf32>
    tpu.vector_store %arg12[%c48_39, %c0_40], %153 {strides = array<i32>} : memref<64x256xf32, #tpu.memory_space<vmem>>, vector<8x128xf32>,
    %c8_41 = arith.constant 8 : index
    %c128_42 = arith.constant 128 : index
    %155 = vector.load %arg12[%c8_41, %c128_42] : memref<64x256xf32, #tpu.memory_space<vmem>>, vector<8x128xf32>
    tpu.vector_store %arg12[%c8_41, %c128_42], %153 {strides = array<i32>} : memref<64x256xf32, #tpu.memory_space<vmem>>, vector<8x128xf32>,
    %156 = vector.extract_strided_slice %5 {offsets = [56, 0], sizes = [8, 512], strides = [1, 1]} : vector<64x512xf32> to vector<8x512xf32>
    %cst_43 = arith.constant dense<0.000000e+00> : vector<8x512xf32>
    %157 = tpu.matmul %153, %6, %cst_43 {dimension_numbers = #tpu.dot_dimension_numbers<[1], [0], [0], [1], [0, 0, 1, 1], [], []>} : vector<8x128xf32>, vector<128x512xf32>, vector<8x512xf32> -> vector<8x512xf32>
    %158 = arith.addf %156, %157 : vector<8x512xf32>
    %159 = vector.extract_strided_slice %158 {offsets = [0, 0], sizes = [8, 384], strides = [1, 1]} : vector<8x512xf32> to vector<8x384xf32>
    %160 = arith.negf %159 : vector<8x384xf32>
    %161 = math.exp %160 : vector<8x384xf32>
    %cst_44 = arith.constant 1.000000e+00 : f32
    %162 = vector.broadcast %cst_44 : f32 to vector<8x384xf32>
    %163 = arith.addf %162, %161 : vector<8x384xf32>
    %164 = arith.divf %162, %163 : vector<8x384xf32>
    %165 = vector.extract_strided_slice %158 {offsets = [0, 384], sizes = [8, 128], strides = [1, 1]} : vector<8x512xf32> to vector<8x128xf32>
    %166 = math.tanh %165 : vector<8x128xf32>
    %167 = vector.extract_strided_slice %164 {offsets = [0, 128], sizes = [8, 128], strides = [1, 1]} : vector<8x384xf32> to vector<8x128xf32>
    %168 = arith.mulf %167, %150 : vector<8x128xf32>
    %169 = vector.extract_strided_slice %164 {offsets = [0, 0], sizes = [8, 128], strides = [1, 1]} : vector<8x384xf32> to vector<8x128xf32>
    %170 = arith.mulf %169, %166 : vector<8x128xf32>
    %171 = arith.addf %168, %170 : vector<8x128xf32>
    %172 = vector.extract_strided_slice %164 {offsets = [0, 256], sizes = [8, 128], strides = [1, 1]} : vector<8x384xf32> to vector<8x128xf32>
    %173 = math.tanh %171 : vector<8x128xf32>
    %174 = arith.mulf %172, %173 : vector<8x128xf32>
    %c56_45 = arith.constant 56 : index
    %c0_46 = arith.constant 0 : index
    %175 = vector.load %arg12[%c56_45, %c0_46] : memref<64x256xf32, #tpu.memory_space<vmem>>, vector<8x128xf32>
    tpu.vector_store %arg12[%c56_45, %c0_46], %174 {strides = array<i32>} : memref<64x256xf32, #tpu.memory_space<vmem>>, vector<8x128xf32>,
    %c0_47 = arith.constant 0 : index
    %c128_48 = arith.constant 128 : index
    %176 = vector.load %arg12[%c0_47, %c128_48] : memref<64x256xf32, #tpu.memory_space<vmem>>, vector<8x128xf32>
    tpu.vector_store %arg12[%c0_47, %c128_48], %174 {strides = array<i32>} : memref<64x256xf32, #tpu.memory_space<vmem>>, vector<8x128xf32>,
    %c0_49 = arith.constant 0 : index
    %c0_50 = arith.constant 0 : index
    %177 = vector.load %arg12[%c0_49, %c0_50] : memref<64x256xf32, #tpu.memory_space<vmem>>, vector<64x256xf32>
    %c0_51 = arith.constant 0 : index
    %c0_52 = arith.constant 0 : index
    %178 = vector.load %arg4[%c0_51, %c0_52] : memref<256x512xf32, #tpu.memory_space<vmem>>, vector<256x512xf32>
    %cst_53 = arith.constant dense<0.000000e+00> : vector<64x512xf32>
    %179 = tpu.matmul %177, %178, %cst_53 {dimension_numbers = #tpu.dot_dimension_numbers<[1], [0], [0], [1], [0, 0, 1, 1], [], []>} : vector<64x256xf32>, vector<256x512xf32>, vector<64x512xf32> -> vector<64x512xf32>
    %c0_54 = arith.constant 0 : index
    %c0_55 = arith.constant 0 : index
    %180 = vector.load %arg6[%c0_54, %c0_55] : memref<1x512xf32, #tpu.memory_space<vmem>>, vector<1x512xf32>
    %181 = vector.broadcast %180 : vector<1x512xf32> to vector<64x512xf32>
    %182 = arith.addf %179, %181 : vector<64x512xf32>
    %c0_56 = arith.constant 0 : index
    %c0_57 = arith.constant 0 : index
    %183 = vector.load %arg5[%c0_56, %c0_57] : memref<128x512xf32, #tpu.memory_space<vmem>>, vector<128x512xf32>
    %cst_58 = arith.constant 0.000000e+00 : f32
    %184 = vector.broadcast %cst_58 : f32 to vector<8x128xf32>
    %cst_59 = arith.constant 0.000000e+00 : f32
    %185 = vector.broadcast %cst_59 : f32 to vector<8x128xf32>
    %186 = vector.extract_strided_slice %182 {offsets = [0, 0], sizes = [8, 512], strides = [1, 1]} : vector<64x512xf32> to vector<8x512xf32>
    %cst_60 = arith.constant dense<0.000000e+00> : vector<8x512xf32>
    %187 = tpu.matmul %184, %183, %cst_60 {dimension_numbers = #tpu.dot_dimension_numbers<[1], [0], [0], [1], [0, 0, 1, 1], [], []>} : vector<8x128xf32>, vector<128x512xf32>, vector<8x512xf32> -> vector<8x512xf32>
    %188 = arith.addf %186, %187 : vector<8x512xf32>
    %189 = vector.extract_strided_slice %188 {offsets = [0, 0], sizes = [8, 384], strides = [1, 1]} : vector<8x512xf32> to vector<8x384xf32>
    %190 = arith.negf %189 : vector<8x384xf32>
    %191 = math.exp %190 : vector<8x384xf32>
    %cst_61 = arith.constant 1.000000e+00 : f32
    %192 = vector.broadcast %cst_61 : f32 to vector<8x384xf32>
    %193 = arith.addf %192, %191 : vector<8x384xf32>
    %194 = arith.divf %192, %193 : vector<8x384xf32>
    %195 = vector.extract_strided_slice %188 {offsets = [0, 384], sizes = [8, 128], strides = [1, 1]} : vector<8x512xf32> to vector<8x128xf32>
    %196 = math.tanh %195 : vector<8x128xf32>
    %197 = vector.extract_strided_slice %194 {offsets = [0, 128], sizes = [8, 128], strides = [1, 1]} : vector<8x384xf32> to vector<8x128xf32>
    %198 = arith.mulf %197, %185 : vector<8x128xf32>
    %199 = vector.extract_strided_slice %194 {offsets = [0, 0], sizes = [8, 128], strides = [1, 1]} : vector<8x384xf32> to vector<8x128xf32>
    %200 = arith.mulf %199, %196 : vector<8x128xf32>
    %201 = arith.addf %198, %200 : vector<8x128xf32>
    %202 = vector.extract_strided_slice %194 {offsets = [0, 256], sizes = [8, 128], strides = [1, 1]} : vector<8x384xf32> to vector<8x128xf32>
    %203 = math.tanh %201 : vector<8x128xf32>
    %204 = arith.mulf %202, %203 : vector<8x128xf32>
    %205 = vector.extract_strided_slice %182 {offsets = [8, 0], sizes = [8, 512], strides = [1, 1]} : vector<64x512xf32> to vector<8x512xf32>
    %cst_62 = arith.constant dense<0.000000e+00> : vector<8x512xf32>
    %206 = tpu.matmul %204, %183, %cst_62 {dimension_numbers = #tpu.dot_dimension_numbers<[1], [0], [0], [1], [0, 0, 1, 1], [], []>} : vector<8x128xf32>, vector<128x512xf32>, vector<8x512xf32> -> vector<8x512xf32>
    %207 = arith.addf %205, %206 : vector<8x512xf32>
    %208 = vector.extract_strided_slice %207 {offsets = [0, 0], sizes = [8, 384], strides = [1, 1]} : vector<8x512xf32> to vector<8x384xf32>
    %209 = arith.negf %208 : vector<8x384xf32>
    %210 = math.exp %209 : vector<8x384xf32>
    %cst_63 = arith.constant 1.000000e+00 : f32
    %211 = vector.broadcast %cst_63 : f32 to vector<8x384xf32>
    %212 = arith.addf %211, %210 : vector<8x384xf32>
    %213 = arith.divf %211, %212 : vector<8x384xf32>
    %214 = vector.extract_strided_slice %207 {offsets = [0, 384], sizes = [8, 128], strides = [1, 1]} : vector<8x512xf32> to vector<8x128xf32>
    %215 = math.tanh %214 : vector<8x128xf32>
    %216 = vector.extract_strided_slice %213 {offsets = [0, 128], sizes = [8, 128], strides = [1, 1]} : vector<8x384xf32> to vector<8x128xf32>
    %217 = arith.mulf %216, %201 : vector<8x128xf32>
    %218 = vector.extract_strided_slice %213 {offsets = [0, 0], sizes = [8, 128], strides = [1, 1]} : vector<8x384xf32> to vector<8x128xf32>
    %219 = arith.mulf %218, %215 : vector<8x128xf32>
    %220 = arith.addf %217, %219 : vector<8x128xf32>
    %221 = vector.extract_strided_slice %213 {offsets = [0, 256], sizes = [8, 128], strides = [1, 1]} : vector<8x384xf32> to vector<8x128xf32>
    %222 = math.tanh %220 : vector<8x128xf32>
    %223 = arith.mulf %221, %222 : vector<8x128xf32>
    %224 = vector.extract_strided_slice %182 {offsets = [16, 0], sizes = [8, 512], strides = [1, 1]} : vector<64x512xf32> to vector<8x512xf32>
    %cst_64 = arith.constant dense<0.000000e+00> : vector<8x512xf32>
    %225 = tpu.matmul %223, %183, %cst_64 {dimension_numbers = #tpu.dot_dimension_numbers<[1], [0], [0], [1], [0, 0, 1, 1], [], []>} : vector<8x128xf32>, vector<128x512xf32>, vector<8x512xf32> -> vector<8x512xf32>
    %226 = arith.addf %224, %225 : vector<8x512xf32>
    %227 = vector.extract_strided_slice %226 {offsets = [0, 0], sizes = [8, 384], strides = [1, 1]} : vector<8x512xf32> to vector<8x384xf32>
    %228 = arith.negf %227 : vector<8x384xf32>
    %229 = math.exp %228 : vector<8x384xf32>
    %cst_65 = arith.constant 1.000000e+00 : f32
    %230 = vector.broadcast %cst_65 : f32 to vector<8x384xf32>
    %231 = arith.addf %230, %229 : vector<8x384xf32>
    %232 = arith.divf %230, %231 : vector<8x384xf32>
    %233 = vector.extract_strided_slice %226 {offsets = [0, 384], sizes = [8, 128], strides = [1, 1]} : vector<8x512xf32> to vector<8x128xf32>
    %234 = math.tanh %233 : vector<8x128xf32>
    %235 = vector.extract_strided_slice %232 {offsets = [0, 128], sizes = [8, 128], strides = [1, 1]} : vector<8x384xf32> to vector<8x128xf32>
    %236 = arith.mulf %235, %220 : vector<8x128xf32>
    %237 = vector.extract_strided_slice %232 {offsets = [0, 0], sizes = [8, 128], strides = [1, 1]} : vector<8x384xf32> to vector<8x128xf32>
    %238 = arith.mulf %237, %234 : vector<8x128xf32>
    %239 = arith.addf %236, %238 : vector<8x128xf32>
    %240 = vector.extract_strided_slice %232 {offsets = [0, 256], sizes = [8, 128], strides = [1, 1]} : vector<8x384xf32> to vector<8x128xf32>
    %241 = math.tanh %239 : vector<8x128xf32>
    %242 = arith.mulf %240, %241 : vector<8x128xf32>
    %243 = vector.extract_strided_slice %182 {offsets = [24, 0], sizes = [8, 512], strides = [1, 1]} : vector<64x512xf32> to vector<8x512xf32>
    %cst_66 = arith.constant dense<0.000000e+00> : vector<8x512xf32>
    %244 = tpu.matmul %242, %183, %cst_66 {dimension_numbers = #tpu.dot_dimension_numbers<[1], [0], [0], [1], [0, 0, 1, 1], [], []>} : vector<8x128xf32>, vector<128x512xf32>, vector<8x512xf32> -> vector<8x512xf32>
    %245 = arith.addf %243, %244 : vector<8x512xf32>
    %246 = vector.extract_strided_slice %245 {offsets = [0, 0], sizes = [8, 384], strides = [1, 1]} : vector<8x512xf32> to vector<8x384xf32>
    %247 = arith.negf %246 : vector<8x384xf32>
    %248 = math.exp %247 : vector<8x384xf32>
    %cst_67 = arith.constant 1.000000e+00 : f32
    %249 = vector.broadcast %cst_67 : f32 to vector<8x384xf32>
    %250 = arith.addf %249, %248 : vector<8x384xf32>
    %251 = arith.divf %249, %250 : vector<8x384xf32>
    %252 = vector.extract_strided_slice %245 {offsets = [0, 384], sizes = [8, 128], strides = [1, 1]} : vector<8x512xf32> to vector<8x128xf32>
    %253 = math.tanh %252 : vector<8x128xf32>
    %254 = vector.extract_strided_slice %251 {offsets = [0, 128], sizes = [8, 128], strides = [1, 1]} : vector<8x384xf32> to vector<8x128xf32>
    %255 = arith.mulf %254, %239 : vector<8x128xf32>
    %256 = vector.extract_strided_slice %251 {offsets = [0, 0], sizes = [8, 128], strides = [1, 1]} : vector<8x384xf32> to vector<8x128xf32>
    %257 = arith.mulf %256, %253 : vector<8x128xf32>
    %258 = arith.addf %255, %257 : vector<8x128xf32>
    %259 = vector.extract_strided_slice %251 {offsets = [0, 256], sizes = [8, 128], strides = [1, 1]} : vector<8x384xf32> to vector<8x128xf32>
    %260 = math.tanh %258 : vector<8x128xf32>
    %261 = arith.mulf %259, %260 : vector<8x128xf32>
    %262 = vector.extract_strided_slice %182 {offsets = [32, 0], sizes = [8, 512], strides = [1, 1]} : vector<64x512xf32> to vector<8x512xf32>
    %cst_68 = arith.constant dense<0.000000e+00> : vector<8x512xf32>
    %263 = tpu.matmul %261, %183, %cst_68 {dimension_numbers = #tpu.dot_dimension_numbers<[1], [0], [0], [1], [0, 0, 1, 1], [], []>} : vector<8x128xf32>, vector<128x512xf32>, vector<8x512xf32> -> vector<8x512xf32>
    %264 = arith.addf %262, %263 : vector<8x512xf32>
    %265 = vector.extract_strided_slice %264 {offsets = [0, 0], sizes = [8, 384], strides = [1, 1]} : vector<8x512xf32> to vector<8x384xf32>
    %266 = arith.negf %265 : vector<8x384xf32>
    %267 = math.exp %266 : vector<8x384xf32>
    %cst_69 = arith.constant 1.000000e+00 : f32
    %268 = vector.broadcast %cst_69 : f32 to vector<8x384xf32>
    %269 = arith.addf %268, %267 : vector<8x384xf32>
    %270 = arith.divf %268, %269 : vector<8x384xf32>
    %271 = vector.extract_strided_slice %264 {offsets = [0, 384], sizes = [8, 128], strides = [1, 1]} : vector<8x512xf32> to vector<8x128xf32>
    %272 = math.tanh %271 : vector<8x128xf32>
    %273 = vector.extract_strided_slice %270 {offsets = [0, 128], sizes = [8, 128], strides = [1, 1]} : vector<8x384xf32> to vector<8x128xf32>
    %274 = arith.mulf %273, %258 : vector<8x128xf32>
    %275 = vector.extract_strided_slice %270 {offsets = [0, 0], sizes = [8, 128], strides = [1, 1]} : vector<8x384xf32> to vector<8x128xf32>
    %276 = arith.mulf %275, %272 : vector<8x128xf32>
    %277 = arith.addf %274, %276 : vector<8x128xf32>
    %278 = vector.extract_strided_slice %270 {offsets = [0, 256], sizes = [8, 128], strides = [1, 1]} : vector<8x384xf32> to vector<8x128xf32>
    %279 = math.tanh %277 : vector<8x128xf32>
    %280 = arith.mulf %278, %279 : vector<8x128xf32>
    %281 = vector.extract_strided_slice %182 {offsets = [40, 0], sizes = [8, 512], strides = [1, 1]} : vector<64x512xf32> to vector<8x512xf32>
    %cst_70 = arith.constant dense<0.000000e+00> : vector<8x512xf32>
    %282 = tpu.matmul %280, %183, %cst_70 {dimension_numbers = #tpu.dot_dimension_numbers<[1], [0], [0], [1], [0, 0, 1, 1], [], []>} : vector<8x128xf32>, vector<128x512xf32>, vector<8x512xf32> -> vector<8x512xf32>
    %283 = arith.addf %281, %282 : vector<8x512xf32>
    %284 = vector.extract_strided_slice %283 {offsets = [0, 0], sizes = [8, 384], strides = [1, 1]} : vector<8x512xf32> to vector<8x384xf32>
    %285 = arith.negf %284 : vector<8x384xf32>
    %286 = math.exp %285 : vector<8x384xf32>
    %cst_71 = arith.constant 1.000000e+00 : f32
    %287 = vector.broadcast %cst_71 : f32 to vector<8x384xf32>
    %288 = arith.addf %287, %286 : vector<8x384xf32>
    %289 = arith.divf %287, %288 : vector<8x384xf32>
    %290 = vector.extract_strided_slice %283 {offsets = [0, 384], sizes = [8, 128], strides = [1, 1]} : vector<8x512xf32> to vector<8x128xf32>
    %291 = math.tanh %290 : vector<8x128xf32>
    %292 = vector.extract_strided_slice %289 {offsets = [0, 128], sizes = [8, 128], strides = [1, 1]} : vector<8x384xf32> to vector<8x128xf32>
    %293 = arith.mulf %292, %277 : vector<8x128xf32>
    %294 = vector.extract_strided_slice %289 {offsets = [0, 0], sizes = [8, 128], strides = [1, 1]} : vector<8x384xf32> to vector<8x128xf32>
    %295 = arith.mulf %294, %291 : vector<8x128xf32>
    %296 = arith.addf %293, %295 : vector<8x128xf32>
    %297 = vector.extract_strided_slice %289 {offsets = [0, 256], sizes = [8, 128], strides = [1, 1]} : vector<8x384xf32> to vector<8x128xf32>
    %298 = math.tanh %296 : vector<8x128xf32>
    %299 = arith.mulf %297, %298 : vector<8x128xf32>
    %300 = vector.extract_strided_slice %182 {offsets = [48, 0], sizes = [8, 512], strides = [1, 1]} : vector<64x512xf32> to vector<8x512xf32>
    %cst_72 = arith.constant dense<0.000000e+00> : vector<8x512xf32>
    %301 = tpu.matmul %299, %183, %cst_72 {dimension_numbers = #tpu.dot_dimension_numbers<[1], [0], [0], [1], [0, 0, 1, 1], [], []>} : vector<8x128xf32>, vector<128x512xf32>, vector<8x512xf32> -> vector<8x512xf32>
    %302 = arith.addf %300, %301 : vector<8x512xf32>
    %303 = vector.extract_strided_slice %302 {offsets = [0, 0], sizes = [8, 384], strides = [1, 1]} : vector<8x512xf32> to vector<8x384xf32>
    %304 = arith.negf %303 : vector<8x384xf32>
    %305 = math.exp %304 : vector<8x384xf32>
    %cst_73 = arith.constant 1.000000e+00 : f32
    %306 = vector.broadcast %cst_73 : f32 to vector<8x384xf32>
    %307 = arith.addf %306, %305 : vector<8x384xf32>
    %308 = arith.divf %306, %307 : vector<8x384xf32>
    %309 = vector.extract_strided_slice %302 {offsets = [0, 384], sizes = [8, 128], strides = [1, 1]} : vector<8x512xf32> to vector<8x128xf32>
    %310 = math.tanh %309 : vector<8x128xf32>
    %311 = vector.extract_strided_slice %308 {offsets = [0, 128], sizes = [8, 128], strides = [1, 1]} : vector<8x384xf32> to vector<8x128xf32>
    %312 = arith.mulf %311, %296 : vector<8x128xf32>
    %313 = vector.extract_strided_slice %308 {offsets = [0, 0], sizes = [8, 128], strides = [1, 1]} : vector<8x384xf32> to vector<8x128xf32>
    %314 = arith.mulf %313, %310 : vector<8x128xf32>
    %315 = arith.addf %312, %314 : vector<8x128xf32>
    %316 = vector.extract_strided_slice %308 {offsets = [0, 256], sizes = [8, 128], strides = [1, 1]} : vector<8x384xf32> to vector<8x128xf32>
    %317 = math.tanh %315 : vector<8x128xf32>
    %318 = arith.mulf %316, %317 : vector<8x128xf32>
    %319 = vector.extract_strided_slice %182 {offsets = [56, 0], sizes = [8, 512], strides = [1, 1]} : vector<64x512xf32> to vector<8x512xf32>
    %cst_74 = arith.constant dense<0.000000e+00> : vector<8x512xf32>
    %320 = tpu.matmul %318, %183, %cst_74 {dimension_numbers = #tpu.dot_dimension_numbers<[1], [0], [0], [1], [0, 0, 1, 1], [], []>} : vector<8x128xf32>, vector<128x512xf32>, vector<8x512xf32> -> vector<8x512xf32>
    %321 = arith.addf %319, %320 : vector<8x512xf32>
    %322 = vector.extract_strided_slice %321 {offsets = [0, 0], sizes = [8, 384], strides = [1, 1]} : vector<8x512xf32> to vector<8x384xf32>
    %323 = arith.negf %322 : vector<8x384xf32>
    %324 = math.exp %323 : vector<8x384xf32>
    %cst_75 = arith.constant 1.000000e+00 : f32
    %325 = vector.broadcast %cst_75 : f32 to vector<8x384xf32>
    %326 = arith.addf %325, %324 : vector<8x384xf32>
    %327 = arith.divf %325, %326 : vector<8x384xf32>
    %328 = vector.extract_strided_slice %321 {offsets = [0, 384], sizes = [8, 128], strides = [1, 1]} : vector<8x512xf32> to vector<8x128xf32>
    %329 = math.tanh %328 : vector<8x128xf32>
    %330 = vector.extract_strided_slice %327 {offsets = [0, 128], sizes = [8, 128], strides = [1, 1]} : vector<8x384xf32> to vector<8x128xf32>
    %331 = arith.mulf %330, %315 : vector<8x128xf32>
    %332 = vector.extract_strided_slice %327 {offsets = [0, 0], sizes = [8, 128], strides = [1, 1]} : vector<8x384xf32> to vector<8x128xf32>
    %333 = arith.mulf %332, %329 : vector<8x128xf32>
    %334 = arith.addf %331, %333 : vector<8x128xf32>
    %335 = vector.extract_strided_slice %327 {offsets = [0, 256], sizes = [8, 128], strides = [1, 1]} : vector<8x384xf32> to vector<8x128xf32>
    %336 = math.tanh %334 : vector<8x128xf32>
    %337 = arith.mulf %335, %336 : vector<8x128xf32>
    %338 = tpu.concatenate %174, %337 in 1 : vector<8x128xf32>, vector<8x128xf32> -> vector<8x256xf32>
    %c0_76 = arith.constant 0 : index
    %c0_77 = arith.constant 0 : index
    %339 = vector.load %arg7[%c0_76, %c0_77] : memref<256x64xf32, #tpu.memory_space<vmem>>, vector<256x64xf32>
    %cst_78 = arith.constant dense<0.000000e+00> : vector<8x64xf32>
    %340 = tpu.matmul %338, %339, %cst_78 {dimension_numbers = #tpu.dot_dimension_numbers<[1], [0], [0], [1], [0, 0, 1, 1], [], []>} : vector<8x256xf32>, vector<256x64xf32>, vector<8x64xf32> -> vector<8x64xf32>
    %c0_79 = arith.constant 0 : index
    %c0_80 = arith.constant 0 : index
    %341 = vector.load %arg8[%c0_79, %c0_80] : memref<1x64xf32, #tpu.memory_space<vmem>>, vector<1x64xf32>
    %342 = vector.broadcast %341 : vector<1x64xf32> to vector<8x64xf32>
    %343 = arith.addf %340, %342 : vector<8x64xf32>
    %344 = arith.negf %343 : vector<8x64xf32>
    %345 = math.exp %344 : vector<8x64xf32>
    %cst_81 = arith.constant 1.000000e+00 : f32
    %346 = vector.broadcast %cst_81 : f32 to vector<8x64xf32>
    %347 = arith.addf %346, %345 : vector<8x64xf32>
    %348 = arith.divf %346, %347 : vector<8x64xf32>
    %c0_82 = arith.constant 0 : index
    %c0_83 = arith.constant 0 : index
    %349 = vector.load %arg9[%c0_82, %c0_83] : memref<64x2xf32, #tpu.memory_space<vmem>>, vector<64x2xf32>
    %cst_84 = arith.constant dense<0.000000e+00> : vector<8x2xf32>
    %350 = tpu.matmul %348, %349, %cst_84 {dimension_numbers = #tpu.dot_dimension_numbers<[1], [0], [0], [1], [0, 0, 1, 1], [], []>} : vector<8x64xf32>, vector<64x2xf32>, vector<8x2xf32> -> vector<8x2xf32>
    %c0_85 = arith.constant 0 : index
    %c0_86 = arith.constant 0 : index
    %351 = vector.load %arg10[%c0_85, %c0_86] : memref<1x2xf32, #tpu.memory_space<vmem>>, vector<1x2xf32>
    %352 = vector.broadcast %351 : vector<1x2xf32> to vector<8x2xf32>
    %353 = arith.addf %350, %352 : vector<8x2xf32>
    %cst_87 = arith.constant dense<0xFF800000> : vector<8xf32>
    %354 = vector.multi_reduction <maximumf>, %353, %cst_87 [1] : vector<8x2xf32> to vector<8xf32>
    %355 = vector.shape_cast %354 : vector<8xf32> to vector<8x1xf32>
    %356 = vector.broadcast %355 : vector<8x1xf32> to vector<8x2xf32>
    %357 = arith.subf %353, %356 : vector<8x2xf32>
    %358 = math.exp %357 : vector<8x2xf32>
    %cst_88 = arith.constant dense<0.000000e+00> : vector<8xf32>
    %359 = vector.multi_reduction <add>, %358, %cst_88 [1] : vector<8x2xf32> to vector<8xf32>
    %360 = vector.shape_cast %359 : vector<8xf32> to vector<8x1xf32>
    %361 = vector.broadcast %360 : vector<8x1xf32> to vector<8x2xf32>
    %362 = arith.divf %358, %361 : vector<8x2xf32>
    %363 = vector.extract_strided_slice %362 {offsets = [0, 0], sizes = [2, 2], strides = [1, 1]} : vector<8x2xf32> to vector<2x2xf32>
    %c0_89 = arith.constant 0 : index
    %c0_90 = arith.constant 0 : index
    %364 = vector.load %arg11[%c0_89, %c0_90] : memref<2x2xf32, #tpu.memory_space<vmem>>, vector<2x2xf32>
    tpu.vector_store %arg11[%c0_89, %c0_90], %363 {strides = array<i32>} : memref<2x2xf32, #tpu.memory_space<vmem>>, vector<2x2xf32>,
    return
  }
}

</mosaic_0001>

<llo_original>
// kernel: my_lstm_forward.1
$region0: #{my_lstm_forward.1}
  #allocation0 [shape = 'u32[]', space=smem, size = 0x4, offset = 0x4, fixed_abs, tag = 'smem constant byte address 0x4 - core index']
  #allocation1 [shape = 'u32[72,128]{1,0:T(1,128)}', space=vmem, size = 0x9000, scoped, tag = 'internal scratch']
  #allocation2 [shape = 'f32[64,256]{1,0:T(8,128)}', space=vmem, size = 0x10000, scoped, tag = 'scratch operand']
  %s0 = inlined_call_operand.vmem [shape: f32[64,64], index: 0, kind: input, shape index: {}]
  %s1 = inlined_call_operand.vmem [shape: f32[64,512], index: 1, kind: input, shape index: {}]
  %s2 = inlined_call_operand.hbm [shape: f32[128,512], index: 2, kind: input, shape index: {}]
  %s3 = inlined_call_operand.vmem [shape: f32[1,512], index: 3, kind: input, shape index: {}]
  %s4 = inlined_call_operand.hbm [shape: f32[256,512], index: 4, kind: input, shape index: {}]
  %s5 = inlined_call_operand.hbm [shape: f32[128,512], index: 5, kind: input, shape index: {}]
  %s6 = inlined_call_operand.vmem [shape: f32[1,512], index: 6, kind: input, shape index: {}]
  %s7 = inlined_call_operand.vmem [shape: f32[256,64], index: 7, kind: input, shape index: {}]
  %s8 = inlined_call_operand.vmem [shape: f32[1,64], index: 8, kind: input, shape index: {}]
  %s9 = inlined_call_operand.vmem [shape: f32[64,2], index: 9, kind: input, shape index: {}]
  %s10 = inlined_call_operand.vmem [shape: f32[1,2], index: 10, kind: input, shape index: {}]
  %s11 = inlined_call_operand.hbm [shape: f32[2,2], index: 11, kind: output, shape index: {}]
  %s12 = sld [smem:[#allocation0]]
  $region66: #{my_lstm_forward.1} parent=0
    _
  %s14 = ssub.s32 1, %s12
  %s15 = scalar_select 0, %s14, %s12
  $region1: #{my_lstm_forward.1} parent=0
    #allocation3 [shape = 'u8[262144]{0}', space=vmem, size = 0x40000, scoped, tag = 'input window, operand 2, single buffered']
    #allocation4 [shape = 's32[1]{0}', space=sflag, size = 0x4, scoped, tag = 'scoped memory for my_lstm_forward.1']
    #allocation5 [shape = 's32[1]{0}', space=sflag, size = 0x4, scoped, tag = 'scoped memory for my_lstm_forward.1']
    #allocation6 [shape = 'u8[524288]{0}', space=vmem, size = 0x80000, scoped, tag = 'input window, operand 4, single buffered']
    #allocation7 [shape = 's32[1]{0}', space=sflag, size = 0x4, scoped, tag = 'scoped memory for my_lstm_forward.1']
    #allocation8 [shape = 'u8[262144]{0}', space=vmem, size = 0x40000, scoped, tag = 'input window, operand 5, single buffered']
    #allocation9 [shape = 'u8[1024]{0}', space=vmem, size = 0x400, scoped, tag = 'output window, operand 0, single buffered']
    %16 = vsyncpa [#allocation4], 0
    %17 = vsyncpa [#allocation7], 0
    %18 = vsyncpa [#allocation5], 0
    // Predicated region
    $region2: #{my_lstm_forward.1} parent=1 // pred_check
      _
    $region3: #{my_lstm_forward.1} parent=1 // pred_check_branch
      %20 = sbr.rel (0) target = $region5
    $region4: #{my_lstm_forward.1} parent=1 // pred_region
      _
    $region5: #{my_lstm_forward.1} parent=1 // pred_fallthru
      _
    // Predicated region
    $region6: #{my_lstm_forward.1} parent=1 // pred_check
      _
    $region7: #{my_lstm_forward.1} parent=1 // pred_check_branch
      %22 = sbr.rel (0) target = $region9
    $region8: #{my_lstm_forward.1} parent=1 // pred_region
      _
    $region9: #{my_lstm_forward.1} parent=1 // pred_fallthru
      _
    // Predicated region
    $region10: #{my_lstm_forward.1} parent=1 // pred_check
      _
    $region11: #{my_lstm_forward.1} parent=1 // pred_check_branch
      %24 = sbr.rel (0) target = $region13
    $region12: #{my_lstm_forward.1} parent=1 // pred_region
      %26 = vsyncadd [#allocation4], 0
      %s27 = sshll.u32 %s2, 4
      %s28 = int_to_ptr.hbm [resolvable:$true] %s27
      %s29 = sshll.u32 [#allocation3], 4
      %s30 = int_to_ptr.vmem [resolvable:$true] %s29
      %35 = dma.hbm_to_vmem [thread:$0]  %s28, 8192, %s30, [#allocation4], 512, 512, 32
    $region13: #{my_lstm_forward.1} parent=1 // pred_fallthru
      _
    // Predicated region
    $region14: #{my_lstm_forward.1} parent=1 // pred_check
      _
    $region15: #{my_lstm_forward.1} parent=1 // pred_check_branch
      %37 = sbr.rel (0) target = $region17
    $region16: #{my_lstm_forward.1} parent=1 // pred_region
      _
    $region17: #{my_lstm_forward.1} parent=1 // pred_fallthru
      _
    // Predicated region
    $region18: #{my_lstm_forward.1} parent=1 // pred_check
      _
    $region19: #{my_lstm_forward.1} parent=1 // pred_check_branch
      %39 = sbr.rel (0) target = $region21
    $region20: #{my_lstm_forward.1} parent=1 // pred_region
      %41 = vsyncadd [#allocation7], 0
      %s42 = sshll.u32 %s4, 4
      %s43 = int_to_ptr.hbm [resolvable:$true] %s42
      %s44 = sshll.u32 [#allocation6], 4
      %s45 = int_to_ptr.vmem [resolvable:$true] %s44
      %50 = dma.hbm_to_vmem [thread:$0]  %s43, 16384, %s45, [#allocation7], 512, 512, 32
    $region21: #{my_lstm_forward.1} parent=1 // pred_fallthru
      _
    // Predicated region
    $region22: #{my_lstm_forward.1} parent=1 // pred_check
      _
    $region23: #{my_lstm_forward.1} parent=1 // pred_check_branch
      %52 = sbr.rel (0) target = $region25
    $region24: #{my_lstm_forward.1} parent=1 // pred_region
      %54 = vsyncadd [#allocation7], 0
      %s55 = sshll.u32 %s5, 4
      %s56 = int_to_ptr.hbm [resolvable:$true] %s55
      %s57 = sshll.u32 [#allocation8], 4
      %s58 = int_to_ptr.vmem [resolvable:$true] %s57
      %63 = dma.hbm_to_vmem [thread:$0]  %s56, 8192, %s58, [#allocation7], 512, 512, 32
    $region25: #{my_lstm_forward.1} parent=1 // pred_fallthru
      _
    // Predicated region
    $region26: #{my_lstm_forward.1} parent=1 // pred_check
      _
    $region27: #{my_lstm_forward.1} parent=1 // pred_check_branch
      %65 = sbr.rel (0) target = $region29
    $region28: #{my_lstm_forward.1} parent=1 // pred_region
      _
    $region29: #{my_lstm_forward.1} parent=1 // pred_fallthru
      _
    // Predicated region
    $region30: #{my_lstm_forward.1} parent=1 // pred_check
      _
    $region31: #{my_lstm_forward.1} parent=1 // pred_check_branch
      %67 = sbr.rel (0) target = $region33
    $region32: #{my_lstm_forward.1} parent=1 // pred_region
      _
    $region33: #{my_lstm_forward.1} parent=1 // pred_fallthru
      _
    // Predicated region
    $region34: #{my_lstm_forward.1} parent=1 // pred_check
      _
    $region35: #{my_lstm_forward.1} parent=1 // pred_check_branch
      %69 = sbr.rel (0) target = $region37
    $region36: #{my_lstm_forward.1} parent=1 // pred_region
      _
    $region37: #{my_lstm_forward.1} parent=1 // pred_fallthru
      _
    // Predicated region
    $region38: #{my_lstm_forward.1} parent=1 // pred_check
      _
    $region39: #{my_lstm_forward.1} parent=1 // pred_check_branch
      %71 = sbr.rel (0) target = $region41
    $region40: #{my_lstm_forward.1} parent=1 // pred_region
      _
    $region41: #{my_lstm_forward.1} parent=1 // pred_fallthru
      _
    // Predicated region
    $region42: #{my_lstm_forward.1} parent=1 // pred_check
      _
    $region43: #{my_lstm_forward.1} parent=1 // pred_check_branch
      %73 = sbr.rel (0) target = $region45
    $region44: #{my_lstm_forward.1} parent=1 // pred_region
      _
    $region45: #{my_lstm_forward.1} parent=1 // pred_fallthru
      _
    // Predicated region
    $region46: #{my_lstm_forward.1} parent=1 // pred_check
      _
    $region47: #{my_lstm_forward.1} parent=1 // pred_check_branch
      %75 = sbr.rel (0) target = $region49
    $region48: #{my_lstm_forward.1} parent=1 // pred_region
      %77 = dma.done [#allocation4], 8192
    $region49: #{my_lstm_forward.1} parent=1 // pred_fallthru
      _
    // Predicated region
    $region50: #{my_lstm_forward.1} parent=1 // pred_check
      _
    $region51: #{my_lstm_forward.1} parent=1 // pred_check_branch
      %79 = sbr.rel (0) target = $region53
    $region52: #{my_lstm_forward.1} parent=1 // pred_region
      %81 = dma.done [#allocation7], 16384
    $region53: #{my_lstm_forward.1} parent=1 // pred_fallthru
      _
    // Predicated region
    $region54: #{my_lstm_forward.1} parent=1 // pred_check
      _
    $region55: #{my_lstm_forward.1} parent=1 // pred_check_branch
      %83 = sbr.rel (0) target = $region57
    $region56: #{my_lstm_forward.1} parent=1 // pred_region
      %85 = dma.done [#allocation7], 8192
    $region57: #{my_lstm_forward.1} parent=1 // pred_fallthru
      _
    %v86 = vld [vmem:[%s0] sm:$0xff]
    %v87 = vld [vmem:[%s0 + $0x8] sm:$0xff]
    %v88 = vld [vmem:[%s0 + $0x10] sm:$0xff]
    %v89 = vld [vmem:[%s0 + $0x18] sm:$0xff]
    %v90 = vld [vmem:[%s0 + $0x20] sm:$0xff]
    %v91 = vld [vmem:[%s0 + $0x28] sm:$0xff]
    %v92 = vld [vmem:[%s0 + $0x30] sm:$0xff]
    %v93 = vld [vmem:[%s0 + $0x38] sm:$0xff]
    %v94 = vld [vmem:[%s1] sm:$0xff]
    %v95 = vld [vmem:[%s1 + $0x8] sm:$0xff]
    %v96 = vld [vmem:[%s1 + $0x10] sm:$0xff]
    %v97 = vld [vmem:[%s1 + $0x18] sm:$0xff]
    %v98 = vld [vmem:[%s1 + $0x20] sm:$0xff]
    %v99 = vld [vmem:[%s1 + $0x28] sm:$0xff]
    %v100 = vld [vmem:[%s1 + $0x30] sm:$0xff]
    %v101 = vld [vmem:[%s1 + $0x38] sm:$0xff]
    %v102 = vld [vmem:[%s1 + $0x40] sm:$0xff]
    %v103 = vld [vmem:[%s1 + $0x48] sm:$0xff]
    %v104 = vld [vmem:[%s1 + $0x50] sm:$0xff]
    %v105 = vld [vmem:[%s1 + $0x58] sm:$0xff]
    %v106 = vld [vmem:[%s1 + $0x60] sm:$0xff]
    %v107 = vld [vmem:[%s1 + $0x68] sm:$0xff]
    %v108 = vld [vmem:[%s1 + $0x70] sm:$0xff]
    %v109 = vld [vmem:[%s1 + $0x78] sm:$0xff]
    %v110 = vld [vmem:[%s1 + $0x80] sm:$0xff]
    %v111 = vld [vmem:[%s1 + $0x88] sm:$0xff]
    %v112 = vld [vmem:[%s1 + $0x90] sm:$0xff]
    %v113 = vld [vmem:[%s1 + $0x98] sm:$0xff]
    %v114 = vld [vmem:[%s1 + $0xa0] sm:$0xff]
    %v115 = vld [vmem:[%s1 + $0xa8] sm:$0xff]
    %v116 = vld [vmem:[%s1 + $0xb0] sm:$0xff]
    %v117 = vld [vmem:[%s1 + $0xb8] sm:$0xff]
    %v118 = vld [vmem:[%s1 + $0xc0] sm:$0xff]
    %v119 = vld [vmem:[%s1 + $0xc8] sm:$0xff]
    %v120 = vld [vmem:[%s1 + $0xd0] sm:$0xff]
    %v121 = vld [vmem:[%s1 + $0xd8] sm:$0xff]
    %v122 = vld [vmem:[%s1 + $0xe0] sm:$0xff]
    %v123 = vld [vmem:[%s1 + $0xe8] sm:$0xff]
    %v124 = vld [vmem:[%s1 + $0xf0] sm:$0xff]
    %v125 = vld [vmem:[%s1 + $0xf8] sm:$0xff]
    %v126 = vld [vmem:[%s3] sm:$0xf]
    %v128 = vperm.slane %v126, 0
    %v129 = vperm.slane %v126, 1
    %v130 = vperm.slane %v126, 2
    %v131 = vperm.slane %v126, 3
    %vm136 = vcmask 523264
    %v138 = vsel %vm136, %v86, 0
    %v141 = vsel %vm136, %v87, 0
    %v144 = vsel %vm136, %v88, 0
    %v147 = vsel %vm136, %v89, 0
    %v150 = vsel %vm136, %v90, 0
    %v153 = vsel %vm136, %v91, 0
    %v156 = vsel %vm136, %v92, 0
    %v159 = vsel %vm136, %v93, 0
    %161 = vmatpush.msra.mxu0 0.0
    %162 = vmatpush.msra.mxu0 0.0
    %163 = vmatpush.msra.mxu0 0.0
    %164 = vmatpush.msra.mxu0 0.0
    %165 = vmatpush.msra.mxu0 0.0
    %166 = vmatpush.msra.mxu0 0.0
    %167 = vmatpush.msra.mxu0 0.0
    %168 = vmatpush.msra.mxu0 0.0
    %169 = vmatpush.msra.mxu0 %v122
    %170 = vmatpush.msra.mxu0 %v118
    %171 = vmatpush.msra.mxu0 %v114
    %172 = vmatpush.msra.mxu0 %v110
    %173 = vmatpush.msra.mxu0 %v106
    %174 = vmatpush.msra.mxu0 %v102
    %175 = vmatpush.msra.mxu0 %v98
    %176 = vmatpush.msra.mxu0 %v94
    %177 = vmatmul.f32.gmra.mxu0 %v138
    %v178 = vpop.f32.mrf.mxu0
    %v179 = vadd.f32 %v128, %v178
    %180 = vmatmul.f32.gmra.mxu0 %v141
    %v181 = vpop.f32.mrf.mxu0
    %v182 = vadd.f32 %v128, %v181
    %183 = vmatmul.f32.gmra.mxu0 %v144
    %v184 = vpop.f32.mrf.mxu0
    %v185 = vadd.f32 %v128, %v184
    %186 = vmatmul.f32.gmra.mxu0 %v147
    %v187 = vpop.f32.mrf.mxu0
    %v188 = vadd.f32 %v128, %v187
    %189 = vmatmul.f32.gmra.mxu0 %v150
    %v190 = vpop.f32.mrf.mxu0
    %v191 = vadd.f32 %v128, %v190
    %192 = vmatmul.f32.gmra.mxu0 %v153
    %v193 = vpop.f32.mrf.mxu0
    %v194 = vadd.f32 %v128, %v193
    %195 = vmatmul.f32.gmra.mxu0 %v156
    %v196 = vpop.f32.mrf.mxu0
    %v197 = vadd.f32 %v128, %v196
    %198 = vmatmul.f32.gmra.mxu0 %v159
    %v199 = vpop.f32.mrf.mxu0
    %v200 = vadd.f32 %v128, %v199
    %201 = vdwg.mxu0
    %202 = vmatpush.msra.mxu0 0.0
    %203 = vmatpush.msra.mxu0 0.0
    %204 = vmatpush.msra.mxu0 0.0
    %205 = vmatpush.msra.mxu0 0.0
    %206 = vmatpush.msra.mxu0 0.0
    %207 = vmatpush.msra.mxu0 0.0
    %208 = vmatpush.msra.mxu0 0.0
    %209 = vmatpush.msra.mxu0 0.0
    %210 = vmatpush.msra.mxu0 %v123
    %211 = vmatpush.msra.mxu0 %v119
    %212 = vmatpush.msra.mxu0 %v115
    %213 = vmatpush.msra.mxu0 %v111
    %214 = vmatpush.msra.mxu0 %v107
    %215 = vmatpush.msra.mxu0 %v103
    %216 = vmatpush.msra.mxu0 %v99
    %217 = vmatpush.msra.mxu0 %v95
    %218 = vmatmul.f32.gmra.mxu0 %v138
    %v219 = vpop.f32.mrf.mxu0
    %v220 = vadd.f32 %v129, %v219
    %221 = vmatmul.f32.gmra.mxu0 %v141
    %v222 = vpop.f32.mrf.mxu0
    %v223 = vadd.f32 %v129, %v222
    %224 = vmatmul.f32.gmra.mxu0 %v144
    %v225 = vpop.f32.mrf.mxu0
    %v226 = vadd.f32 %v129, %v225
    %227 = vmatmul.f32.gmra.mxu0 %v147
    %v228 = vpop.f32.mrf.mxu0
    %v229 = vadd.f32 %v129, %v228
    %230 = vmatmul.f32.gmra.mxu0 %v150
    %v231 = vpop.f32.mrf.mxu0
    %v232 = vadd.f32 %v129, %v231
    %233 = vmatmul.f32.gmra.mxu0 %v153
    %v234 = vpop.f32.mrf.mxu0
    %v235 = vadd.f32 %v129, %v234
    %236 = vmatmul.f32.gmra.mxu0 %v156
    %v237 = vpop.f32.mrf.mxu0
    %v238 = vadd.f32 %v129, %v237
    %239 = vmatmul.f32.gmra.mxu0 %v159
    %v240 = vpop.f32.mrf.mxu0
    %v241 = vadd.f32 %v129, %v240
    %242 = vdwg.mxu0
    %243 = vmatpush.msra.mxu0 0.0
    %244 = vmatpush.msra.mxu0 0.0
    %245 = vmatpush.msra.mxu0 0.0
    %246 = vmatpush.msra.mxu0 0.0
    %247 = vmatpush.msra.mxu0 0.0
    %248 = vmatpush.msra.mxu0 0.0
    %249 = vmatpush.msra.mxu0 0.0
    %250 = vmatpush.msra.mxu0 0.0
    %251 = vmatpush.msra.mxu0 %v124
    %252 = vmatpush.msra.mxu0 %v120
    %253 = vmatpush.msra.mxu0 %v116
    %254 = vmatpush.msra.mxu0 %v112
    %255 = vmatpush.msra.mxu0 %v108
    %256 = vmatpush.msra.mxu0 %v104
    %257 = vmatpush.msra.mxu0 %v100
    %258 = vmatpush.msra.mxu0 %v96
    %259 = vmatmul.f32.gmra.mxu0 %v138
    %v260 = vpop.f32.mrf.mxu0
    %v261 = vadd.f32 %v130, %v260
    %262 = vmatmul.f32.gmra.mxu0 %v141
    %v263 = vpop.f32.mrf.mxu0
    %v264 = vadd.f32 %v130, %v263
    %265 = vmatmul.f32.gmra.mxu0 %v144
    %v266 = vpop.f32.mrf.mxu0
    %v267 = vadd.f32 %v130, %v266
    %268 = vmatmul.f32.gmra.mxu0 %v147
    %v269 = vpop.f32.mrf.mxu0
    %v270 = vadd.f32 %v130, %v269
    %271 = vmatmul.f32.gmra.mxu0 %v150
    %v272 = vpop.f32.mrf.mxu0
    %v273 = vadd.f32 %v130, %v272
    %274 = vmatmul.f32.gmra.mxu0 %v153
    %v275 = vpop.f32.mrf.mxu0
    %v276 = vadd.f32 %v130, %v275
    %277 = vmatmul.f32.gmra.mxu0 %v156
    %v278 = vpop.f32.mrf.mxu0
    %v279 = vadd.f32 %v130, %v278
    %280 = vmatmul.f32.gmra.mxu0 %v159
    %v281 = vpop.f32.mrf.mxu0
    %v282 = vadd.f32 %v130, %v281
    %283 = vdwg.mxu0
    %284 = vmatpush.msra.mxu0 0.0
    %285 = vmatpush.msra.mxu0 0.0
    %286 = vmatpush.msra.mxu0 0.0
    %287 = vmatpush.msra.mxu0 0.0
    %288 = vmatpush.msra.mxu0 0.0
    %289 = vmatpush.msra.mxu0 0.0
    %290 = vmatpush.msra.mxu0 0.0
    %291 = vmatpush.msra.mxu0 0.0
    %292 = vmatpush.msra.mxu0 %v125
    %293 = vmatpush.msra.mxu0 %v121
    %294 = vmatpush.msra.mxu0 %v117
    %295 = vmatpush.msra.mxu0 %v113
    %296 = vmatpush.msra.mxu0 %v109
    %297 = vmatpush.msra.mxu0 %v105
    %298 = vmatpush.msra.mxu0 %v101
    %299 = vmatpush.msra.mxu0 %v97
    %300 = vmatmul.f32.gmra.mxu0 %v138
    %v301 = vpop.f32.mrf.mxu0
    %v302 = vadd.f32 %v131, %v301
    %303 = vmatmul.f32.gmra.mxu0 %v141
    %v304 = vpop.f32.mrf.mxu0
    %v305 = vadd.f32 %v131, %v304
    %306 = vmatmul.f32.gmra.mxu0 %v144
    %v307 = vpop.f32.mrf.mxu0
    %v308 = vadd.f32 %v131, %v307
    %309 = vmatmul.f32.gmra.mxu0 %v147
    %v310 = vpop.f32.mrf.mxu0
    %v311 = vadd.f32 %v131, %v310
    %312 = vmatmul.f32.gmra.mxu0 %v150
    %v313 = vpop.f32.mrf.mxu0
    %v314 = vadd.f32 %v131, %v313
    %315 = vmatmul.f32.gmra.mxu0 %v153
    %v316 = vpop.f32.mrf.mxu0
    %v317 = vadd.f32 %v131, %v316
    %318 = vmatmul.f32.gmra.mxu0 %v156
    %v319 = vpop.f32.mrf.mxu0
    %v320 = vadd.f32 %v131, %v319
    %321 = vmatmul.f32.gmra.mxu0 %v159
    %v322 = vpop.f32.mrf.mxu0
    %v323 = vadd.f32 %v131, %v322
    %324 = vdwg.mxu0
    %v325 = vld [vmem:[#allocation3] sm:$0xff]
    %v326 = vld [vmem:[#allocation3 + $0x8] sm:$0xff]
    %v327 = vld [vmem:[#allocation3 + $0x10] sm:$0xff]
    %v328 = vld [vmem:[#allocation3 + $0x18] sm:$0xff]
    %v329 = vld [vmem:[#allocation3 + $0x20] sm:$0xff]
    %v330 = vld [vmem:[#allocation3 + $0x28] sm:$0xff]
    %v331 = vld [vmem:[#allocation3 + $0x30] sm:$0xff]
    %v332 = vld [vmem:[#allocation3 + $0x38] sm:$0xff]
    %v333 = vld [vmem:[#allocation3 + $0x40] sm:$0xff]
    %v334 = vld [vmem:[#allocation3 + $0x48] sm:$0xff]
    %v335 = vld [vmem:[#allocation3 + $0x50] sm:$0xff]
    %v336 = vld [vmem:[#allocation3 + $0x58] sm:$0xff]
    %v337 = vld [vmem:[#allocation3 + $0x60] sm:$0xff]
    %v338 = vld [vmem:[#allocation3 + $0x68] sm:$0xff]
    %v339 = vld [vmem:[#allocation3 + $0x70] sm:$0xff]
    %v340 = vld [vmem:[#allocation3 + $0x78] sm:$0xff]
    %v341 = vld [vmem:[#allocation3 + $0x80] sm:$0xff]
    %v342 = vld [vmem:[#allocation3 + $0x88] sm:$0xff]
    %v343 = vld [vmem:[#allocation3 + $0x90] sm:$0xff]
    %v344 = vld [vmem:[#allocation3 + $0x98] sm:$0xff]
    %v345 = vld [vmem:[#allocation3 + $0xa0] sm:$0xff]
    %v346 = vld [vmem:[#allocation3 + $0xa8] sm:$0xff]
    %v347 = vld [vmem:[#allocation3 + $0xb0] sm:$0xff]
    %v348 = vld [vmem:[#allocation3 + $0xb8] sm:$0xff]
    %v349 = vld [vmem:[#allocation3 + $0xc0] sm:$0xff]
    %v350 = vld [vmem:[#allocation3 + $0xc8] sm:$0xff]
    %v351 = vld [vmem:[#allocation3 + $0xd0] sm:$0xff]
    %v352 = vld [vmem:[#allocation3 + $0xd8] sm:$0xff]
    %v353 = vld [vmem:[#allocation3 + $0xe0] sm:$0xff]
    %v354 = vld [vmem:[#allocation3 + $0xe8] sm:$0xff]
    %v355 = vld [vmem:[#allocation3 + $0xf0] sm:$0xff]
    %v356 = vld [vmem:[#allocation3 + $0xf8] sm:$0xff]
    %v357 = vld [vmem:[#allocation3 + $0x100] sm:$0xff]
    %v358 = vld [vmem:[#allocation3 + $0x108] sm:$0xff]
    %v359 = vld [vmem:[#allocation3 + $0x110] sm:$0xff]
    %v360 = vld [vmem:[#allocation3 + $0x118] sm:$0xff]
    %v361 = vld [vmem:[#allocation3 + $0x120] sm:$0xff]
    %v362 = vld [vmem:[#allocation3 + $0x128] sm:$0xff]
    %v363 = vld [vmem:[#allocation3 + $0x130] sm:$0xff]
    %v364 = vld [vmem:[#allocation3 + $0x138] sm:$0xff]
    %v365 = vld [vmem:[#allocation3 + $0x140] sm:$0xff]
    %v366 = vld [vmem:[#allocation3 + $0x148] sm:$0xff]
    %v367 = vld [vmem:[#allocation3 + $0x150] sm:$0xff]
    %v368 = vld [vmem:[#allocation3 + $0x158] sm:$0xff]
    %v369 = vld [vmem:[#allocation3 + $0x160] sm:$0xff]
    %v370 = vld [vmem:[#allocation3 + $0x168] sm:$0xff]
    %v371 = vld [vmem:[#allocation3 + $0x170] sm:$0xff]
    %v372 = vld [vmem:[#allocation3 + $0x178] sm:$0xff]
    %v373 = vld [vmem:[#allocation3 + $0x180] sm:$0xff]
    %v374 = vld [vmem:[#allocation3 + $0x188] sm:$0xff]
    %v375 = vld [vmem:[#allocation3 + $0x190] sm:$0xff]
    %v376 = vld [vmem:[#allocation3 + $0x198] sm:$0xff]
    %v377 = vld [vmem:[#allocation3 + $0x1a0] sm:$0xff]
    %v378 = vld [vmem:[#allocation3 + $0x1a8] sm:$0xff]
    %v379 = vld [vmem:[#allocation3 + $0x1b0] sm:$0xff]
    %v380 = vld [vmem:[#allocation3 + $0x1b8] sm:$0xff]
    %v381 = vld [vmem:[#allocation3 + $0x1c0] sm:$0xff]
    %v382 = vld [vmem:[#allocation3 + $0x1c8] sm:$0xff]
    %v383 = vld [vmem:[#allocation3 + $0x1d0] sm:$0xff]
    %v384 = vld [vmem:[#allocation3 + $0x1d8] sm:$0xff]
    %v385 = vld [vmem:[#allocation3 + $0x1e0] sm:$0xff]
    %v386 = vld [vmem:[#allocation3 + $0x1e8] sm:$0xff]
    %v387 = vld [vmem:[#allocation3 + $0x1f0] sm:$0xff]
    %v388 = vld [vmem:[#allocation3 + $0x1f8] sm:$0xff]
    %389 = vmatpush.msra.mxu0 %v385
    %390 = vmatpush.msra.mxu0 %v381
    %391 = vmatpush.msra.mxu0 %v377
    %392 = vmatpush.msra.mxu0 %v373
    %393 = vmatpush.msra.mxu0 %v369
    %394 = vmatpush.msra.mxu0 %v365
    %395 = vmatpush.msra.mxu0 %v361
    %396 = vmatpush.msra.mxu0 %v357
    %397 = vmatpush.msra.mxu0 %v353
    %398 = vmatpush.msra.mxu0 %v349
    %399 = vmatpush.msra.mxu0 %v345
    %400 = vmatpush.msra.mxu0 %v341
    %401 = vmatpush.msra.mxu0 %v337
    %402 = vmatpush.msra.mxu0 %v333
    %403 = vmatpush.msra.mxu0 %v329
    %404 = vmatpush.msra.mxu0 %v325
    %405 = vmatmul.f32.gmra.mxu0 0.0
    %v406 = vpop.f32.mrf.mxu0
    %v407 = vadd.f32 0.0, %v406
    %408 = vdwg.mxu0
    %409 = vmatpush.msra.mxu0 %v386
    %410 = vmatpush.msra.mxu0 %v382
    %411 = vmatpush.msra.mxu0 %v378
    %412 = vmatpush.msra.mxu0 %v374
    %413 = vmatpush.msra.mxu0 %v370
    %414 = vmatpush.msra.mxu0 %v366
    %415 = vmatpush.msra.mxu0 %v362
    %416 = vmatpush.msra.mxu0 %v358
    %417 = vmatpush.msra.mxu0 %v354
    %418 = vmatpush.msra.mxu0 %v350
    %419 = vmatpush.msra.mxu0 %v346
    %420 = vmatpush.msra.mxu0 %v342
    %421 = vmatpush.msra.mxu0 %v338
    %422 = vmatpush.msra.mxu0 %v334
    %423 = vmatpush.msra.mxu0 %v330
    %424 = vmatpush.msra.mxu0 %v326
    %425 = vmatmul.f32.gmra.mxu0 0.0
    %v426 = vpop.f32.mrf.mxu0
    %v427 = vadd.f32 0.0, %v426
    %428 = vdwg.mxu0
    %429 = vmatpush.msra.mxu0 %v387
    %430 = vmatpush.msra.mxu0 %v383
    %431 = vmatpush.msra.mxu0 %v379
    %432 = vmatpush.msra.mxu0 %v375
    %433 = vmatpush.msra.mxu0 %v371
    %434 = vmatpush.msra.mxu0 %v367
    %435 = vmatpush.msra.mxu0 %v363
    %436 = vmatpush.msra.mxu0 %v359
    %437 = vmatpush.msra.mxu0 %v355
    %438 = vmatpush.msra.mxu0 %v351
    %439 = vmatpush.msra.mxu0 %v347
    %440 = vmatpush.msra.mxu0 %v343
    %441 = vmatpush.msra.mxu0 %v339
    %442 = vmatpush.msra.mxu0 %v335
    %443 = vmatpush.msra.mxu0 %v331
    %444 = vmatpush.msra.mxu0 %v327
    %445 = vmatmul.f32.gmra.mxu0 0.0
    %v446 = vpop.f32.mrf.mxu0
    %v447 = vadd.f32 0.0, %v446
    %448 = vdwg.mxu0
    %449 = vmatpush.msra.mxu0 %v388
    %450 = vmatpush.msra.mxu0 %v384
    %451 = vmatpush.msra.mxu0 %v380
    %452 = vmatpush.msra.mxu0 %v376
    %453 = vmatpush.msra.mxu0 %v372
    %454 = vmatpush.msra.mxu0 %v368
    %455 = vmatpush.msra.mxu0 %v364
    %456 = vmatpush.msra.mxu0 %v360
    %457 = vmatpush.msra.mxu0 %v356
    %458 = vmatpush.msra.mxu0 %v352
    %459 = vmatpush.msra.mxu0 %v348
    %460 = vmatpush.msra.mxu0 %v344
    %461 = vmatpush.msra.mxu0 %v340
    %462 = vmatpush.msra.mxu0 %v336
    %463 = vmatpush.msra.mxu0 %v332
    %464 = vmatpush.msra.mxu0 %v328
    %465 = vmatmul.f32.gmra.mxu0 0.0
    %v466 = vpop.f32.mrf.mxu0
    %v467 = vadd.f32 0.0, %v466
    %468 = vdwg.mxu0
    %v469 = vadd.f32 %v179, %v407
    %v470 = vadd.f32 %v220, %v427
    %v471 = vadd.f32 %v261, %v447
    %v472 = vadd.f32 %v302, %v467
    %v473 = vxor.u32 %v469, 2147483648
    %v474 = vxor.u32 %v470, 2147483648
    %v475 = vxor.u32 %v471, 2147483648
    %v476 = vmul.f32 %v473, 1.442695
    %v477 = vpow.pop %v476
    %v478 = vmul.f32 %v474, 1.442695
    %v479 = vpow.pop %v478
    %v480 = vmul.f32 %v475, 1.442695
    %v481 = vpow.pop %v480
    %v482 = vadd.f32 %v477, 1.0
    %v483 = vadd.f32 %v479, 1.0
    %v484 = vadd.f32 %v481, 1.0
    %v485 = vrcp.pop %v482
    %v486 = vmul.f32 %v482, %v485
    %v487 = vsub.f32 1.0, %v486
    %v488 = vmul.f32 %v485, %v487
    %v489 = vadd.f32 %v485, %v488
    %vm490 = vweird.f32 %v482
    %vm491 = vweird.f32 %v485
    %vm492 = vmor %vm490, %vm491
    %v493 = vsel %vm492, %v485, %v489
    %v494 = vand.u32 2147483647, %v482
    %vm495 = vcmp.eq.f32.partialorder %v494, 8.507059e+37
    %v496 = vand.u32 %v482, 2147483648
    %v497 = vor.u32 1.1754944e-38, %v496
    %v498 = vsel %vm495, %v497, %v493
    %v499 = vmul.f32 1.0, %v498
    %v500 = vrcp.pop %v483
    %v501 = vmul.f32 %v483, %v500
    %v502 = vsub.f32 1.0, %v501
    %v503 = vmul.f32 %v500, %v502
    %v504 = vadd.f32 %v500, %v503
    %vm505 = vweird.f32 %v483
    %vm506 = vweird.f32 %v500
    %vm507 = vmor %vm505, %vm506
    %v508 = vsel %vm507, %v500, %v504
    %v509 = vand.u32 2147483647, %v483
    %vm510 = vcmp.eq.f32.partialorder %v509, 8.507059e+37
    %v511 = vand.u32 %v483, 2147483648
    %v512 = vor.u32 1.1754944e-38, %v511
    %v513 = vsel %vm510, %v512, %v508
    %v514 = vmul.f32 1.0, %v513
    %v515 = vrcp.pop %v484
    %v516 = vmul.f32 %v484, %v515
    %v517 = vsub.f32 1.0, %v516
    %v518 = vmul.f32 %v515, %v517
    %v519 = vadd.f32 %v515, %v518
    %vm520 = vweird.f32 %v484
    %vm521 = vweird.f32 %v515
    %vm522 = vmor %vm520, %vm521
    %v523 = vsel %vm522, %v515, %v519
    %v524 = vand.u32 2147483647, %v484
    %vm525 = vcmp.eq.f32.partialorder %v524, 8.507059e+37
    %v526 = vand.u32 %v484, 2147483648
    %v527 = vor.u32 1.1754944e-38, %v526
    %v528 = vsel %vm525, %v527, %v523
    %v529 = vmul.f32 1.0, %v528
    %v530 = vtanh.pop %v472
    %v531 = vmul.f32 %v514, 0.0
    %v532 = vmul.f32 %v499, %v530
    %v533 = vadd.f32 %v531, %v532
    %v534 = vtanh.pop %v533
    %v535 = vmul.f32 %v529, %v534
    %536 = vst [vmem:[#allocation2] sm:$0xff] %v535
    %537 = vst [vmem:[#allocation2 + $0x78] sm:$0xff] %v535
    %538 = vmatpush.msra.mxu0 %v385
    %539 = vmatpush.msra.mxu0 %v381
    %540 = vmatpush.msra.mxu0 %v377
    %541 = vmatpush.msra.mxu0 %v373
    %542 = vmatpush.msra.mxu0 %v369
    %543 = vmatpush.msra.mxu0 %v365
    %544 = vmatpush.msra.mxu0 %v361
    %545 = vmatpush.msra.mxu0 %v357
    %546 = vmatpush.msra.mxu0 %v353
    %547 = vmatpush.msra.mxu0 %v349
    %548 = vmatpush.msra.mxu0 %v345
    %549 = vmatpush.msra.mxu0 %v341
    %550 = vmatpush.msra.mxu0 %v337
    %551 = vmatpush.msra.mxu0 %v333
    %552 = vmatpush.msra.mxu0 %v329
    %553 = vmatpush.msra.mxu0 %v325
    %554 = vmatmul.f32.gmra.mxu0 %v535
    %v555 = vpop.f32.mrf.mxu0
    %v556 = vadd.f32 0.0, %v555
    %557 = vdwg.mxu0
    %558 = vmatpush.msra.mxu0 %v386
    %559 = vmatpush.msra.mxu0 %v382
    %560 = vmatpush.msra.mxu0 %v378
    %561 = vmatpush.msra.mxu0 %v374
    %562 = vmatpush.msra.mxu0 %v370
    %563 = vmatpush.msra.mxu0 %v366
    %564 = vmatpush.msra.mxu0 %v362
    %565 = vmatpush.msra.mxu0 %v358
    %566 = vmatpush.msra.mxu0 %v354
    %567 = vmatpush.msra.mxu0 %v350
    %568 = vmatpush.msra.mxu0 %v346
    %569 = vmatpush.msra.mxu0 %v342
    %570 = vmatpush.msra.mxu0 %v338
    %571 = vmatpush.msra.mxu0 %v334
    %572 = vmatpush.msra.mxu0 %v330
    %573 = vmatpush.msra.mxu0 %v326
    %574 = vmatmul.f32.gmra.mxu0 %v535
    %v575 = vpop.f32.mrf.mxu0
    %v576 = vadd.f32 0.0, %v575
    %577 = vdwg.mxu0
    %578 = vmatpush.msra.mxu0 %v387
    %579 = vmatpush.msra.mxu0 %v383
    %580 = vmatpush.msra.mxu0 %v379
    %581 = vmatpush.msra.mxu0 %v375
    %582 = vmatpush.msra.mxu0 %v371
    %583 = vmatpush.msra.mxu0 %v367
    %584 = vmatpush.msra.mxu0 %v363
    %585 = vmatpush.msra.mxu0 %v359
    %586 = vmatpush.msra.mxu0 %v355
    %587 = vmatpush.msra.mxu0 %v351
    %588 = vmatpush.msra.mxu0 %v347
    %589 = vmatpush.msra.mxu0 %v343
    %590 = vmatpush.msra.mxu0 %v339
    %591 = vmatpush.msra.mxu0 %v335
    %592 = vmatpush.msra.mxu0 %v331
    %593 = vmatpush.msra.mxu0 %v327
    %594 = vmatmul.f32.gmra.mxu0 %v535
    %v595 = vpop.f32.mrf.mxu0
    %v596 = vadd.f32 0.0, %v595
    %597 = vdwg.mxu0
    %598 = vmatpush.msra.mxu0 %v388
    %599 = vmatpush.msra.mxu0 %v384
    %600 = vmatpush.msra.mxu0 %v380
    %601 = vmatpush.msra.mxu0 %v376
    %602 = vmatpush.msra.mxu0 %v372
    %603 = vmatpush.msra.mxu0 %v368
    %604 = vmatpush.msra.mxu0 %v364
    %605 = vmatpush.msra.mxu0 %v360
    %606 = vmatpush.msra.mxu0 %v356
    %607 = vmatpush.msra.mxu0 %v352
    %608 = vmatpush.msra.mxu0 %v348
    %609 = vmatpush.msra.mxu0 %v344
    %610 = vmatpush.msra.mxu0 %v340
    %611 = vmatpush.msra.mxu0 %v336
    %612 = vmatpush.msra.mxu0 %v332
    %613 = vmatpush.msra.mxu0 %v328
    %614 = vmatmul.f32.gmra.mxu0 %v535
    %v615 = vpop.f32.mrf.mxu0
    %v616 = vadd.f32 0.0, %v615
    %617 = vdwg.mxu0
    %v618 = vadd.f32 %v182, %v556
    %v619 = vadd.f32 %v223, %v576
    %v620 = vadd.f32 %v264, %v596
    %v621 = vadd.f32 %v305, %v616
    %v622 = vxor.u32 %v618, 2147483648
    %v623 = vxor.u32 %v619, 2147483648
    %v624 = vxor.u32 %v620, 2147483648
    %v625 = vmul.f32 %v622, 1.442695
    %v626 = vpow.pop %v625
    %v627 = vmul.f32 %v623, 1.442695
    %v628 = vpow.pop %v627
    %v629 = vmul.f32 %v624, 1.442695
    %v630 = vpow.pop %v629
    %v631 = vadd.f32 %v626, 1.0
    %v632 = vadd.f32 %v628, 1.0
    %v633 = vadd.f32 %v630, 1.0
    %v634 = vrcp.pop %v631
    %v635 = vmul.f32 %v631, %v634
    %v636 = vsub.f32 1.0, %v635
    %v637 = vmul.f32 %v634, %v636
    %v638 = vadd.f32 %v634, %v637
    %vm639 = vweird.f32 %v631
    %vm640 = vweird.f32 %v634
    %vm641 = vmor %vm639, %vm640
    %v642 = vsel %vm641, %v634, %v638
    %v643 = vand.u32 2147483647, %v631
    %vm644 = vcmp.eq.f32.partialorder %v643, 8.507059e+37
    %v645 = vand.u32 %v631, 2147483648
    %v646 = vor.u32 1.1754944e-38, %v645
    %v647 = vsel %vm644, %v646, %v642
    %v648 = vmul.f32 1.0, %v647
    %v649 = vrcp.pop %v632
    %v650 = vmul.f32 %v632, %v649
    %v651 = vsub.f32 1.0, %v650
    %v652 = vmul.f32 %v649, %v651
    %v653 = vadd.f32 %v649, %v652
    %vm654 = vweird.f32 %v632
    %vm655 = vweird.f32 %v649
    %vm656 = vmor %vm654, %vm655
    %v657 = vsel %vm656, %v649, %v653
    %v658 = vand.u32 2147483647, %v632
    %vm659 = vcmp.eq.f32.partialorder %v658, 8.507059e+37
    %v660 = vand.u32 %v632, 2147483648
    %v661 = vor.u32 1.1754944e-38, %v660
    %v662 = vsel %vm659, %v661, %v657
    %v663 = vmul.f32 1.0, %v662
    %v664 = vrcp.pop %v633
    %v665 = vmul.f32 %v633, %v664
    %v666 = vsub.f32 1.0, %v665
    %v667 = vmul.f32 %v664, %v666
    %v668 = vadd.f32 %v664, %v667
    %vm669 = vweird.f32 %v633
    %vm670 = vweird.f32 %v664
    %vm671 = vmor %vm669, %vm670
    %v672 = vsel %vm671, %v664, %v668
    %v673 = vand.u32 2147483647, %v633
    %vm674 = vcmp.eq.f32.partialorder %v673, 8.507059e+37
    %v675 = vand.u32 %v633, 2147483648
    %v676 = vor.u32 1.1754944e-38, %v675
    %v677 = vsel %vm674, %v676, %v672
    %v678 = vmul.f32 1.0, %v677
    %v679 = vtanh.pop %v621
    %v680 = vmul.f32 %v663, %v533
    %v681 = vmul.f32 %v648, %v679
    %v682 = vadd.f32 %v680, %v681
    %v683 = vtanh.pop %v682
    %v684 = vmul.f32 %v678, %v683
    %685 = vst [vmem:[#allocation2 + $0x10] sm:$0xff] %v684
    %686 = vst [vmem:[#allocation2 + $0x68] sm:$0xff] %v684
    %687 = vmatpush.msra.mxu0 %v385
    %688 = vmatpush.msra.mxu0 %v381
    %689 = vmatpush.msra.mxu0 %v377
    %690 = vmatpush.msra.mxu0 %v373
    %691 = vmatpush.msra.mxu0 %v369
    %692 = vmatpush.msra.mxu0 %v365
    %693 = vmatpush.msra.mxu0 %v361
    %694 = vmatpush.msra.mxu0 %v357
    %695 = vmatpush.msra.mxu0 %v353
    %696 = vmatpush.msra.mxu0 %v349
    %697 = vmatpush.msra.mxu0 %v345
    %698 = vmatpush.msra.mxu0 %v341
    %699 = vmatpush.msra.mxu0 %v337
    %700 = vmatpush.msra.mxu0 %v333
    %701 = vmatpush.msra.mxu0 %v329
    %702 = vmatpush.msra.mxu0 %v325
    %703 = vmatmul.f32.gmra.mxu0 %v684
    %v704 = vpop.f32.mrf.mxu0
    %v705 = vadd.f32 0.0, %v704
    %706 = vdwg.mxu0
    %707 = vmatpush.msra.mxu0 %v386
    %708 = vmatpush.msra.mxu0 %v382
    %709 = vmatpush.msra.mxu0 %v378
    %710 = vmatpush.msra.mxu0 %v374
    %711 = vmatpush.msra.mxu0 %v370
    %712 = vmatpush.msra.mxu0 %v366
    %713 = vmatpush.msra.mxu0 %v362
    %714 = vmatpush.msra.mxu0 %v358
    %715 = vmatpush.msra.mxu0 %v354
    %716 = vmatpush.msra.mxu0 %v350
    %717 = vmatpush.msra.mxu0 %v346
    %718 = vmatpush.msra.mxu0 %v342
    %719 = vmatpush.msra.mxu0 %v338
    %720 = vmatpush.msra.mxu0 %v334
    %721 = vmatpush.msra.mxu0 %v330
    %722 = vmatpush.msra.mxu0 %v326
    %723 = vmatmul.f32.gmra.mxu0 %v684
    %v724 = vpop.f32.mrf.mxu0
    %v725 = vadd.f32 0.0, %v724
    %726 = vdwg.mxu0
    %727 = vmatpush.msra.mxu0 %v387
    %728 = vmatpush.msra.mxu0 %v383
    %729 = vmatpush.msra.mxu0 %v379
    %730 = vmatpush.msra.mxu0 %v375
    %731 = vmatpush.msra.mxu0 %v371
    %732 = vmatpush.msra.mxu0 %v367
    %733 = vmatpush.msra.mxu0 %v363
    %734 = vmatpush.msra.mxu0 %v359
    %735 = vmatpush.msra.mxu0 %v355
    %736 = vmatpush.msra.mxu0 %v351
    %737 = vmatpush.msra.mxu0 %v347
    %738 = vmatpush.msra.mxu0 %v343
    %739 = vmatpush.msra.mxu0 %v339
    %740 = vmatpush.msra.mxu0 %v335
    %741 = vmatpush.msra.mxu0 %v331
    %742 = vmatpush.msra.mxu0 %v327
    %743 = vmatmul.f32.gmra.mxu0 %v684
    %v744 = vpop.f32.mrf.mxu0
    %v745 = vadd.f32 0.0, %v744
    %746 = vdwg.mxu0
    %747 = vmatpush.msra.mxu0 %v388
    %748 = vmatpush.msra.mxu0 %v384
    %749 = vmatpush.msra.mxu0 %v380
    %750 = vmatpush.msra.mxu0 %v376
    %751 = vmatpush.msra.mxu0 %v372
    %752 = vmatpush.msra.mxu0 %v368
    %753 = vmatpush.msra.mxu0 %v364
    %754 = vmatpush.msra.mxu0 %v360
    %755 = vmatpush.msra.mxu0 %v356
    %756 = vmatpush.msra.mxu0 %v352
    %757 = vmatpush.msra.mxu0 %v348
    %758 = vmatpush.msra.mxu0 %v344
    %759 = vmatpush.msra.mxu0 %v340
    %760 = vmatpush.msra.mxu0 %v336
    %761 = vmatpush.msra.mxu0 %v332
    %762 = vmatpush.msra.mxu0 %v328
    %763 = vmatmul.f32.gmra.mxu0 %v684
    %v764 = vpop.f32.mrf.mxu0
    %v765 = vadd.f32 0.0, %v764
    %766 = vdwg.mxu0
    %v767 = vadd.f32 %v185, %v705
    %v768 = vadd.f32 %v226, %v725
    %v769 = vadd.f32 %v267, %v745
    %v770 = vadd.f32 %v308, %v765
    %v771 = vxor.u32 %v767, 2147483648
    %v772 = vxor.u32 %v768, 2147483648
    %v773 = vxor.u32 %v769, 2147483648
    %v774 = vmul.f32 %v771, 1.442695
    %v775 = vpow.pop %v774
    %v776 = vmul.f32 %v772, 1.442695
    %v777 = vpow.pop %v776
    %v778 = vmul.f32 %v773, 1.442695
    %v779 = vpow.pop %v778
    %v780 = vadd.f32 %v775, 1.0
    %v781 = vadd.f32 %v777, 1.0
    %v782 = vadd.f32 %v779, 1.0
    %v783 = vrcp.pop %v780
    %v784 = vmul.f32 %v780, %v783
    %v785 = vsub.f32 1.0, %v784
    %v786 = vmul.f32 %v783, %v785
    %v787 = vadd.f32 %v783, %v786
    %vm788 = vweird.f32 %v780
    %vm789 = vweird.f32 %v783
    %vm790 = vmor %vm788, %vm789
    %v791 = vsel %vm790, %v783, %v787
    %v792 = vand.u32 2147483647, %v780
    %vm793 = vcmp.eq.f32.partialorder %v792, 8.507059e+37
    %v794 = vand.u32 %v780, 2147483648
    %v795 = vor.u32 1.1754944e-38, %v794
    %v796 = vsel %vm793, %v795, %v791
    %v797 = vmul.f32 1.0, %v796
    %v798 = vrcp.pop %v781
    %v799 = vmul.f32 %v781, %v798
    %v800 = vsub.f32 1.0, %v799
    %v801 = vmul.f32 %v798, %v800
    %v802 = vadd.f32 %v798, %v801
    %vm803 = vweird.f32 %v781
    %vm804 = vweird.f32 %v798
    %vm805 = vmor %vm803, %vm804
    %v806 = vsel %vm805, %v798, %v802
    %v807 = vand.u32 2147483647, %v781
    %vm808 = vcmp.eq.f32.partialorder %v807, 8.507059e+37
    %v809 = vand.u32 %v781, 2147483648
    %v810 = vor.u32 1.1754944e-38, %v809
    %v811 = vsel %vm808, %v810, %v806
    %v812 = vmul.f32 1.0, %v811
    %v813 = vrcp.pop %v782
    %v814 = vmul.f32 %v782, %v813
    %v815 = vsub.f32 1.0, %v814
    %v816 = vmul.f32 %v813, %v815
    %v817 = vadd.f32 %v813, %v816
    %vm818 = vweird.f32 %v782
    %vm819 = vweird.f32 %v813
    %vm820 = vmor %vm818, %vm819
    %v821 = vsel %vm820, %v813, %v817
    %v822 = vand.u32 2147483647, %v782
    %vm823 = vcmp.eq.f32.partialorder %v822, 8.507059e+37
    %v824 = vand.u32 %v782, 2147483648
    %v825 = vor.u32 1.1754944e-38, %v824
    %v826 = vsel %vm823, %v825, %v821
    %v827 = vmul.f32 1.0, %v826
    %v828 = vtanh.pop %v770
    %v829 = vmul.f32 %v812, %v682
    %v830 = vmul.f32 %v797, %v828
    %v831 = vadd.f32 %v829, %v830
    %v832 = vtanh.pop %v831
    %v833 = vmul.f32 %v827, %v832
    %834 = vst [vmem:[#allocation2 + $0x20] sm:$0xff] %v833
    %835 = vst [vmem:[#allocation2 + $0x58] sm:$0xff] %v833
    %836 = vmatpush.msra.mxu0 %v385
    %837 = vmatpush.msra.mxu0 %v381
    %838 = vmatpush.msra.mxu0 %v377
    %839 = vmatpush.msra.mxu0 %v373
    %840 = vmatpush.msra.mxu0 %v369
    %841 = vmatpush.msra.mxu0 %v365
    %842 = vmatpush.msra.mxu0 %v361
    %843 = vmatpush.msra.mxu0 %v357
    %844 = vmatpush.msra.mxu0 %v353
    %845 = vmatpush.msra.mxu0 %v349
    %846 = vmatpush.msra.mxu0 %v345
    %847 = vmatpush.msra.mxu0 %v341
    %848 = vmatpush.msra.mxu0 %v337
    %849 = vmatpush.msra.mxu0 %v333
    %850 = vmatpush.msra.mxu0 %v329
    %851 = vmatpush.msra.mxu0 %v325
    %852 = vmatmul.f32.gmra.mxu0 %v833
    %v853 = vpop.f32.mrf.mxu0
    %v854 = vadd.f32 0.0, %v853
    %855 = vdwg.mxu0
    %856 = vmatpush.msra.mxu0 %v386
    %857 = vmatpush.msra.mxu0 %v382
    %858 = vmatpush.msra.mxu0 %v378
    %859 = vmatpush.msra.mxu0 %v374
    %860 = vmatpush.msra.mxu0 %v370
    %861 = vmatpush.msra.mxu0 %v366
    %862 = vmatpush.msra.mxu0 %v362
    %863 = vmatpush.msra.mxu0 %v358
    %864 = vmatpush.msra.mxu0 %v354
    %865 = vmatpush.msra.mxu0 %v350
    %866 = vmatpush.msra.mxu0 %v346
    %867 = vmatpush.msra.mxu0 %v342
    %868 = vmatpush.msra.mxu0 %v338
    %869 = vmatpush.msra.mxu0 %v334
    %870 = vmatpush.msra.mxu0 %v330
    %871 = vmatpush.msra.mxu0 %v326
    %872 = vmatmul.f32.gmra.mxu0 %v833
    %v873 = vpop.f32.mrf.mxu0
    %v874 = vadd.f32 0.0, %v873
    %875 = vdwg.mxu0
    %876 = vmatpush.msra.mxu0 %v387
    %877 = vmatpush.msra.mxu0 %v383
    %878 = vmatpush.msra.mxu0 %v379
    %879 = vmatpush.msra.mxu0 %v375
    %880 = vmatpush.msra.mxu0 %v371
    %881 = vmatpush.msra.mxu0 %v367
    %882 = vmatpush.msra.mxu0 %v363
    %883 = vmatpush.msra.mxu0 %v359
    %884 = vmatpush.msra.mxu0 %v355
    %885 = vmatpush.msra.mxu0 %v351
    %886 = vmatpush.msra.mxu0 %v347
    %887 = vmatpush.msra.mxu0 %v343
    %888 = vmatpush.msra.mxu0 %v339
    %889 = vmatpush.msra.mxu0 %v335
    %890 = vmatpush.msra.mxu0 %v331
    %891 = vmatpush.msra.mxu0 %v327
    %892 = vmatmul.f32.gmra.mxu0 %v833
    %v893 = vpop.f32.mrf.mxu0
    %v894 = vadd.f32 0.0, %v893
    %895 = vdwg.mxu0
    %896 = vmatpush.msra.mxu0 %v388
    %897 = vmatpush.msra.mxu0 %v384
    %898 = vmatpush.msra.mxu0 %v380
    %899 = vmatpush.msra.mxu0 %v376
    %900 = vmatpush.msra.mxu0 %v372
    %901 = vmatpush.msra.mxu0 %v368
    %902 = vmatpush.msra.mxu0 %v364
    %903 = vmatpush.msra.mxu0 %v360
    %904 = vmatpush.msra.mxu0 %v356
    %905 = vmatpush.msra.mxu0 %v352
    %906 = vmatpush.msra.mxu0 %v348
    %907 = vmatpush.msra.mxu0 %v344
    %908 = vmatpush.msra.mxu0 %v340
    %909 = vmatpush.msra.mxu0 %v336
    %910 = vmatpush.msra.mxu0 %v332
    %911 = vmatpush.msra.mxu0 %v328
    %912 = vmatmul.f32.gmra.mxu0 %v833
    %v913 = vpop.f32.mrf.mxu0
    %v914 = vadd.f32 0.0, %v913
    %915 = vdwg.mxu0
    %v916 = vadd.f32 %v188, %v854
    %v917 = vadd.f32 %v229, %v874
    %v918 = vadd.f32 %v270, %v894
    %v919 = vadd.f32 %v311, %v914
    %v920 = vxor.u32 %v916, 2147483648
    %v921 = vxor.u32 %v917, 2147483648
    %v922 = vxor.u32 %v918, 2147483648
    %v923 = vmul.f32 %v920, 1.442695
    %v924 = vpow.pop %v923
    %v925 = vmul.f32 %v921, 1.442695
    %v926 = vpow.pop %v925
    %v927 = vmul.f32 %v922, 1.442695
    %v928 = vpow.pop %v927
    %v929 = vadd.f32 %v924, 1.0
    %v930 = vadd.f32 %v926, 1.0
    %v931 = vadd.f32 %v928, 1.0
    %v932 = vrcp.pop %v929
    %v933 = vmul.f32 %v929, %v932
    %v934 = vsub.f32 1.0, %v933
    %v935 = vmul.f32 %v932, %v934
    %v936 = vadd.f32 %v932, %v935
    %vm937 = vweird.f32 %v929
    %vm938 = vweird.f32 %v932
    %vm939 = vmor %vm937, %vm938
    %v940 = vsel %vm939, %v932, %v936
    %v941 = vand.u32 2147483647, %v929
    %vm942 = vcmp.eq.f32.partialorder %v941, 8.507059e+37
    %v943 = vand.u32 %v929, 2147483648
    %v944 = vor.u32 1.1754944e-38, %v943
    %v945 = vsel %vm942, %v944, %v940
    %v946 = vmul.f32 1.0, %v945
    %v947 = vrcp.pop %v930
    %v948 = vmul.f32 %v930, %v947
    %v949 = vsub.f32 1.0, %v948
    %v950 = vmul.f32 %v947, %v949
    %v951 = vadd.f32 %v947, %v950
    %vm952 = vweird.f32 %v930
    %vm953 = vweird.f32 %v947
    %vm954 = vmor %vm952, %vm953
    %v955 = vsel %vm954, %v947, %v951
    %v956 = vand.u32 2147483647, %v930
    %vm957 = vcmp.eq.f32.partialorder %v956, 8.507059e+37
    %v958 = vand.u32 %v930, 2147483648
    %v959 = vor.u32 1.1754944e-38, %v958
    %v960 = vsel %vm957, %v959, %v955
    %v961 = vmul.f32 1.0, %v960
    %v962 = vrcp.pop %v931
    %v963 = vmul.f32 %v931, %v962
    %v964 = vsub.f32 1.0, %v963
    %v965 = vmul.f32 %v962, %v964
    %v966 = vadd.f32 %v962, %v965
    %vm967 = vweird.f32 %v931
    %vm968 = vweird.f32 %v962
    %vm969 = vmor %vm967, %vm968
    %v970 = vsel %vm969, %v962, %v966
    %v971 = vand.u32 2147483647, %v931
    %vm972 = vcmp.eq.f32.partialorder %v971, 8.507059e+37
    %v973 = vand.u32 %v931, 2147483648
    %v974 = vor.u32 1.1754944e-38, %v973
    %v975 = vsel %vm972, %v974, %v970
    %v976 = vmul.f32 1.0, %v975
    %v977 = vtanh.pop %v919
    %v978 = vmul.f32 %v961, %v831
    %v979 = vmul.f32 %v946, %v977
    %v980 = vadd.f32 %v978, %v979
    %v981 = vtanh.pop %v980
    %v982 = vmul.f32 %v976, %v981
    %983 = vst [vmem:[#allocation2 + $0x30] sm:$0xff] %v982
    %984 = vst [vmem:[#allocation2 + $0x48] sm:$0xff] %v982
    %985 = vmatpush.msra.mxu0 %v385
    %986 = vmatpush.msra.mxu0 %v381
    %987 = vmatpush.msra.mxu0 %v377
    %988 = vmatpush.msra.mxu0 %v373
    %989 = vmatpush.msra.mxu0 %v369
    %990 = vmatpush.msra.mxu0 %v365
    %991 = vmatpush.msra.mxu0 %v361
    %992 = vmatpush.msra.mxu0 %v357
    %993 = vmatpush.msra.mxu0 %v353
    %994 = vmatpush.msra.mxu0 %v349
    %995 = vmatpush.msra.mxu0 %v345
    %996 = vmatpush.msra.mxu0 %v341
    %997 = vmatpush.msra.mxu0 %v337
    %998 = vmatpush.msra.mxu0 %v333
    %999 = vmatpush.msra.mxu0 %v329
    %1000 = vmatpush.msra.mxu0 %v325
    %1001 = vmatmul.f32.gmra.mxu0 %v982
    %v1002 = vpop.f32.mrf.mxu0
    %v1003 = vadd.f32 0.0, %v1002
    %1004 = vdwg.mxu0
    %1005 = vmatpush.msra.mxu0 %v386
    %1006 = vmatpush.msra.mxu0 %v382
    %1007 = vmatpush.msra.mxu0 %v378
    %1008 = vmatpush.msra.mxu0 %v374
    %1009 = vmatpush.msra.mxu0 %v370
    %1010 = vmatpush.msra.mxu0 %v366
    %1011 = vmatpush.msra.mxu0 %v362
    %1012 = vmatpush.msra.mxu0 %v358
    %1013 = vmatpush.msra.mxu0 %v354
    %1014 = vmatpush.msra.mxu0 %v350
    %1015 = vmatpush.msra.mxu0 %v346
    %1016 = vmatpush.msra.mxu0 %v342
    %1017 = vmatpush.msra.mxu0 %v338
    %1018 = vmatpush.msra.mxu0 %v334
    %1019 = vmatpush.msra.mxu0 %v330
    %1020 = vmatpush.msra.mxu0 %v326
    %1021 = vmatmul.f32.gmra.mxu0 %v982
    %v1022 = vpop.f32.mrf.mxu0
    %v1023 = vadd.f32 0.0, %v1022
    %1024 = vdwg.mxu0
    %1025 = vmatpush.msra.mxu0 %v387
    %1026 = vmatpush.msra.mxu0 %v383
    %1027 = vmatpush.msra.mxu0 %v379
    %1028 = vmatpush.msra.mxu0 %v375
    %1029 = vmatpush.msra.mxu0 %v371
    %1030 = vmatpush.msra.mxu0 %v367
    %1031 = vmatpush.msra.mxu0 %v363
    %1032 = vmatpush.msra.mxu0 %v359
    %1033 = vmatpush.msra.mxu0 %v355
    %1034 = vmatpush.msra.mxu0 %v351
    %1035 = vmatpush.msra.mxu0 %v347
    %1036 = vmatpush.msra.mxu0 %v343
    %1037 = vmatpush.msra.mxu0 %v339
    %1038 = vmatpush.msra.mxu0 %v335
    %1039 = vmatpush.msra.mxu0 %v331
    %1040 = vmatpush.msra.mxu0 %v327
    %1041 = vmatmul.f32.gmra.mxu0 %v982
    %v1042 = vpop.f32.mrf.mxu0
    %v1043 = vadd.f32 0.0, %v1042
    %1044 = vdwg.mxu0
    %1045 = vmatpush.msra.mxu0 %v388
    %1046 = vmatpush.msra.mxu0 %v384
    %1047 = vmatpush.msra.mxu0 %v380
    %1048 = vmatpush.msra.mxu0 %v376
    %1049 = vmatpush.msra.mxu0 %v372
    %1050 = vmatpush.msra.mxu0 %v368
    %1051 = vmatpush.msra.mxu0 %v364
    %1052 = vmatpush.msra.mxu0 %v360
    %1053 = vmatpush.msra.mxu0 %v356
    %1054 = vmatpush.msra.mxu0 %v352
    %1055 = vmatpush.msra.mxu0 %v348
    %1056 = vmatpush.msra.mxu0 %v344
    %1057 = vmatpush.msra.mxu0 %v340
    %1058 = vmatpush.msra.mxu0 %v336
    %1059 = vmatpush.msra.mxu0 %v332
    %1060 = vmatpush.msra.mxu0 %v328
    %1061 = vmatmul.f32.gmra.mxu0 %v982
    %v1062 = vpop.f32.mrf.mxu0
    %v1063 = vadd.f32 0.0, %v1062
    %1064 = vdwg.mxu0
    %v1065 = vadd.f32 %v191, %v1003
    %v1066 = vadd.f32 %v232, %v1023
    %v1067 = vadd.f32 %v273, %v1043
    %v1068 = vadd.f32 %v314, %v1063
    %v1069 = vxor.u32 %v1065, 2147483648
    %v1070 = vxor.u32 %v1066, 2147483648
    %v1071 = vxor.u32 %v1067, 2147483648
    %v1072 = vmul.f32 %v1069, 1.442695
    %v1073 = vpow.pop %v1072
    %v1074 = vmul.f32 %v1070, 1.442695
    %v1075 = vpow.pop %v1074
    %v1076 = vmul.f32 %v1071, 1.442695
    %v1077 = vpow.pop %v1076
    %v1078 = vadd.f32 %v1073, 1.0
    %v1079 = vadd.f32 %v1075, 1.0
    %v1080 = vadd.f32 %v1077, 1.0
    %v1081 = vrcp.pop %v1078
    %v1082 = vmul.f32 %v1078, %v1081
    %v1083 = vsub.f32 1.0, %v1082
    %v1084 = vmul.f32 %v1081, %v1083
    %v1085 = vadd.f32 %v1081, %v1084
    %vm1086 = vweird.f32 %v1078
    %vm1087 = vweird.f32 %v1081
    %vm1088 = vmor %vm1086, %vm1087
    %v1089 = vsel %vm1088, %v1081, %v1085
    %v1090 = vand.u32 2147483647, %v1078
    %vm1091 = vcmp.eq.f32.partialorder %v1090, 8.507059e+37
    %v1092 = vand.u32 %v1078, 2147483648
    %v1093 = vor.u32 1.1754944e-38, %v1092
    %v1094 = vsel %vm1091, %v1093, %v1089
    %v1095 = vmul.f32 1.0, %v1094
    %v1096 = vrcp.pop %v1079
    %v1097 = vmul.f32 %v1079, %v1096
    %v1098 = vsub.f32 1.0, %v1097
    %v1099 = vmul.f32 %v1096, %v1098
    %v1100 = vadd.f32 %v1096, %v1099
    %vm1101 = vweird.f32 %v1079
    %vm1102 = vweird.f32 %v1096
    %vm1103 = vmor %vm1101, %vm1102
    %v1104 = vsel %vm1103, %v1096, %v1100
    %v1105 = vand.u32 2147483647, %v1079
    %vm1106 = vcmp.eq.f32.partialorder %v1105, 8.507059e+37
    %v1107 = vand.u32 %v1079, 2147483648
    %v1108 = vor.u32 1.1754944e-38, %v1107
    %v1109 = vsel %vm1106, %v1108, %v1104
    %v1110 = vmul.f32 1.0, %v1109
    %v1111 = vrcp.pop %v1080
    %v1112 = vmul.f32 %v1080, %v1111
    %v1113 = vsub.f32 1.0, %v1112
    %v1114 = vmul.f32 %v1111, %v1113
    %v1115 = vadd.f32 %v1111, %v1114
    %vm1116 = vweird.f32 %v1080
    %vm1117 = vweird.f32 %v1111
    %vm1118 = vmor %vm1116, %vm1117
    %v1119 = vsel %vm1118, %v1111, %v1115
    %v1120 = vand.u32 2147483647, %v1080
    %vm1121 = vcmp.eq.f32.partialorder %v1120, 8.507059e+37
    %v1122 = vand.u32 %v1080, 2147483648
    %v1123 = vor.u32 1.1754944e-38, %v1122
    %v1124 = vsel %vm1121, %v1123, %v1119
    %v1125 = vmul.f32 1.0, %v1124
    %v1126 = vtanh.pop %v1068
    %v1127 = vmul.f32 %v1110, %v980
    %v1128 = vmul.f32 %v1095, %v1126
    %v1129 = vadd.f32 %v1127, %v1128
    %v1130 = vtanh.pop %v1129
    %v1131 = vmul.f32 %v1125, %v1130
    %1132 = vst [vmem:[#allocation2 + $0x40] sm:$0xff] %v1131
    %1133 = vst [vmem:[#allocation2 + $0x38] sm:$0xff] %v1131
    %1134 = vmatpush.msra.mxu0 %v385
    %1135 = vmatpush.msra.mxu0 %v381
    %1136 = vmatpush.msra.mxu0 %v377
    %1137 = vmatpush.msra.mxu0 %v373
    %1138 = vmatpush.msra.mxu0 %v369
    %1139 = vmatpush.msra.mxu0 %v365
    %1140 = vmatpush.msra.mxu0 %v361
    %1141 = vmatpush.msra.mxu0 %v357
    %1142 = vmatpush.msra.mxu0 %v353
    %1143 = vmatpush.msra.mxu0 %v349
    %1144 = vmatpush.msra.mxu0 %v345
    %1145 = vmatpush.msra.mxu0 %v341
    %1146 = vmatpush.msra.mxu0 %v337
    %1147 = vmatpush.msra.mxu0 %v333
    %1148 = vmatpush.msra.mxu0 %v329
    %1149 = vmatpush.msra.mxu0 %v325
    %1150 = vmatmul.f32.gmra.mxu0 %v1131
    %v1151 = vpop.f32.mrf.mxu0
    %v1152 = vadd.f32 0.0, %v1151
    %1153 = vdwg.mxu0
    %1154 = vmatpush.msra.mxu0 %v386
    %1155 = vmatpush.msra.mxu0 %v382
    %1156 = vmatpush.msra.mxu0 %v378
    %1157 = vmatpush.msra.mxu0 %v374
    %1158 = vmatpush.msra.mxu0 %v370
    %1159 = vmatpush.msra.mxu0 %v366
    %1160 = vmatpush.msra.mxu0 %v362
    %1161 = vmatpush.msra.mxu0 %v358
    %1162 = vmatpush.msra.mxu0 %v354
    %1163 = vmatpush.msra.mxu0 %v350
    %1164 = vmatpush.msra.mxu0 %v346
    %1165 = vmatpush.msra.mxu0 %v342
    %1166 = vmatpush.msra.mxu0 %v338
    %1167 = vmatpush.msra.mxu0 %v334
    %1168 = vmatpush.msra.mxu0 %v330
    %1169 = vmatpush.msra.mxu0 %v326
    %1170 = vmatmul.f32.gmra.mxu0 %v1131
    %v1171 = vpop.f32.mrf.mxu0
    %v1172 = vadd.f32 0.0, %v1171
    %1173 = vdwg.mxu0
    %1174 = vmatpush.msra.mxu0 %v387
    %1175 = vmatpush.msra.mxu0 %v383
    %1176 = vmatpush.msra.mxu0 %v379
    %1177 = vmatpush.msra.mxu0 %v375
    %1178 = vmatpush.msra.mxu0 %v371
    %1179 = vmatpush.msra.mxu0 %v367
    %1180 = vmatpush.msra.mxu0 %v363
    %1181 = vmatpush.msra.mxu0 %v359
    %1182 = vmatpush.msra.mxu0 %v355
    %1183 = vmatpush.msra.mxu0 %v351
    %1184 = vmatpush.msra.mxu0 %v347
    %1185 = vmatpush.msra.mxu0 %v343
    %1186 = vmatpush.msra.mxu0 %v339
    %1187 = vmatpush.msra.mxu0 %v335
    %1188 = vmatpush.msra.mxu0 %v331
    %1189 = vmatpush.msra.mxu0 %v327
    %1190 = vmatmul.f32.gmra.mxu0 %v1131
    %v1191 = vpop.f32.mrf.mxu0
    %v1192 = vadd.f32 0.0, %v1191
    %1193 = vdwg.mxu0
    %1194 = vmatpush.msra.mxu0 %v388
    %1195 = vmatpush.msra.mxu0 %v384
    %1196 = vmatpush.msra.mxu0 %v380
    %1197 = vmatpush.msra.mxu0 %v376
    %1198 = vmatpush.msra.mxu0 %v372
    %1199 = vmatpush.msra.mxu0 %v368
    %1200 = vmatpush.msra.mxu0 %v364
    %1201 = vmatpush.msra.mxu0 %v360
    %1202 = vmatpush.msra.mxu0 %v356
    %1203 = vmatpush.msra.mxu0 %v352
    %1204 = vmatpush.msra.mxu0 %v348
    %1205 = vmatpush.msra.mxu0 %v344
    %1206 = vmatpush.msra.mxu0 %v340
    %1207 = vmatpush.msra.mxu0 %v336
    %1208 = vmatpush.msra.mxu0 %v332
    %1209 = vmatpush.msra.mxu0 %v328
    %1210 = vmatmul.f32.gmra.mxu0 %v1131
    %v1211 = vpop.f32.mrf.mxu0
    %v1212 = vadd.f32 0.0, %v1211
    %1213 = vdwg.mxu0
    %v1214 = vadd.f32 %v194, %v1152
    %v1215 = vadd.f32 %v235, %v1172
    %v1216 = vadd.f32 %v276, %v1192
    %v1217 = vadd.f32 %v317, %v1212
    %v1218 = vxor.u32 %v1214, 2147483648
    %v1219 = vxor.u32 %v1215, 2147483648
    %v1220 = vxor.u32 %v1216, 2147483648
    %v1221 = vmul.f32 %v1218, 1.442695
    %v1222 = vpow.pop %v1221
    %v1223 = vmul.f32 %v1219, 1.442695
    %v1224 = vpow.pop %v1223
    %v1225 = vmul.f32 %v1220, 1.442695
    %v1226 = vpow.pop %v1225
    %v1227 = vadd.f32 %v1222, 1.0
    %v1228 = vadd.f32 %v1224, 1.0
    %v1229 = vadd.f32 %v1226, 1.0
    %v1230 = vrcp.pop %v1227
    %v1231 = vmul.f32 %v1227, %v1230
    %v1232 = vsub.f32 1.0, %v1231
    %v1233 = vmul.f32 %v1230, %v1232
    %v1234 = vadd.f32 %v1230, %v1233
    %vm1235 = vweird.f32 %v1227
    %vm1236 = vweird.f32 %v1230
    %vm1237 = vmor %vm1235, %vm1236
    %v1238 = vsel %vm1237, %v1230, %v1234
    %v1239 = vand.u32 2147483647, %v1227
    %vm1240 = vcmp.eq.f32.partialorder %v1239, 8.507059e+37
    %v1241 = vand.u32 %v1227, 2147483648
    %v1242 = vor.u32 1.1754944e-38, %v1241
    %v1243 = vsel %vm1240, %v1242, %v1238
    %v1244 = vmul.f32 1.0, %v1243
    %v1245 = vrcp.pop %v1228
    %v1246 = vmul.f32 %v1228, %v1245
    %v1247 = vsub.f32 1.0, %v1246
    %v1248 = vmul.f32 %v1245, %v1247
    %v1249 = vadd.f32 %v1245, %v1248
    %vm1250 = vweird.f32 %v1228
    %vm1251 = vweird.f32 %v1245
    %vm1252 = vmor %vm1250, %vm1251
    %v1253 = vsel %vm1252, %v1245, %v1249
    %v1254 = vand.u32 2147483647, %v1228
    %vm1255 = vcmp.eq.f32.partialorder %v1254, 8.507059e+37
    %v1256 = vand.u32 %v1228, 2147483648
    %v1257 = vor.u32 1.1754944e-38, %v1256
    %v1258 = vsel %vm1255, %v1257, %v1253
    %v1259 = vmul.f32 1.0, %v1258
    %v1260 = vrcp.pop %v1229
    %v1261 = vmul.f32 %v1229, %v1260
    %v1262 = vsub.f32 1.0, %v1261
    %v1263 = vmul.f32 %v1260, %v1262
    %v1264 = vadd.f32 %v1260, %v1263
    %vm1265 = vweird.f32 %v1229
    %vm1266 = vweird.f32 %v1260
    %vm1267 = vmor %vm1265, %vm1266
    %v1268 = vsel %vm1267, %v1260, %v1264
    %v1269 = vand.u32 2147483647, %v1229
    %vm1270 = vcmp.eq.f32.partialorder %v1269, 8.507059e+37
    %v1271 = vand.u32 %v1229, 2147483648
    %v1272 = vor.u32 1.1754944e-38, %v1271
    %v1273 = vsel %vm1270, %v1272, %v1268
    %v1274 = vmul.f32 1.0, %v1273
    %v1275 = vtanh.pop %v1217
    %v1276 = vmul.f32 %v1259, %v1129
    %v1277 = vmul.f32 %v1244, %v1275
    %v1278 = vadd.f32 %v1276, %v1277
    %v1279 = vtanh.pop %v1278
    %v1280 = vmul.f32 %v1274, %v1279
    %1281 = vst [vmem:[#allocation2 + $0x50] sm:$0xff] %v1280
    %1282 = vst [vmem:[#allocation2 + $0x28] sm:$0xff] %v1280
    %1283 = vmatpush.msra.mxu0 %v385
    %1284 = vmatpush.msra.mxu0 %v381
    %1285 = vmatpush.msra.mxu0 %v377
    %1286 = vmatpush.msra.mxu0 %v373
    %1287 = vmatpush.msra.mxu0 %v369
    %1288 = vmatpush.msra.mxu0 %v365
    %1289 = vmatpush.msra.mxu0 %v361
    %1290 = vmatpush.msra.mxu0 %v357
    %1291 = vmatpush.msra.mxu0 %v353
    %1292 = vmatpush.msra.mxu0 %v349
    %1293 = vmatpush.msra.mxu0 %v345
    %1294 = vmatpush.msra.mxu0 %v341
    %1295 = vmatpush.msra.mxu0 %v337
    %1296 = vmatpush.msra.mxu0 %v333
    %1297 = vmatpush.msra.mxu0 %v329
    %1298 = vmatpush.msra.mxu0 %v325
    %1299 = vmatmul.f32.gmra.mxu0 %v1280
    %v1300 = vpop.f32.mrf.mxu0
    %v1301 = vadd.f32 0.0, %v1300
    %1302 = vdwg.mxu0
    %1303 = vmatpush.msra.mxu0 %v386
    %1304 = vmatpush.msra.mxu0 %v382
    %1305 = vmatpush.msra.mxu0 %v378
    %1306 = vmatpush.msra.mxu0 %v374
    %1307 = vmatpush.msra.mxu0 %v370
    %1308 = vmatpush.msra.mxu0 %v366
    %1309 = vmatpush.msra.mxu0 %v362
    %1310 = vmatpush.msra.mxu0 %v358
    %1311 = vmatpush.msra.mxu0 %v354
    %1312 = vmatpush.msra.mxu0 %v350
    %1313 = vmatpush.msra.mxu0 %v346
    %1314 = vmatpush.msra.mxu0 %v342
    %1315 = vmatpush.msra.mxu0 %v338
    %1316 = vmatpush.msra.mxu0 %v334
    %1317 = vmatpush.msra.mxu0 %v330
    %1318 = vmatpush.msra.mxu0 %v326
    %1319 = vmatmul.f32.gmra.mxu0 %v1280
    %v1320 = vpop.f32.mrf.mxu0
    %v1321 = vadd.f32 0.0, %v1320
    %1322 = vdwg.mxu0
    %1323 = vmatpush.msra.mxu0 %v387
    %1324 = vmatpush.msra.mxu0 %v383
    %1325 = vmatpush.msra.mxu0 %v379
    %1326 = vmatpush.msra.mxu0 %v375
    %1327 = vmatpush.msra.mxu0 %v371
    %1328 = vmatpush.msra.mxu0 %v367
    %1329 = vmatpush.msra.mxu0 %v363
    %1330 = vmatpush.msra.mxu0 %v359
    %1331 = vmatpush.msra.mxu0 %v355
    %1332 = vmatpush.msra.mxu0 %v351
    %1333 = vmatpush.msra.mxu0 %v347
    %1334 = vmatpush.msra.mxu0 %v343
    %1335 = vmatpush.msra.mxu0 %v339
    %1336 = vmatpush.msra.mxu0 %v335
    %1337 = vmatpush.msra.mxu0 %v331
    %1338 = vmatpush.msra.mxu0 %v327
    %1339 = vmatmul.f32.gmra.mxu0 %v1280
    %v1340 = vpop.f32.mrf.mxu0
    %v1341 = vadd.f32 0.0, %v1340
    %1342 = vdwg.mxu0
    %1343 = vmatpush.msra.mxu0 %v388
    %1344 = vmatpush.msra.mxu0 %v384
    %1345 = vmatpush.msra.mxu0 %v380
    %1346 = vmatpush.msra.mxu0 %v376
    %1347 = vmatpush.msra.mxu0 %v372
    %1348 = vmatpush.msra.mxu0 %v368
    %1349 = vmatpush.msra.mxu0 %v364
    %1350 = vmatpush.msra.mxu0 %v360
    %1351 = vmatpush.msra.mxu0 %v356
    %1352 = vmatpush.msra.mxu0 %v352
    %1353 = vmatpush.msra.mxu0 %v348
    %1354 = vmatpush.msra.mxu0 %v344
    %1355 = vmatpush.msra.mxu0 %v340
    %1356 = vmatpush.msra.mxu0 %v336
    %1357 = vmatpush.msra.mxu0 %v332
    %1358 = vmatpush.msra.mxu0 %v328
    %1359 = vmatmul.f32.gmra.mxu0 %v1280
    %v1360 = vpop.f32.mrf.mxu0
    %v1361 = vadd.f32 0.0, %v1360
    %1362 = vdwg.mxu0
    %v1363 = vadd.f32 %v197, %v1301
    %v1364 = vadd.f32 %v238, %v1321
    %v1365 = vadd.f32 %v279, %v1341
    %v1366 = vadd.f32 %v320, %v1361
    %v1367 = vxor.u32 %v1363, 2147483648
    %v1368 = vxor.u32 %v1364, 2147483648
    %v1369 = vxor.u32 %v1365, 2147483648
    %v1370 = vmul.f32 %v1367, 1.442695
    %v1371 = vpow.pop %v1370
    %v1372 = vmul.f32 %v1368, 1.442695
    %v1373 = vpow.pop %v1372
    %v1374 = vmul.f32 %v1369, 1.442695
    %v1375 = vpow.pop %v1374
    %v1376 = vadd.f32 %v1371, 1.0
    %v1377 = vadd.f32 %v1373, 1.0
    %v1378 = vadd.f32 %v1375, 1.0
    %v1379 = vrcp.pop %v1376
    %v1380 = vmul.f32 %v1376, %v1379
    %v1381 = vsub.f32 1.0, %v1380
    %v1382 = vmul.f32 %v1379, %v1381
    %v1383 = vadd.f32 %v1379, %v1382
    %vm1384 = vweird.f32 %v1376
    %vm1385 = vweird.f32 %v1379
    %vm1386 = vmor %vm1384, %vm1385
    %v1387 = vsel %vm1386, %v1379, %v1383
    %v1388 = vand.u32 2147483647, %v1376
    %vm1389 = vcmp.eq.f32.partialorder %v1388, 8.507059e+37
    %v1390 = vand.u32 %v1376, 2147483648
    %v1391 = vor.u32 1.1754944e-38, %v1390
    %v1392 = vsel %vm1389, %v1391, %v1387
    %v1393 = vmul.f32 1.0, %v1392
    %v1394 = vrcp.pop %v1377
    %v1395 = vmul.f32 %v1377, %v1394
    %v1396 = vsub.f32 1.0, %v1395
    %v1397 = vmul.f32 %v1394, %v1396
    %v1398 = vadd.f32 %v1394, %v1397
    %vm1399 = vweird.f32 %v1377
    %vm1400 = vweird.f32 %v1394
    %vm1401 = vmor %vm1399, %vm1400
    %v1402 = vsel %vm1401, %v1394, %v1398
    %v1403 = vand.u32 2147483647, %v1377
    %vm1404 = vcmp.eq.f32.partialorder %v1403, 8.507059e+37
    %v1405 = vand.u32 %v1377, 2147483648
    %v1406 = vor.u32 1.1754944e-38, %v1405
    %v1407 = vsel %vm1404, %v1406, %v1402
    %v1408 = vmul.f32 1.0, %v1407
    %v1409 = vrcp.pop %v1378
    %v1410 = vmul.f32 %v1378, %v1409
    %v1411 = vsub.f32 1.0, %v1410
    %v1412 = vmul.f32 %v1409, %v1411
    %v1413 = vadd.f32 %v1409, %v1412
    %vm1414 = vweird.f32 %v1378
    %vm1415 = vweird.f32 %v1409
    %vm1416 = vmor %vm1414, %vm1415
    %v1417 = vsel %vm1416, %v1409, %v1413
    %v1418 = vand.u32 2147483647, %v1378
    %vm1419 = vcmp.eq.f32.partialorder %v1418, 8.507059e+37
    %v1420 = vand.u32 %v1378, 2147483648
    %v1421 = vor.u32 1.1754944e-38, %v1420
    %v1422 = vsel %vm1419, %v1421, %v1417
    %v1423 = vmul.f32 1.0, %v1422
    %v1424 = vtanh.pop %v1366
    %v1425 = vmul.f32 %v1408, %v1278
    %v1426 = vmul.f32 %v1393, %v1424
    %v1427 = vadd.f32 %v1425, %v1426
    %v1428 = vtanh.pop %v1427
    %v1429 = vmul.f32 %v1423, %v1428
    %1430 = vst [vmem:[#allocation2 + $0x60] sm:$0xff] %v1429
    %1431 = vst [vmem:[#allocation2 + $0x18] sm:$0xff] %v1429
    %1432 = vmatpush.msra.mxu0 %v385
    %1433 = vmatpush.msra.mxu0 %v381
    %1434 = vmatpush.msra.mxu0 %v377
    %1435 = vmatpush.msra.mxu0 %v373
    %1436 = vmatpush.msra.mxu0 %v369
    %1437 = vmatpush.msra.mxu0 %v365
    %1438 = vmatpush.msra.mxu0 %v361
    %1439 = vmatpush.msra.mxu0 %v357
    %1440 = vmatpush.msra.mxu0 %v353
    %1441 = vmatpush.msra.mxu0 %v349
    %1442 = vmatpush.msra.mxu0 %v345
    %1443 = vmatpush.msra.mxu0 %v341
    %1444 = vmatpush.msra.mxu0 %v337
    %1445 = vmatpush.msra.mxu0 %v333
    %1446 = vmatpush.msra.mxu0 %v329
    %1447 = vmatpush.msra.mxu0 %v325
    %1448 = vmatmul.f32.gmra.mxu0 %v1429
    %v1449 = vpop.f32.mrf.mxu0
    %v1450 = vadd.f32 0.0, %v1449
    %1451 = vdwg.mxu0
    %1452 = vmatpush.msra.mxu0 %v386
    %1453 = vmatpush.msra.mxu0 %v382
    %1454 = vmatpush.msra.mxu0 %v378
    %1455 = vmatpush.msra.mxu0 %v374
    %1456 = vmatpush.msra.mxu0 %v370
    %1457 = vmatpush.msra.mxu0 %v366
    %1458 = vmatpush.msra.mxu0 %v362
    %1459 = vmatpush.msra.mxu0 %v358
    %1460 = vmatpush.msra.mxu0 %v354
    %1461 = vmatpush.msra.mxu0 %v350
    %1462 = vmatpush.msra.mxu0 %v346
    %1463 = vmatpush.msra.mxu0 %v342
    %1464 = vmatpush.msra.mxu0 %v338
    %1465 = vmatpush.msra.mxu0 %v334
    %1466 = vmatpush.msra.mxu0 %v330
    %1467 = vmatpush.msra.mxu0 %v326
    %1468 = vmatmul.f32.gmra.mxu0 %v1429
    %v1469 = vpop.f32.mrf.mxu0
    %v1470 = vadd.f32 0.0, %v1469
    %1471 = vdwg.mxu0
    %1472 = vmatpush.msra.mxu0 %v387
    %1473 = vmatpush.msra.mxu0 %v383
    %1474 = vmatpush.msra.mxu0 %v379
    %1475 = vmatpush.msra.mxu0 %v375
    %1476 = vmatpush.msra.mxu0 %v371
    %1477 = vmatpush.msra.mxu0 %v367
    %1478 = vmatpush.msra.mxu0 %v363
    %1479 = vmatpush.msra.mxu0 %v359
    %1480 = vmatpush.msra.mxu0 %v355
    %1481 = vmatpush.msra.mxu0 %v351
    %1482 = vmatpush.msra.mxu0 %v347
    %1483 = vmatpush.msra.mxu0 %v343
    %1484 = vmatpush.msra.mxu0 %v339
    %1485 = vmatpush.msra.mxu0 %v335
    %1486 = vmatpush.msra.mxu0 %v331
    %1487 = vmatpush.msra.mxu0 %v327
    %1488 = vmatmul.f32.gmra.mxu0 %v1429
    %v1489 = vpop.f32.mrf.mxu0
    %v1490 = vadd.f32 0.0, %v1489
    %1491 = vdwg.mxu0
    %1492 = vmatpush.msra.mxu0 %v388
    %1493 = vmatpush.msra.mxu0 %v384
    %1494 = vmatpush.msra.mxu0 %v380
    %1495 = vmatpush.msra.mxu0 %v376
    %1496 = vmatpush.msra.mxu0 %v372
    %1497 = vmatpush.msra.mxu0 %v368
    %1498 = vmatpush.msra.mxu0 %v364
    %1499 = vmatpush.msra.mxu0 %v360
    %1500 = vmatpush.msra.mxu0 %v356
    %1501 = vmatpush.msra.mxu0 %v352
    %1502 = vmatpush.msra.mxu0 %v348
    %1503 = vmatpush.msra.mxu0 %v344
    %1504 = vmatpush.msra.mxu0 %v340
    %1505 = vmatpush.msra.mxu0 %v336
    %1506 = vmatpush.msra.mxu0 %v332
    %1507 = vmatpush.msra.mxu0 %v328
    %1508 = vmatmul.f32.gmra.mxu0 %v1429
    %v1509 = vpop.f32.mrf.mxu0
    %v1510 = vadd.f32 0.0, %v1509
    %1511 = vdwg.mxu0
    %v1512 = vadd.f32 %v200, %v1450
    %v1513 = vadd.f32 %v241, %v1470
    %v1514 = vadd.f32 %v282, %v1490
    %v1515 = vadd.f32 %v323, %v1510
    %v1516 = vxor.u32 %v1512, 2147483648
    %v1517 = vxor.u32 %v1513, 2147483648
    %v1518 = vxor.u32 %v1514, 2147483648
    %v1519 = vmul.f32 %v1516, 1.442695
    %v1520 = vpow.pop %v1519
    %v1521 = vmul.f32 %v1517, 1.442695
    %v1522 = vpow.pop %v1521
    %v1523 = vmul.f32 %v1518, 1.442695
    %v1524 = vpow.pop %v1523
    %v1525 = vadd.f32 %v1520, 1.0
    %v1526 = vadd.f32 %v1522, 1.0
    %v1527 = vadd.f32 %v1524, 1.0
    %v1528 = vrcp.pop %v1525
    %v1529 = vmul.f32 %v1525, %v1528
    %v1530 = vsub.f32 1.0, %v1529
    %v1531 = vmul.f32 %v1528, %v1530
    %v1532 = vadd.f32 %v1528, %v1531
    %vm1533 = vweird.f32 %v1525
    %vm1534 = vweird.f32 %v1528
    %vm1535 = vmor %vm1533, %vm1534
    %v1536 = vsel %vm1535, %v1528, %v1532
    %v1537 = vand.u32 2147483647, %v1525
    %vm1538 = vcmp.eq.f32.partialorder %v1537, 8.507059e+37
    %v1539 = vand.u32 %v1525, 2147483648
    %v1540 = vor.u32 1.1754944e-38, %v1539
    %v1541 = vsel %vm1538, %v1540, %v1536
    %v1542 = vmul.f32 1.0, %v1541
    %v1543 = vrcp.pop %v1526
    %v1544 = vmul.f32 %v1526, %v1543
    %v1545 = vsub.f32 1.0, %v1544
    %v1546 = vmul.f32 %v1543, %v1545
    %v1547 = vadd.f32 %v1543, %v1546
    %vm1548 = vweird.f32 %v1526
    %vm1549 = vweird.f32 %v1543
    %vm1550 = vmor %vm1548, %vm1549
    %v1551 = vsel %vm1550, %v1543, %v1547
    %v1552 = vand.u32 2147483647, %v1526
    %vm1553 = vcmp.eq.f32.partialorder %v1552, 8.507059e+37
    %v1554 = vand.u32 %v1526, 2147483648
    %v1555 = vor.u32 1.1754944e-38, %v1554
    %v1556 = vsel %vm1553, %v1555, %v1551
    %v1557 = vmul.f32 1.0, %v1556
    %v1558 = vrcp.pop %v1527
    %v1559 = vmul.f32 %v1527, %v1558
    %v1560 = vsub.f32 1.0, %v1559
    %v1561 = vmul.f32 %v1558, %v1560
    %v1562 = vadd.f32 %v1558, %v1561
    %vm1563 = vweird.f32 %v1527
    %vm1564 = vweird.f32 %v1558
    %vm1565 = vmor %vm1563, %vm1564
    %v1566 = vsel %vm1565, %v1558, %v1562
    %v1567 = vand.u32 2147483647, %v1527
    %vm1568 = vcmp.eq.f32.partialorder %v1567, 8.507059e+37
    %v1569 = vand.u32 %v1527, 2147483648
    %v1570 = vor.u32 1.1754944e-38, %v1569
    %v1571 = vsel %vm1568, %v1570, %v1566
    %v1572 = vmul.f32 1.0, %v1571
    %v1573 = vtanh.pop %v1515
    %v1574 = vmul.f32 %v1557, %v1427
    %v1575 = vmul.f32 %v1542, %v1573
    %v1576 = vadd.f32 %v1574, %v1575
    %v1577 = vtanh.pop %v1576
    %v1578 = vmul.f32 %v1572, %v1577
    %1579 = vst [vmem:[#allocation2 + $0x70] sm:$0xff] %v1578
    %1580 = vst [vmem:[#allocation2 + $0x8] sm:$0xff] %v1578
    %v1581 = vld [vmem:[#allocation2] sm:$0xff]
    %v1582 = vld [vmem:[#allocation2 + $0x8] sm:$0xff]
    %v1583 = vld [vmem:[#allocation2 + $0x10] sm:$0xff]
    %v1584 = vld [vmem:[#allocation2 + $0x18] sm:$0xff]
    %v1585 = vld [vmem:[#allocation2 + $0x20] sm:$0xff]
    %v1586 = vld [vmem:[#allocation2 + $0x28] sm:$0xff]
    %v1587 = vld [vmem:[#allocation2 + $0x30] sm:$0xff]
    %v1588 = vld [vmem:[#allocation2 + $0x38] sm:$0xff]
    %v1589 = vld [vmem:[#allocation2 + $0x40] sm:$0xff]
    %v1590 = vld [vmem:[#allocation2 + $0x48] sm:$0xff]
    %v1591 = vld [vmem:[#allocation2 + $0x50] sm:$0xff]
    %v1592 = vld [vmem:[#allocation2 + $0x58] sm:$0xff]
    %v1593 = vld [vmem:[#allocation2 + $0x60] sm:$0xff]
    %v1594 = vld [vmem:[#allocation2 + $0x68] sm:$0xff]
    %v1595 = vld [vmem:[#allocation2 + $0x70] sm:$0xff]
    %v1596 = vld [vmem:[#allocation2 + $0x78] sm:$0xff]
    %v1597 = vld [vmem:[#allocation6] sm:$0xff]
    %v1598 = vld [vmem:[#allocation6 + $0x8] sm:$0xff]
    %v1599 = vld [vmem:[#allocation6 + $0x10] sm:$0xff]
    %v1600 = vld [vmem:[#allocation6 + $0x18] sm:$0xff]
    %v1601 = vld [vmem:[#allocation6 + $0x20] sm:$0xff]
    %v1602 = vld [vmem:[#allocation6 + $0x28] sm:$0xff]
    %v1603 = vld [vmem:[#allocation6 + $0x30] sm:$0xff]
    %v1604 = vld [vmem:[#allocation6 + $0x38] sm:$0xff]
    %v1605 = vld [vmem:[#allocation6 + $0x40] sm:$0xff]
    %v1606 = vld [vmem:[#allocation6 + $0x48] sm:$0xff]
    %v1607 = vld [vmem:[#allocation6 + $0x50] sm:$0xff]
    %v1608 = vld [vmem:[#allocation6 + $0x58] sm:$0xff]
    %v1609 = vld [vmem:[#allocation6 + $0x60] sm:$0xff]
    %v1610 = vld [vmem:[#allocation6 + $0x68] sm:$0xff]
    %v1611 = vld [vmem:[#allocation6 + $0x70] sm:$0xff]
    %v1612 = vld [vmem:[#allocation6 + $0x78] sm:$0xff]
    %v1613 = vld [vmem:[#allocation6 + $0x80] sm:$0xff]
    %v1614 = vld [vmem:[#allocation6 + $0x88] sm:$0xff]
    %v1615 = vld [vmem:[#allocation6 + $0x90] sm:$0xff]
    %v1616 = vld [vmem:[#allocation6 + $0x98] sm:$0xff]
    %v1617 = vld [vmem:[#allocation6 + $0xa0] sm:$0xff]
    %v1618 = vld [vmem:[#allocation6 + $0xa8] sm:$0xff]
    %v1619 = vld [vmem:[#allocation6 + $0xb0] sm:$0xff]
    %v1620 = vld [vmem:[#allocation6 + $0xb8] sm:$0xff]
    %v1621 = vld [vmem:[#allocation6 + $0xc0] sm:$0xff]
    %v1622 = vld [vmem:[#allocation6 + $0xc8] sm:$0xff]
    %v1623 = vld [vmem:[#allocation6 + $0xd0] sm:$0xff]
    %v1624 = vld [vmem:[#allocation6 + $0xd8] sm:$0xff]
    %v1625 = vld [vmem:[#allocation6 + $0xe0] sm:$0xff]
    %v1626 = vld [vmem:[#allocation6 + $0xe8] sm:$0xff]
    %v1627 = vld [vmem:[#allocation6 + $0xf0] sm:$0xff]
    %v1628 = vld [vmem:[#allocation6 + $0xf8] sm:$0xff]
    %v1629 = vld [vmem:[#allocation6 + $0x100] sm:$0xff]
    %v1630 = vld [vmem:[#allocation6 + $0x108] sm:$0xff]
    %v1631 = vld [vmem:[#allocation6 + $0x110] sm:$0xff]
    %v1632 = vld [vmem:[#allocation6 + $0x118] sm:$0xff]
    %v1633 = vld [vmem:[#allocation6 + $0x120] sm:$0xff]
    %v1634 = vld [vmem:[#allocation6 + $0x128] sm:$0xff]
    %v1635 = vld [vmem:[#allocation6 + $0x130] sm:$0xff]
    %v1636 = vld [vmem:[#allocation6 + $0x138] sm:$0xff]
    %v1637 = vld [vmem:[#allocation6 + $0x140] sm:$0xff]
    %v1638 = vld [vmem:[#allocation6 + $0x148] sm:$0xff]
    %v1639 = vld [vmem:[#allocation6 + $0x150] sm:$0xff]
    %v1640 = vld [vmem:[#allocation6 + $0x158] sm:$0xff]
    %v1641 = vld [vmem:[#allocation6 + $0x160] sm:$0xff]
    %v1642 = vld [vmem:[#allocation6 + $0x168] sm:$0xff]
    %v1643 = vld [vmem:[#allocation6 + $0x170] sm:$0xff]
    %v1644 = vld [vmem:[#allocation6 + $0x178] sm:$0xff]
    %v1645 = vld [vmem:[#allocation6 + $0x180] sm:$0xff]
    %v1646 = vld [vmem:[#allocation6 + $0x188] sm:$0xff]
    %v1647 = vld [vmem:[#allocation6 + $0x190] sm:$0xff]
    %v1648 = vld [vmem:[#allocation6 + $0x198] sm:$0xff]
    %v1649 = vld [vmem:[#allocation6 + $0x1a0] sm:$0xff]
    %v1650 = vld [vmem:[#allocation6 + $0x1a8] sm:$0xff]
    %v1651 = vld [vmem:[#allocation6 + $0x1b0] sm:$0xff]
    %v1652 = vld [vmem:[#allocation6 + $0x1b8] sm:$0xff]
    %v1653 = vld [vmem:[#allocation6 + $0x1c0] sm:$0xff]
    %v1654 = vld [vmem:[#allocation6 + $0x1c8] sm:$0xff]
    %v1655 = vld [vmem:[#allocation6 + $0x1d0] sm:$0xff]
    %v1656 = vld [vmem:[#allocation6 + $0x1d8] sm:$0xff]
    %v1657 = vld [vmem:[#allocation6 + $0x1e0] sm:$0xff]
    %v1658 = vld [vmem:[#allocation6 + $0x1e8] sm:$0xff]
    %v1659 = vld [vmem:[#allocation6 + $0x1f0] sm:$0xff]
    %v1660 = vld [vmem:[#allocation6 + $0x1f8] sm:$0xff]
    %v1661 = vld [vmem:[#allocation6 + $0x200] sm:$0xff]
    %v1662 = vld [vmem:[#allocation6 + $0x208] sm:$0xff]
    %v1663 = vld [vmem:[#allocation6 + $0x210] sm:$0xff]
    %v1664 = vld [vmem:[#allocation6 + $0x218] sm:$0xff]
    %v1665 = vld [vmem:[#allocation6 + $0x220] sm:$0xff]
    %v1666 = vld [vmem:[#allocation6 + $0x228] sm:$0xff]
    %v1667 = vld [vmem:[#allocation6 + $0x230] sm:$0xff]
    %v1668 = vld [vmem:[#allocation6 + $0x238] sm:$0xff]
    %v1669 = vld [vmem:[#allocation6 + $0x240] sm:$0xff]
    %v1670 = vld [vmem:[#allocation6 + $0x248] sm:$0xff]
    %v1671 = vld [vmem:[#allocation6 + $0x250] sm:$0xff]
    %v1672 = vld [vmem:[#allocation6 + $0x258] sm:$0xff]
    %v1673 = vld [vmem:[#allocation6 + $0x260] sm:$0xff]
    %v1674 = vld [vmem:[#allocation6 + $0x268] sm:$0xff]
    %v1675 = vld [vmem:[#allocation6 + $0x270] sm:$0xff]
    %v1676 = vld [vmem:[#allocation6 + $0x278] sm:$0xff]
    %v1677 = vld [vmem:[#allocation6 + $0x280] sm:$0xff]
    %v1678 = vld [vmem:[#allocation6 + $0x288] sm:$0xff]
    %v1679 = vld [vmem:[#allocation6 + $0x290] sm:$0xff]
    %v1680 = vld [vmem:[#allocation6 + $0x298] sm:$0xff]
    %v1681 = vld [vmem:[#allocation6 + $0x2a0] sm:$0xff]
    %v1682 = vld [vmem:[#allocation6 + $0x2a8] sm:$0xff]
    %v1683 = vld [vmem:[#allocation6 + $0x2b0] sm:$0xff]
    %v1684 = vld [vmem:[#allocation6 + $0x2b8] sm:$0xff]
    %v1685 = vld [vmem:[#allocation6 + $0x2c0] sm:$0xff]
    %v1686 = vld [vmem:[#allocation6 + $0x2c8] sm:$0xff]
    %v1687 = vld [vmem:[#allocation6 + $0x2d0] sm:$0xff]
    %v1688 = vld [vmem:[#allocation6 + $0x2d8] sm:$0xff]
    %v1689 = vld [vmem:[#allocation6 + $0x2e0] sm:$0xff]
    %v1690 = vld [vmem:[#allocation6 + $0x2e8] sm:$0xff]
    %v1691 = vld [vmem:[#allocation6 + $0x2f0] sm:$0xff]
    %v1692 = vld [vmem:[#allocation6 + $0x2f8] sm:$0xff]
    %v1693 = vld [vmem:[#allocation6 + $0x300] sm:$0xff]
    %v1694 = vld [vmem:[#allocation6 + $0x308] sm:$0xff]
    %v1695 = vld [vmem:[#allocation6 + $0x310] sm:$0xff]
    %v1696 = vld [vmem:[#allocation6 + $0x318] sm:$0xff]
    %v1697 = vld [vmem:[#allocation6 + $0x320] sm:$0xff]
    %v1698 = vld [vmem:[#allocation6 + $0x328] sm:$0xff]
    %v1699 = vld [vmem:[#allocation6 + $0x330] sm:$0xff]
    %v1700 = vld [vmem:[#allocation6 + $0x338] sm:$0xff]
    %v1701 = vld [vmem:[#allocation6 + $0x340] sm:$0xff]
    %v1702 = vld [vmem:[#allocation6 + $0x348] sm:$0xff]
    %v1703 = vld [vmem:[#allocation6 + $0x350] sm:$0xff]
    %v1704 = vld [vmem:[#allocation6 + $0x358] sm:$0xff]
    %v1705 = vld [vmem:[#allocation6 + $0x360] sm:$0xff]
    %v1706 = vld [vmem:[#allocation6 + $0x368] sm:$0xff]
    %v1707 = vld [vmem:[#allocation6 + $0x370] sm:$0xff]
    %v1708 = vld [vmem:[#allocation6 + $0x378] sm:$0xff]
    %v1709 = vld [vmem:[#allocation6 + $0x380] sm:$0xff]
    %v1710 = vld [vmem:[#allocation6 + $0x388] sm:$0xff]
    %v1711 = vld [vmem:[#allocation6 + $0x390] sm:$0xff]
    %v1712 = vld [vmem:[#allocation6 + $0x398] sm:$0xff]
    %v1713 = vld [vmem:[#allocation6 + $0x3a0] sm:$0xff]
    %v1714 = vld [vmem:[#allocation6 + $0x3a8] sm:$0xff]
    %v1715 = vld [vmem:[#allocation6 + $0x3b0] sm:$0xff]
    %v1716 = vld [vmem:[#allocation6 + $0x3b8] sm:$0xff]
    %v1717 = vld [vmem:[#allocation6 + $0x3c0] sm:$0xff]
    %v1718 = vld [vmem:[#allocation6 + $0x3c8] sm:$0xff]
    %v1719 = vld [vmem:[#allocation6 + $0x3d0] sm:$0xff]
    %v1720 = vld [vmem:[#allocation6 + $0x3d8] sm:$0xff]
    %v1721 = vld [vmem:[#allocation6 + $0x3e0] sm:$0xff]
    %v1722 = vld [vmem:[#allocation6 + $0x3e8] sm:$0xff]
    %v1723 = vld [vmem:[#allocation6 + $0x3f0] sm:$0xff]
    %v1724 = vld [vmem:[#allocation6 + $0x3f8] sm:$0xff]
    %v1725 = vld [vmem:[%s6] sm:$0xf]
    %v1727 = vperm.slane %v1725, 0
    %v1728 = vperm.slane %v1725, 1
    %v1729 = vperm.slane %v1725, 2
    %v1730 = vperm.slane %v1725, 3
    %1735 = vmatpush.msra.mxu0 %v1657
    %1736 = vmatpush.msra.mxu0 %v1653
    %1737 = vmatpush.msra.mxu0 %v1649
    %1738 = vmatpush.msra.mxu0 %v1645
    %1739 = vmatpush.msra.mxu0 %v1641
    %1740 = vmatpush.msra.mxu0 %v1637
    %1741 = vmatpush.msra.mxu0 %v1633
    %1742 = vmatpush.msra.mxu0 %v1629
    %1743 = vmatpush.msra.mxu0 %v1625
    %1744 = vmatpush.msra.mxu0 %v1621
    %1745 = vmatpush.msra.mxu0 %v1617
    %1746 = vmatpush.msra.mxu0 %v1613
    %1747 = vmatpush.msra.mxu0 %v1609
    %1748 = vmatpush.msra.mxu0 %v1605
    %1749 = vmatpush.msra.mxu0 %v1601
    %1750 = vmatpush.msra.mxu0 %v1597
    %1751 = vmatmul.f32.gmra.mxu0 %v1581
    %v1752 = vpop.f32.mrf.mxu0
    %v1753 = vadd.f32 %v1727, %v1752
    %1754 = vmatmul.f32.gmra.mxu0 %v1583
    %v1755 = vpop.f32.mrf.mxu0
    %v1756 = vadd.f32 %v1727, %v1755
    %1757 = vmatmul.f32.gmra.mxu0 %v1585
    %v1758 = vpop.f32.mrf.mxu0
    %v1759 = vadd.f32 %v1727, %v1758
    %1760 = vmatmul.f32.gmra.mxu0 %v1587
    %v1761 = vpop.f32.mrf.mxu0
    %v1762 = vadd.f32 %v1727, %v1761
    %1763 = vmatmul.f32.gmra.mxu0 %v1589
    %v1764 = vpop.f32.mrf.mxu0
    %v1765 = vadd.f32 %v1727, %v1764
    %1766 = vmatmul.f32.gmra.mxu0 %v1591
    %v1767 = vpop.f32.mrf.mxu0
    %v1768 = vadd.f32 %v1727, %v1767
    %1769 = vmatmul.f32.gmra.mxu0 %v1593
    %v1770 = vpop.f32.mrf.mxu0
    %v1771 = vadd.f32 %v1727, %v1770
    %1772 = vmatmul.f32.gmra.mxu0 %v1595
    %v1773 = vpop.f32.mrf.mxu0
    %v1774 = vadd.f32 %v1727, %v1773
    %1775 = vdwg.mxu0
    %1776 = vmatpush.msra.mxu0 %v1721
    %1777 = vmatpush.msra.mxu0 %v1717
    %1778 = vmatpush.msra.mxu0 %v1713
    %1779 = vmatpush.msra.mxu0 %v1709
    %1780 = vmatpush.msra.mxu0 %v1705
    %1781 = vmatpush.msra.mxu0 %v1701
    %1782 = vmatpush.msra.mxu0 %v1697
    %1783 = vmatpush.msra.mxu0 %v1693
    %1784 = vmatpush.msra.mxu0 %v1689
    %1785 = vmatpush.msra.mxu0 %v1685
    %1786 = vmatpush.msra.mxu0 %v1681
    %1787 = vmatpush.msra.mxu0 %v1677
    %1788 = vmatpush.msra.mxu0 %v1673
    %1789 = vmatpush.msra.mxu0 %v1669
    %1790 = vmatpush.msra.mxu0 %v1665
    %1791 = vmatpush.msra.mxu0 %v1661
    %1792 = vmatmul.f32.gmra.mxu0 %v1582
    %v1793 = vpop.f32.mrf.mxu0
    %v1794 = vadd.f32 %v1753, %v1793
    %1795 = vmatmul.f32.gmra.mxu0 %v1584
    %v1796 = vpop.f32.mrf.mxu0
    %v1797 = vadd.f32 %v1756, %v1796
    %1798 = vmatmul.f32.gmra.mxu0 %v1586
    %v1799 = vpop.f32.mrf.mxu0
    %v1800 = vadd.f32 %v1759, %v1799
    %1801 = vmatmul.f32.gmra.mxu0 %v1588
    %v1802 = vpop.f32.mrf.mxu0
    %v1803 = vadd.f32 %v1762, %v1802
    %1804 = vmatmul.f32.gmra.mxu0 %v1590
    %v1805 = vpop.f32.mrf.mxu0
    %v1806 = vadd.f32 %v1765, %v1805
    %1807 = vmatmul.f32.gmra.mxu0 %v1592
    %v1808 = vpop.f32.mrf.mxu0
    %v1809 = vadd.f32 %v1768, %v1808
    %1810 = vmatmul.f32.gmra.mxu0 %v1594
    %v1811 = vpop.f32.mrf.mxu0
    %v1812 = vadd.f32 %v1771, %v1811
    %1813 = vmatmul.f32.gmra.mxu0 %v1596
    %v1814 = vpop.f32.mrf.mxu0
    %v1815 = vadd.f32 %v1774, %v1814
    %1816 = vdwg.mxu0
    %1817 = vmatpush.msra.mxu0 %v1658
    %1818 = vmatpush.msra.mxu0 %v1654
    %1819 = vmatpush.msra.mxu0 %v1650
    %1820 = vmatpush.msra.mxu0 %v1646
    %1821 = vmatpush.msra.mxu0 %v1642
    %1822 = vmatpush.msra.mxu0 %v1638
    %1823 = vmatpush.msra.mxu0 %v1634
    %1824 = vmatpush.msra.mxu0 %v1630
    %1825 = vmatpush.msra.mxu0 %v1626
    %1826 = vmatpush.msra.mxu0 %v1622
    %1827 = vmatpush.msra.mxu0 %v1618
    %1828 = vmatpush.msra.mxu0 %v1614
    %1829 = vmatpush.msra.mxu0 %v1610
    %1830 = vmatpush.msra.mxu0 %v1606
    %1831 = vmatpush.msra.mxu0 %v1602
    %1832 = vmatpush.msra.mxu0 %v1598
    %1833 = vmatmul.f32.gmra.mxu0 %v1581
    %v1834 = vpop.f32.mrf.mxu0
    %v1835 = vadd.f32 %v1728, %v1834
    %1836 = vmatmul.f32.gmra.mxu0 %v1583
    %v1837 = vpop.f32.mrf.mxu0
    %v1838 = vadd.f32 %v1728, %v1837
    %1839 = vmatmul.f32.gmra.mxu0 %v1585
    %v1840 = vpop.f32.mrf.mxu0
    %v1841 = vadd.f32 %v1728, %v1840
    %1842 = vmatmul.f32.gmra.mxu0 %v1587
    %v1843 = vpop.f32.mrf.mxu0
    %v1844 = vadd.f32 %v1728, %v1843
    %1845 = vmatmul.f32.gmra.mxu0 %v1589
    %v1846 = vpop.f32.mrf.mxu0
    %v1847 = vadd.f32 %v1728, %v1846
    %1848 = vmatmul.f32.gmra.mxu0 %v1591
    %v1849 = vpop.f32.mrf.mxu0
    %v1850 = vadd.f32 %v1728, %v1849
    %1851 = vmatmul.f32.gmra.mxu0 %v1593
    %v1852 = vpop.f32.mrf.mxu0
    %v1853 = vadd.f32 %v1728, %v1852
    %1854 = vmatmul.f32.gmra.mxu0 %v1595
    %v1855 = vpop.f32.mrf.mxu0
    %v1856 = vadd.f32 %v1728, %v1855
    %1857 = vdwg.mxu0
    %1858 = vmatpush.msra.mxu0 %v1722
    %1859 = vmatpush.msra.mxu0 %v1718
    %1860 = vmatpush.msra.mxu0 %v1714
    %1861 = vmatpush.msra.mxu0 %v1710
    %1862 = vmatpush.msra.mxu0 %v1706
    %1863 = vmatpush.msra.mxu0 %v1702
    %1864 = vmatpush.msra.mxu0 %v1698
    %1865 = vmatpush.msra.mxu0 %v1694
    %1866 = vmatpush.msra.mxu0 %v1690
    %1867 = vmatpush.msra.mxu0 %v1686
    %1868 = vmatpush.msra.mxu0 %v1682
    %1869 = vmatpush.msra.mxu0 %v1678
    %1870 = vmatpush.msra.mxu0 %v1674
    %1871 = vmatpush.msra.mxu0 %v1670
    %1872 = vmatpush.msra.mxu0 %v1666
    %1873 = vmatpush.msra.mxu0 %v1662
    %1874 = vmatmul.f32.gmra.mxu0 %v1582
    %v1875 = vpop.f32.mrf.mxu0
    %v1876 = vadd.f32 %v1835, %v1875
    %1877 = vmatmul.f32.gmra.mxu0 %v1584
    %v1878 = vpop.f32.mrf.mxu0
    %v1879 = vadd.f32 %v1838, %v1878
    %1880 = vmatmul.f32.gmra.mxu0 %v1586
    %v1881 = vpop.f32.mrf.mxu0
    %v1882 = vadd.f32 %v1841, %v1881
    %1883 = vmatmul.f32.gmra.mxu0 %v1588
    %v1884 = vpop.f32.mrf.mxu0
    %v1885 = vadd.f32 %v1844, %v1884
    %1886 = vmatmul.f32.gmra.mxu0 %v1590
    %v1887 = vpop.f32.mrf.mxu0
    %v1888 = vadd.f32 %v1847, %v1887
    %1889 = vmatmul.f32.gmra.mxu0 %v1592
    %v1890 = vpop.f32.mrf.mxu0
    %v1891 = vadd.f32 %v1850, %v1890
    %1892 = vmatmul.f32.gmra.mxu0 %v1594
    %v1893 = vpop.f32.mrf.mxu0
    %v1894 = vadd.f32 %v1853, %v1893
    %1895 = vmatmul.f32.gmra.mxu0 %v1596
    %v1896 = vpop.f32.mrf.mxu0
    %v1897 = vadd.f32 %v1856, %v1896
    %1898 = vdwg.mxu0
    %1899 = vmatpush.msra.mxu0 %v1659
    %1900 = vmatpush.msra.mxu0 %v1655
    %1901 = vmatpush.msra.mxu0 %v1651
    %1902 = vmatpush.msra.mxu0 %v1647
    %1903 = vmatpush.msra.mxu0 %v1643
    %1904 = vmatpush.msra.mxu0 %v1639
    %1905 = vmatpush.msra.mxu0 %v1635
    %1906 = vmatpush.msra.mxu0 %v1631
    %1907 = vmatpush.msra.mxu0 %v1627
    %1908 = vmatpush.msra.mxu0 %v1623
    %1909 = vmatpush.msra.mxu0 %v1619
    %1910 = vmatpush.msra.mxu0 %v1615
    %1911 = vmatpush.msra.mxu0 %v1611
    %1912 = vmatpush.msra.mxu0 %v1607
    %1913 = vmatpush.msra.mxu0 %v1603
    %1914 = vmatpush.msra.mxu0 %v1599
    %1915 = vmatmul.f32.gmra.mxu0 %v1581
    %v1916 = vpop.f32.mrf.mxu0
    %v1917 = vadd.f32 %v1729, %v1916
    %1918 = vmatmul.f32.gmra.mxu0 %v1583
    %v1919 = vpop.f32.mrf.mxu0
    %v1920 = vadd.f32 %v1729, %v1919
    %1921 = vmatmul.f32.gmra.mxu0 %v1585
    %v1922 = vpop.f32.mrf.mxu0
    %v1923 = vadd.f32 %v1729, %v1922
    %1924 = vmatmul.f32.gmra.mxu0 %v1587
    %v1925 = vpop.f32.mrf.mxu0
    %v1926 = vadd.f32 %v1729, %v1925
    %1927 = vmatmul.f32.gmra.mxu0 %v1589
    %v1928 = vpop.f32.mrf.mxu0
    %v1929 = vadd.f32 %v1729, %v1928
    %1930 = vmatmul.f32.gmra.mxu0 %v1591
    %v1931 = vpop.f32.mrf.mxu0
    %v1932 = vadd.f32 %v1729, %v1931
    %1933 = vmatmul.f32.gmra.mxu0 %v1593
    %v1934 = vpop.f32.mrf.mxu0
    %v1935 = vadd.f32 %v1729, %v1934
    %1936 = vmatmul.f32.gmra.mxu0 %v1595
    %v1937 = vpop.f32.mrf.mxu0
    %v1938 = vadd.f32 %v1729, %v1937
    %1939 = vdwg.mxu0
    %1940 = vmatpush.msra.mxu0 %v1723
    %1941 = vmatpush.msra.mxu0 %v1719
    %1942 = vmatpush.msra.mxu0 %v1715
    %1943 = vmatpush.msra.mxu0 %v1711
    %1944 = vmatpush.msra.mxu0 %v1707
    %1945 = vmatpush.msra.mxu0 %v1703
    %1946 = vmatpush.msra.mxu0 %v1699
    %1947 = vmatpush.msra.mxu0 %v1695
    %1948 = vmatpush.msra.mxu0 %v1691
    %1949 = vmatpush.msra.mxu0 %v1687
    %1950 = vmatpush.msra.mxu0 %v1683
    %1951 = vmatpush.msra.mxu0 %v1679
    %1952 = vmatpush.msra.mxu0 %v1675
    %1953 = vmatpush.msra.mxu0 %v1671
    %1954 = vmatpush.msra.mxu0 %v1667
    %1955 = vmatpush.msra.mxu0 %v1663
    %1956 = vmatmul.f32.gmra.mxu0 %v1582
    %v1957 = vpop.f32.mrf.mxu0
    %v1958 = vadd.f32 %v1917, %v1957
    %1959 = vmatmul.f32.gmra.mxu0 %v1584
    %v1960 = vpop.f32.mrf.mxu0
    %v1961 = vadd.f32 %v1920, %v1960
    %1962 = vmatmul.f32.gmra.mxu0 %v1586
    %v1963 = vpop.f32.mrf.mxu0
    %v1964 = vadd.f32 %v1923, %v1963
    %1965 = vmatmul.f32.gmra.mxu0 %v1588
    %v1966 = vpop.f32.mrf.mxu0
    %v1967 = vadd.f32 %v1926, %v1966
    %1968 = vmatmul.f32.gmra.mxu0 %v1590
    %v1969 = vpop.f32.mrf.mxu0
    %v1970 = vadd.f32 %v1929, %v1969
    %1971 = vmatmul.f32.gmra.mxu0 %v1592
    %v1972 = vpop.f32.mrf.mxu0
    %v1973 = vadd.f32 %v1932, %v1972
    %1974 = vmatmul.f32.gmra.mxu0 %v1594
    %v1975 = vpop.f32.mrf.mxu0
    %v1976 = vadd.f32 %v1935, %v1975
    %1977 = vmatmul.f32.gmra.mxu0 %v1596
    %v1978 = vpop.f32.mrf.mxu0
    %v1979 = vadd.f32 %v1938, %v1978
    %1980 = vdwg.mxu0
    %1981 = vmatpush.msra.mxu0 %v1660
    %1982 = vmatpush.msra.mxu0 %v1656
    %1983 = vmatpush.msra.mxu0 %v1652
    %1984 = vmatpush.msra.mxu0 %v1648
    %1985 = vmatpush.msra.mxu0 %v1644
    %1986 = vmatpush.msra.mxu0 %v1640
    %1987 = vmatpush.msra.mxu0 %v1636
    %1988 = vmatpush.msra.mxu0 %v1632
    %1989 = vmatpush.msra.mxu0 %v1628
    %1990 = vmatpush.msra.mxu0 %v1624
    %1991 = vmatpush.msra.mxu0 %v1620
    %1992 = vmatpush.msra.mxu0 %v1616
    %1993 = vmatpush.msra.mxu0 %v1612
    %1994 = vmatpush.msra.mxu0 %v1608
    %1995 = vmatpush.msra.mxu0 %v1604
    %1996 = vmatpush.msra.mxu0 %v1600
    %1997 = vmatmul.f32.gmra.mxu0 %v1581
    %v1998 = vpop.f32.mrf.mxu0
    %v1999 = vadd.f32 %v1730, %v1998
    %2000 = vmatmul.f32.gmra.mxu0 %v1583
    %v2001 = vpop.f32.mrf.mxu0
    %v2002 = vadd.f32 %v1730, %v2001
    %2003 = vmatmul.f32.gmra.mxu0 %v1585
    %v2004 = vpop.f32.mrf.mxu0
    %v2005 = vadd.f32 %v1730, %v2004
    %2006 = vmatmul.f32.gmra.mxu0 %v1587
    %v2007 = vpop.f32.mrf.mxu0
    %v2008 = vadd.f32 %v1730, %v2007
    %2009 = vmatmul.f32.gmra.mxu0 %v1589
    %v2010 = vpop.f32.mrf.mxu0
    %v2011 = vadd.f32 %v1730, %v2010
    %2012 = vmatmul.f32.gmra.mxu0 %v1591
    %v2013 = vpop.f32.mrf.mxu0
    %v2014 = vadd.f32 %v1730, %v2013
    %2015 = vmatmul.f32.gmra.mxu0 %v1593
    %v2016 = vpop.f32.mrf.mxu0
    %v2017 = vadd.f32 %v1730, %v2016
    %2018 = vmatmul.f32.gmra.mxu0 %v1595
    %v2019 = vpop.f32.mrf.mxu0
    %v2020 = vadd.f32 %v1730, %v2019
    %2021 = vdwg.mxu0
    %2022 = vmatpush.msra.mxu0 %v1724
    %2023 = vmatpush.msra.mxu0 %v1720
    %2024 = vmatpush.msra.mxu0 %v1716
    %2025 = vmatpush.msra.mxu0 %v1712
    %2026 = vmatpush.msra.mxu0 %v1708
    %2027 = vmatpush.msra.mxu0 %v1704
    %2028 = vmatpush.msra.mxu0 %v1700
    %2029 = vmatpush.msra.mxu0 %v1696
    %2030 = vmatpush.msra.mxu0 %v1692
    %2031 = vmatpush.msra.mxu0 %v1688
    %2032 = vmatpush.msra.mxu0 %v1684
    %2033 = vmatpush.msra.mxu0 %v1680
    %2034 = vmatpush.msra.mxu0 %v1676
    %2035 = vmatpush.msra.mxu0 %v1672
    %2036 = vmatpush.msra.mxu0 %v1668
    %2037 = vmatpush.msra.mxu0 %v1664
    %2038 = vmatmul.f32.gmra.mxu0 %v1582
    %v2039 = vpop.f32.mrf.mxu0
    %v2040 = vadd.f32 %v1999, %v2039
    %2041 = vmatmul.f32.gmra.mxu0 %v1584
    %v2042 = vpop.f32.mrf.mxu0
    %v2043 = vadd.f32 %v2002, %v2042
    %2044 = vmatmul.f32.gmra.mxu0 %v1586
    %v2045 = vpop.f32.mrf.mxu0
    %v2046 = vadd.f32 %v2005, %v2045
    %2047 = vmatmul.f32.gmra.mxu0 %v1588
    %v2048 = vpop.f32.mrf.mxu0
    %v2049 = vadd.f32 %v2008, %v2048
    %2050 = vmatmul.f32.gmra.mxu0 %v1590
    %v2051 = vpop.f32.mrf.mxu0
    %v2052 = vadd.f32 %v2011, %v2051
    %2053 = vmatmul.f32.gmra.mxu0 %v1592
    %v2054 = vpop.f32.mrf.mxu0
    %v2055 = vadd.f32 %v2014, %v2054
    %2056 = vmatmul.f32.gmra.mxu0 %v1594
    %v2057 = vpop.f32.mrf.mxu0
    %v2058 = vadd.f32 %v2017, %v2057
    %2059 = vmatmul.f32.gmra.mxu0 %v1596
    %v2060 = vpop.f32.mrf.mxu0
    %v2061 = vadd.f32 %v2020, %v2060
    %2062 = vdwg.mxu0
    %v2063 = vld [vmem:[#allocation8] sm:$0xff]
    %v2064 = vld [vmem:[#allocation8 + $0x8] sm:$0xff]
    %v2065 = vld [vmem:[#allocation8 + $0x10] sm:$0xff]
    %v2066 = vld [vmem:[#allocation8 + $0x18] sm:$0xff]
    %v2067 = vld [vmem:[#allocation8 + $0x20] sm:$0xff]
    %v2068 = vld [vmem:[#allocation8 + $0x28] sm:$0xff]
    %v2069 = vld [vmem:[#allocation8 + $0x30] sm:$0xff]
    %v2070 = vld [vmem:[#allocation8 + $0x38] sm:$0xff]
    %v2071 = vld [vmem:[#allocation8 + $0x40] sm:$0xff]
    %v2072 = vld [vmem:[#allocation8 + $0x48] sm:$0xff]
    %v2073 = vld [vmem:[#allocation8 + $0x50] sm:$0xff]
    %v2074 = vld [vmem:[#allocation8 + $0x58] sm:$0xff]
    %v2075 = vld [vmem:[#allocation8 + $0x60] sm:$0xff]
    %v2076 = vld [vmem:[#allocation8 + $0x68] sm:$0xff]
    %v2077 = vld [vmem:[#allocation8 + $0x70] sm:$0xff]
    %v2078 = vld [vmem:[#allocation8 + $0x78] sm:$0xff]
    %v2079 = vld [vmem:[#allocation8 + $0x80] sm:$0xff]
    %v2080 = vld [vmem:[#allocation8 + $0x88] sm:$0xff]
    %v2081 = vld [vmem:[#allocation8 + $0x90] sm:$0xff]
    %v2082 = vld [vmem:[#allocation8 + $0x98] sm:$0xff]
    %v2083 = vld [vmem:[#allocation8 + $0xa0] sm:$0xff]
    %v2084 = vld [vmem:[#allocation8 + $0xa8] sm:$0xff]
    %v2085 = vld [vmem:[#allocation8 + $0xb0] sm:$0xff]
    %v2086 = vld [vmem:[#allocation8 + $0xb8] sm:$0xff]
    %v2087 = vld [vmem:[#allocation8 + $0xc0] sm:$0xff]
    %v2088 = vld [vmem:[#allocation8 + $0xc8] sm:$0xff]
    %v2089 = vld [vmem:[#allocation8 + $0xd0] sm:$0xff]
    %v2090 = vld [vmem:[#allocation8 + $0xd8] sm:$0xff]
    %v2091 = vld [vmem:[#allocation8 + $0xe0] sm:$0xff]
    %v2092 = vld [vmem:[#allocation8 + $0xe8] sm:$0xff]
    %v2093 = vld [vmem:[#allocation8 + $0xf0] sm:$0xff]
    %v2094 = vld [vmem:[#allocation8 + $0xf8] sm:$0xff]
    %v2095 = vld [vmem:[#allocation8 + $0x100] sm:$0xff]
    %v2096 = vld [vmem:[#allocation8 + $0x108] sm:$0xff]
    %v2097 = vld [vmem:[#allocation8 + $0x110] sm:$0xff]
    %v2098 = vld [vmem:[#allocation8 + $0x118] sm:$0xff]
    %v2099 = vld [vmem:[#allocation8 + $0x120] sm:$0xff]
    %v2100 = vld [vmem:[#allocation8 + $0x128] sm:$0xff]
    %v2101 = vld [vmem:[#allocation8 + $0x130] sm:$0xff]
    %v2102 = vld [vmem:[#allocation8 + $0x138] sm:$0xff]
    %v2103 = vld [vmem:[#allocation8 + $0x140] sm:$0xff]
    %v2104 = vld [vmem:[#allocation8 + $0x148] sm:$0xff]
    %v2105 = vld [vmem:[#allocation8 + $0x150] sm:$0xff]
    %v2106 = vld [vmem:[#allocation8 + $0x158] sm:$0xff]
    %v2107 = vld [vmem:[#allocation8 + $0x160] sm:$0xff]
    %v2108 = vld [vmem:[#allocation8 + $0x168] sm:$0xff]
    %v2109 = vld [vmem:[#allocation8 + $0x170] sm:$0xff]
    %v2110 = vld [vmem:[#allocation8 + $0x178] sm:$0xff]
    %v2111 = vld [vmem:[#allocation8 + $0x180] sm:$0xff]
    %v2112 = vld [vmem:[#allocation8 + $0x188] sm:$0xff]
    %v2113 = vld [vmem:[#allocation8 + $0x190] sm:$0xff]
    %v2114 = vld [vmem:[#allocation8 + $0x198] sm:$0xff]
    %v2115 = vld [vmem:[#allocation8 + $0x1a0] sm:$0xff]
    %v2116 = vld [vmem:[#allocation8 + $0x1a8] sm:$0xff]
    %v2117 = vld [vmem:[#allocation8 + $0x1b0] sm:$0xff]
    %v2118 = vld [vmem:[#allocation8 + $0x1b8] sm:$0xff]
    %v2119 = vld [vmem:[#allocation8 + $0x1c0] sm:$0xff]
    %v2120 = vld [vmem:[#allocation8 + $0x1c8] sm:$0xff]
    %v2121 = vld [vmem:[#allocation8 + $0x1d0] sm:$0xff]
    %v2122 = vld [vmem:[#allocation8 + $0x1d8] sm:$0xff]
    %v2123 = vld [vmem:[#allocation8 + $0x1e0] sm:$0xff]
    %v2124 = vld [vmem:[#allocation8 + $0x1e8] sm:$0xff]
    %v2125 = vld [vmem:[#allocation8 + $0x1f0] sm:$0xff]
    %v2126 = vld [vmem:[#allocation8 + $0x1f8] sm:$0xff]
    %2127 = vmatpush.msra.mxu0 %v2123
    %2128 = vmatpush.msra.mxu0 %v2119
    %2129 = vmatpush.msra.mxu0 %v2115
    %2130 = vmatpush.msra.mxu0 %v2111
    %2131 = vmatpush.msra.mxu0 %v2107
    %2132 = vmatpush.msra.mxu0 %v2103
    %2133 = vmatpush.msra.mxu0 %v2099
    %2134 = vmatpush.msra.mxu0 %v2095
    %2135 = vmatpush.msra.mxu0 %v2091
    %2136 = vmatpush.msra.mxu0 %v2087
    %2137 = vmatpush.msra.mxu0 %v2083
    %2138 = vmatpush.msra.mxu0 %v2079
    %2139 = vmatpush.msra.mxu0 %v2075
    %2140 = vmatpush.msra.mxu0 %v2071
    %2141 = vmatpush.msra.mxu0 %v2067
    %2142 = vmatpush.msra.mxu0 %v2063
    %2143 = vmatmul.f32.gmra.mxu0 0.0
    %v2144 = vpop.f32.mrf.mxu0
    %v2145 = vadd.f32 0.0, %v2144
    %2146 = vdwg.mxu0
    %2147 = vmatpush.msra.mxu0 %v2124
    %2148 = vmatpush.msra.mxu0 %v2120
    %2149 = vmatpush.msra.mxu0 %v2116
    %2150 = vmatpush.msra.mxu0 %v2112
    %2151 = vmatpush.msra.mxu0 %v2108
    %2152 = vmatpush.msra.mxu0 %v2104
    %2153 = vmatpush.msra.mxu0 %v2100
    %2154 = vmatpush.msra.mxu0 %v2096
    %2155 = vmatpush.msra.mxu0 %v2092
    %2156 = vmatpush.msra.mxu0 %v2088
    %2157 = vmatpush.msra.mxu0 %v2084
    %2158 = vmatpush.msra.mxu0 %v2080
    %2159 = vmatpush.msra.mxu0 %v2076
    %2160 = vmatpush.msra.mxu0 %v2072
    %2161 = vmatpush.msra.mxu0 %v2068
    %2162 = vmatpush.msra.mxu0 %v2064
    %2163 = vmatmul.f32.gmra.mxu0 0.0
    %v2164 = vpop.f32.mrf.mxu0
    %v2165 = vadd.f32 0.0, %v2164
    %2166 = vdwg.mxu0
    %2167 = vmatpush.msra.mxu0 %v2125
    %2168 = vmatpush.msra.mxu0 %v2121
    %2169 = vmatpush.msra.mxu0 %v2117
    %2170 = vmatpush.msra.mxu0 %v2113
    %2171 = vmatpush.msra.mxu0 %v2109
    %2172 = vmatpush.msra.mxu0 %v2105
    %2173 = vmatpush.msra.mxu0 %v2101
    %2174 = vmatpush.msra.mxu0 %v2097
    %2175 = vmatpush.msra.mxu0 %v2093
    %2176 = vmatpush.msra.mxu0 %v2089
    %2177 = vmatpush.msra.mxu0 %v2085
    %2178 = vmatpush.msra.mxu0 %v2081
    %2179 = vmatpush.msra.mxu0 %v2077
    %2180 = vmatpush.msra.mxu0 %v2073
    %2181 = vmatpush.msra.mxu0 %v2069
    %2182 = vmatpush.msra.mxu0 %v2065
    %2183 = vmatmul.f32.gmra.mxu0 0.0
    %v2184 = vpop.f32.mrf.mxu0
    %v2185 = vadd.f32 0.0, %v2184
    %2186 = vdwg.mxu0
    %2187 = vmatpush.msra.mxu0 %v2126
    %2188 = vmatpush.msra.mxu0 %v2122
    %2189 = vmatpush.msra.mxu0 %v2118
    %2190 = vmatpush.msra.mxu0 %v2114
    %2191 = vmatpush.msra.mxu0 %v2110
    %2192 = vmatpush.msra.mxu0 %v2106
    %2193 = vmatpush.msra.mxu0 %v2102
    %2194 = vmatpush.msra.mxu0 %v2098
    %2195 = vmatpush.msra.mxu0 %v2094
    %2196 = vmatpush.msra.mxu0 %v2090
    %2197 = vmatpush.msra.mxu0 %v2086
    %2198 = vmatpush.msra.mxu0 %v2082
    %2199 = vmatpush.msra.mxu0 %v2078
    %2200 = vmatpush.msra.mxu0 %v2074
    %2201 = vmatpush.msra.mxu0 %v2070
    %2202 = vmatpush.msra.mxu0 %v2066
    %2203 = vmatmul.f32.gmra.mxu0 0.0
    %v2204 = vpop.f32.mrf.mxu0
    %v2205 = vadd.f32 0.0, %v2204
    %2206 = vdwg.mxu0
    %v2207 = vadd.f32 %v1794, %v2145
    %v2208 = vadd.f32 %v1876, %v2165
    %v2209 = vadd.f32 %v1958, %v2185
    %v2210 = vadd.f32 %v2040, %v2205
    %v2211 = vxor.u32 %v2207, 2147483648
    %v2212 = vxor.u32 %v2208, 2147483648
    %v2213 = vxor.u32 %v2209, 2147483648
    %v2214 = vmul.f32 %v2211, 1.442695
    %v2215 = vpow.pop %v2214
    %v2216 = vmul.f32 %v2212, 1.442695
    %v2217 = vpow.pop %v2216
    %v2218 = vmul.f32 %v2213, 1.442695
    %v2219 = vpow.pop %v2218
    %v2220 = vadd.f32 %v2215, 1.0
    %v2221 = vadd.f32 %v2217, 1.0
    %v2222 = vadd.f32 %v2219, 1.0
    %v2223 = vrcp.pop %v2220
    %v2224 = vmul.f32 %v2220, %v2223
    %v2225 = vsub.f32 1.0, %v2224
    %v2226 = vmul.f32 %v2223, %v2225
    %v2227 = vadd.f32 %v2223, %v2226
    %vm2228 = vweird.f32 %v2220
    %vm2229 = vweird.f32 %v2223
    %vm2230 = vmor %vm2228, %vm2229
    %v2231 = vsel %vm2230, %v2223, %v2227
    %v2232 = vand.u32 2147483647, %v2220
    %vm2233 = vcmp.eq.f32.partialorder %v2232, 8.507059e+37
    %v2234 = vand.u32 %v2220, 2147483648
    %v2235 = vor.u32 1.1754944e-38, %v2234
    %v2236 = vsel %vm2233, %v2235, %v2231
    %v2237 = vmul.f32 1.0, %v2236
    %v2238 = vrcp.pop %v2221
    %v2239 = vmul.f32 %v2221, %v2238
    %v2240 = vsub.f32 1.0, %v2239
    %v2241 = vmul.f32 %v2238, %v2240
    %v2242 = vadd.f32 %v2238, %v2241
    %vm2243 = vweird.f32 %v2221
    %vm2244 = vweird.f32 %v2238
    %vm2245 = vmor %vm2243, %vm2244
    %v2246 = vsel %vm2245, %v2238, %v2242
    %v2247 = vand.u32 2147483647, %v2221
    %vm2248 = vcmp.eq.f32.partialorder %v2247, 8.507059e+37
    %v2249 = vand.u32 %v2221, 2147483648
    %v2250 = vor.u32 1.1754944e-38, %v2249
    %v2251 = vsel %vm2248, %v2250, %v2246
    %v2252 = vmul.f32 1.0, %v2251
    %v2253 = vrcp.pop %v2222
    %v2254 = vmul.f32 %v2222, %v2253
    %v2255 = vsub.f32 1.0, %v2254
    %v2256 = vmul.f32 %v2253, %v2255
    %v2257 = vadd.f32 %v2253, %v2256
    %vm2258 = vweird.f32 %v2222
    %vm2259 = vweird.f32 %v2253
    %vm2260 = vmor %vm2258, %vm2259
    %v2261 = vsel %vm2260, %v2253, %v2257
    %v2262 = vand.u32 2147483647, %v2222
    %vm2263 = vcmp.eq.f32.partialorder %v2262, 8.507059e+37
    %v2264 = vand.u32 %v2222, 2147483648
    %v2265 = vor.u32 1.1754944e-38, %v2264
    %v2266 = vsel %vm2263, %v2265, %v2261
    %v2267 = vmul.f32 1.0, %v2266
    %v2268 = vtanh.pop %v2210
    %v2269 = vmul.f32 %v2252, 0.0
    %v2270 = vmul.f32 %v2237, %v2268
    %v2271 = vadd.f32 %v2269, %v2270
    %v2272 = vtanh.pop %v2271
    %v2273 = vmul.f32 %v2267, %v2272
    %2274 = vmatpush.msra.mxu0 %v2123
    %2275 = vmatpush.msra.mxu0 %v2119
    %2276 = vmatpush.msra.mxu0 %v2115
    %2277 = vmatpush.msra.mxu0 %v2111
    %2278 = vmatpush.msra.mxu0 %v2107
    %2279 = vmatpush.msra.mxu0 %v2103
    %2280 = vmatpush.msra.mxu0 %v2099
    %2281 = vmatpush.msra.mxu0 %v2095
    %2282 = vmatpush.msra.mxu0 %v2091
    %2283 = vmatpush.msra.mxu0 %v2087
    %2284 = vmatpush.msra.mxu0 %v2083
    %2285 = vmatpush.msra.mxu0 %v2079
    %2286 = vmatpush.msra.mxu0 %v2075
    %2287 = vmatpush.msra.mxu0 %v2071
    %2288 = vmatpush.msra.mxu0 %v2067
    %2289 = vmatpush.msra.mxu0 %v2063
    %2290 = vmatmul.f32.gmra.mxu0 %v2273
    %v2291 = vpop.f32.mrf.mxu0
    %v2292 = vadd.f32 0.0, %v2291
    %2293 = vdwg.mxu0
    %2294 = vmatpush.msra.mxu0 %v2124
    %2295 = vmatpush.msra.mxu0 %v2120
    %2296 = vmatpush.msra.mxu0 %v2116
    %2297 = vmatpush.msra.mxu0 %v2112
    %2298 = vmatpush.msra.mxu0 %v2108
    %2299 = vmatpush.msra.mxu0 %v2104
    %2300 = vmatpush.msra.mxu0 %v2100
    %2301 = vmatpush.msra.mxu0 %v2096
    %2302 = vmatpush.msra.mxu0 %v2092
    %2303 = vmatpush.msra.mxu0 %v2088
    %2304 = vmatpush.msra.mxu0 %v2084
    %2305 = vmatpush.msra.mxu0 %v2080
    %2306 = vmatpush.msra.mxu0 %v2076
    %2307 = vmatpush.msra.mxu0 %v2072
    %2308 = vmatpush.msra.mxu0 %v2068
    %2309 = vmatpush.msra.mxu0 %v2064
    %2310 = vmatmul.f32.gmra.mxu0 %v2273
    %v2311 = vpop.f32.mrf.mxu0
    %v2312 = vadd.f32 0.0, %v2311
    %2313 = vdwg.mxu0
    %2314 = vmatpush.msra.mxu0 %v2125
    %2315 = vmatpush.msra.mxu0 %v2121
    %2316 = vmatpush.msra.mxu0 %v2117
    %2317 = vmatpush.msra.mxu0 %v2113
    %2318 = vmatpush.msra.mxu0 %v2109
    %2319 = vmatpush.msra.mxu0 %v2105
    %2320 = vmatpush.msra.mxu0 %v2101
    %2321 = vmatpush.msra.mxu0 %v2097
    %2322 = vmatpush.msra.mxu0 %v2093
    %2323 = vmatpush.msra.mxu0 %v2089
    %2324 = vmatpush.msra.mxu0 %v2085
    %2325 = vmatpush.msra.mxu0 %v2081
    %2326 = vmatpush.msra.mxu0 %v2077
    %2327 = vmatpush.msra.mxu0 %v2073
    %2328 = vmatpush.msra.mxu0 %v2069
    %2329 = vmatpush.msra.mxu0 %v2065
    %2330 = vmatmul.f32.gmra.mxu0 %v2273
    %v2331 = vpop.f32.mrf.mxu0
    %v2332 = vadd.f32 0.0, %v2331
    %2333 = vdwg.mxu0
    %2334 = vmatpush.msra.mxu0 %v2126
    %2335 = vmatpush.msra.mxu0 %v2122
    %2336 = vmatpush.msra.mxu0 %v2118
    %2337 = vmatpush.msra.mxu0 %v2114
    %2338 = vmatpush.msra.mxu0 %v2110
    %2339 = vmatpush.msra.mxu0 %v2106
    %2340 = vmatpush.msra.mxu0 %v2102
    %2341 = vmatpush.msra.mxu0 %v2098
    %2342 = vmatpush.msra.mxu0 %v2094
    %2343 = vmatpush.msra.mxu0 %v2090
    %2344 = vmatpush.msra.mxu0 %v2086
    %2345 = vmatpush.msra.mxu0 %v2082
    %2346 = vmatpush.msra.mxu0 %v2078
    %2347 = vmatpush.msra.mxu0 %v2074
    %2348 = vmatpush.msra.mxu0 %v2070
    %2349 = vmatpush.msra.mxu0 %v2066
    %2350 = vmatmul.f32.gmra.mxu0 %v2273
    %v2351 = vpop.f32.mrf.mxu0
    %v2352 = vadd.f32 0.0, %v2351
    %2353 = vdwg.mxu0
    %v2354 = vadd.f32 %v1797, %v2292
    %v2355 = vadd.f32 %v1879, %v2312
    %v2356 = vadd.f32 %v1961, %v2332
    %v2357 = vadd.f32 %v2043, %v2352
    %v2358 = vxor.u32 %v2354, 2147483648
    %v2359 = vxor.u32 %v2355, 2147483648
    %v2360 = vxor.u32 %v2356, 2147483648
    %v2361 = vmul.f32 %v2358, 1.442695
    %v2362 = vpow.pop %v2361
    %v2363 = vmul.f32 %v2359, 1.442695
    %v2364 = vpow.pop %v2363
    %v2365 = vmul.f32 %v2360, 1.442695
    %v2366 = vpow.pop %v2365
    %v2367 = vadd.f32 %v2362, 1.0
    %v2368 = vadd.f32 %v2364, 1.0
    %v2369 = vadd.f32 %v2366, 1.0
    %v2370 = vrcp.pop %v2367
    %v2371 = vmul.f32 %v2367, %v2370
    %v2372 = vsub.f32 1.0, %v2371
    %v2373 = vmul.f32 %v2370, %v2372
    %v2374 = vadd.f32 %v2370, %v2373
    %vm2375 = vweird.f32 %v2367
    %vm2376 = vweird.f32 %v2370
    %vm2377 = vmor %vm2375, %vm2376
    %v2378 = vsel %vm2377, %v2370, %v2374
    %v2379 = vand.u32 2147483647, %v2367
    %vm2380 = vcmp.eq.f32.partialorder %v2379, 8.507059e+37
    %v2381 = vand.u32 %v2367, 2147483648
    %v2382 = vor.u32 1.1754944e-38, %v2381
    %v2383 = vsel %vm2380, %v2382, %v2378
    %v2384 = vmul.f32 1.0, %v2383
    %v2385 = vrcp.pop %v2368
    %v2386 = vmul.f32 %v2368, %v2385
    %v2387 = vsub.f32 1.0, %v2386
    %v2388 = vmul.f32 %v2385, %v2387
    %v2389 = vadd.f32 %v2385, %v2388
    %vm2390 = vweird.f32 %v2368
    %vm2391 = vweird.f32 %v2385
    %vm2392 = vmor %vm2390, %vm2391
    %v2393 = vsel %vm2392, %v2385, %v2389
    %v2394 = vand.u32 2147483647, %v2368
    %vm2395 = vcmp.eq.f32.partialorder %v2394, 8.507059e+37
    %v2396 = vand.u32 %v2368, 2147483648
    %v2397 = vor.u32 1.1754944e-38, %v2396
    %v2398 = vsel %vm2395, %v2397, %v2393
    %v2399 = vmul.f32 1.0, %v2398
    %v2400 = vrcp.pop %v2369
    %v2401 = vmul.f32 %v2369, %v2400
    %v2402 = vsub.f32 1.0, %v2401
    %v2403 = vmul.f32 %v2400, %v2402
    %v2404 = vadd.f32 %v2400, %v2403
    %vm2405 = vweird.f32 %v2369
    %vm2406 = vweird.f32 %v2400
    %vm2407 = vmor %vm2405, %vm2406
    %v2408 = vsel %vm2407, %v2400, %v2404
    %v2409 = vand.u32 2147483647, %v2369
    %vm2410 = vcmp.eq.f32.partialorder %v2409, 8.507059e+37
    %v2411 = vand.u32 %v2369, 2147483648
    %v2412 = vor.u32 1.1754944e-38, %v2411
    %v2413 = vsel %vm2410, %v2412, %v2408
    %v2414 = vmul.f32 1.0, %v2413
    %v2415 = vtanh.pop %v2357
    %v2416 = vmul.f32 %v2399, %v2271
    %v2417 = vmul.f32 %v2384, %v2415
    %v2418 = vadd.f32 %v2416, %v2417
    %v2419 = vtanh.pop %v2418
    %v2420 = vmul.f32 %v2414, %v2419
    %2421 = vmatpush.msra.mxu0 %v2123
    %2422 = vmatpush.msra.mxu0 %v2119
    %2423 = vmatpush.msra.mxu0 %v2115
    %2424 = vmatpush.msra.mxu0 %v2111
    %2425 = vmatpush.msra.mxu0 %v2107
    %2426 = vmatpush.msra.mxu0 %v2103
    %2427 = vmatpush.msra.mxu0 %v2099
    %2428 = vmatpush.msra.mxu0 %v2095
    %2429 = vmatpush.msra.mxu0 %v2091
    %2430 = vmatpush.msra.mxu0 %v2087
    %2431 = vmatpush.msra.mxu0 %v2083
    %2432 = vmatpush.msra.mxu0 %v2079
    %2433 = vmatpush.msra.mxu0 %v2075
    %2434 = vmatpush.msra.mxu0 %v2071
    %2435 = vmatpush.msra.mxu0 %v2067
    %2436 = vmatpush.msra.mxu0 %v2063
    %2437 = vmatmul.f32.gmra.mxu0 %v2420
    %v2438 = vpop.f32.mrf.mxu0
    %v2439 = vadd.f32 0.0, %v2438
    %2440 = vdwg.mxu0
    %2441 = vmatpush.msra.mxu0 %v2124
    %2442 = vmatpush.msra.mxu0 %v2120
    %2443 = vmatpush.msra.mxu0 %v2116
    %2444 = vmatpush.msra.mxu0 %v2112
    %2445 = vmatpush.msra.mxu0 %v2108
    %2446 = vmatpush.msra.mxu0 %v2104
    %2447 = vmatpush.msra.mxu0 %v2100
    %2448 = vmatpush.msra.mxu0 %v2096
    %2449 = vmatpush.msra.mxu0 %v2092
    %2450 = vmatpush.msra.mxu0 %v2088
    %2451 = vmatpush.msra.mxu0 %v2084
    %2452 = vmatpush.msra.mxu0 %v2080
    %2453 = vmatpush.msra.mxu0 %v2076
    %2454 = vmatpush.msra.mxu0 %v2072
    %2455 = vmatpush.msra.mxu0 %v2068
    %2456 = vmatpush.msra.mxu0 %v2064
    %2457 = vmatmul.f32.gmra.mxu0 %v2420
    %v2458 = vpop.f32.mrf.mxu0
    %v2459 = vadd.f32 0.0, %v2458
    %2460 = vdwg.mxu0
    %2461 = vmatpush.msra.mxu0 %v2125
    %2462 = vmatpush.msra.mxu0 %v2121
    %2463 = vmatpush.msra.mxu0 %v2117
    %2464 = vmatpush.msra.mxu0 %v2113
    %2465 = vmatpush.msra.mxu0 %v2109
    %2466 = vmatpush.msra.mxu0 %v2105
    %2467 = vmatpush.msra.mxu0 %v2101
    %2468 = vmatpush.msra.mxu0 %v2097
    %2469 = vmatpush.msra.mxu0 %v2093
    %2470 = vmatpush.msra.mxu0 %v2089
    %2471 = vmatpush.msra.mxu0 %v2085
    %2472 = vmatpush.msra.mxu0 %v2081
    %2473 = vmatpush.msra.mxu0 %v2077
    %2474 = vmatpush.msra.mxu0 %v2073
    %2475 = vmatpush.msra.mxu0 %v2069
    %2476 = vmatpush.msra.mxu0 %v2065
    %2477 = vmatmul.f32.gmra.mxu0 %v2420
    %v2478 = vpop.f32.mrf.mxu0
    %v2479 = vadd.f32 0.0, %v2478
    %2480 = vdwg.mxu0
    %2481 = vmatpush.msra.mxu0 %v2126
    %2482 = vmatpush.msra.mxu0 %v2122
    %2483 = vmatpush.msra.mxu0 %v2118
    %2484 = vmatpush.msra.mxu0 %v2114
    %2485 = vmatpush.msra.mxu0 %v2110
    %2486 = vmatpush.msra.mxu0 %v2106
    %2487 = vmatpush.msra.mxu0 %v2102
    %2488 = vmatpush.msra.mxu0 %v2098
    %2489 = vmatpush.msra.mxu0 %v2094
    %2490 = vmatpush.msra.mxu0 %v2090
    %2491 = vmatpush.msra.mxu0 %v2086
    %2492 = vmatpush.msra.mxu0 %v2082
    %2493 = vmatpush.msra.mxu0 %v2078
    %2494 = vmatpush.msra.mxu0 %v2074
    %2495 = vmatpush.msra.mxu0 %v2070
    %2496 = vmatpush.msra.mxu0 %v2066
    %2497 = vmatmul.f32.gmra.mxu0 %v2420
    %v2498 = vpop.f32.mrf.mxu0
    %v2499 = vadd.f32 0.0, %v2498
    %2500 = vdwg.mxu0
    %v2501 = vadd.f32 %v1800, %v2439
    %v2502 = vadd.f32 %v1882, %v2459
    %v2503 = vadd.f32 %v1964, %v2479
    %v2504 = vadd.f32 %v2046, %v2499
    %v2505 = vxor.u32 %v2501, 2147483648
    %v2506 = vxor.u32 %v2502, 2147483648
    %v2507 = vxor.u32 %v2503, 2147483648
    %v2508 = vmul.f32 %v2505, 1.442695
    %v2509 = vpow.pop %v2508
    %v2510 = vmul.f32 %v2506, 1.442695
    %v2511 = vpow.pop %v2510
    %v2512 = vmul.f32 %v2507, 1.442695
    %v2513 = vpow.pop %v2512
    %v2514 = vadd.f32 %v2509, 1.0
    %v2515 = vadd.f32 %v2511, 1.0
    %v2516 = vadd.f32 %v2513, 1.0
    %v2517 = vrcp.pop %v2514
    %v2518 = vmul.f32 %v2514, %v2517
    %v2519 = vsub.f32 1.0, %v2518
    %v2520 = vmul.f32 %v2517, %v2519
    %v2521 = vadd.f32 %v2517, %v2520
    %vm2522 = vweird.f32 %v2514
    %vm2523 = vweird.f32 %v2517
    %vm2524 = vmor %vm2522, %vm2523
    %v2525 = vsel %vm2524, %v2517, %v2521
    %v2526 = vand.u32 2147483647, %v2514
    %vm2527 = vcmp.eq.f32.partialorder %v2526, 8.507059e+37
    %v2528 = vand.u32 %v2514, 2147483648
    %v2529 = vor.u32 1.1754944e-38, %v2528
    %v2530 = vsel %vm2527, %v2529, %v2525
    %v2531 = vmul.f32 1.0, %v2530
    %v2532 = vrcp.pop %v2515
    %v2533 = vmul.f32 %v2515, %v2532
    %v2534 = vsub.f32 1.0, %v2533
    %v2535 = vmul.f32 %v2532, %v2534
    %v2536 = vadd.f32 %v2532, %v2535
    %vm2537 = vweird.f32 %v2515
    %vm2538 = vweird.f32 %v2532
    %vm2539 = vmor %vm2537, %vm2538
    %v2540 = vsel %vm2539, %v2532, %v2536
    %v2541 = vand.u32 2147483647, %v2515
    %vm2542 = vcmp.eq.f32.partialorder %v2541, 8.507059e+37
    %v2543 = vand.u32 %v2515, 2147483648
    %v2544 = vor.u32 1.1754944e-38, %v2543
    %v2545 = vsel %vm2542, %v2544, %v2540
    %v2546 = vmul.f32 1.0, %v2545
    %v2547 = vrcp.pop %v2516
    %v2548 = vmul.f32 %v2516, %v2547
    %v2549 = vsub.f32 1.0, %v2548
    %v2550 = vmul.f32 %v2547, %v2549
    %v2551 = vadd.f32 %v2547, %v2550
    %vm2552 = vweird.f32 %v2516
    %vm2553 = vweird.f32 %v2547
    %vm2554 = vmor %vm2552, %vm2553
    %v2555 = vsel %vm2554, %v2547, %v2551
    %v2556 = vand.u32 2147483647, %v2516
    %vm2557 = vcmp.eq.f32.partialorder %v2556, 8.507059e+37
    %v2558 = vand.u32 %v2516, 2147483648
    %v2559 = vor.u32 1.1754944e-38, %v2558
    %v2560 = vsel %vm2557, %v2559, %v2555
    %v2561 = vmul.f32 1.0, %v2560
    %v2562 = vtanh.pop %v2504
    %v2563 = vmul.f32 %v2546, %v2418
    %v2564 = vmul.f32 %v2531, %v2562
    %v2565 = vadd.f32 %v2563, %v2564
    %v2566 = vtanh.pop %v2565
    %v2567 = vmul.f32 %v2561, %v2566
    %2568 = vmatpush.msra.mxu0 %v2123
    %2569 = vmatpush.msra.mxu0 %v2119
    %2570 = vmatpush.msra.mxu0 %v2115
    %2571 = vmatpush.msra.mxu0 %v2111
    %2572 = vmatpush.msra.mxu0 %v2107
    %2573 = vmatpush.msra.mxu0 %v2103
    %2574 = vmatpush.msra.mxu0 %v2099
    %2575 = vmatpush.msra.mxu0 %v2095
    %2576 = vmatpush.msra.mxu0 %v2091
    %2577 = vmatpush.msra.mxu0 %v2087
    %2578 = vmatpush.msra.mxu0 %v2083
    %2579 = vmatpush.msra.mxu0 %v2079
    %2580 = vmatpush.msra.mxu0 %v2075
    %2581 = vmatpush.msra.mxu0 %v2071
    %2582 = vmatpush.msra.mxu0 %v2067
    %2583 = vmatpush.msra.mxu0 %v2063
    %2584 = vmatmul.f32.gmra.mxu0 %v2567
    %v2585 = vpop.f32.mrf.mxu0
    %v2586 = vadd.f32 0.0, %v2585
    %2587 = vdwg.mxu0
    %2588 = vmatpush.msra.mxu0 %v2124
    %2589 = vmatpush.msra.mxu0 %v2120
    %2590 = vmatpush.msra.mxu0 %v2116
    %2591 = vmatpush.msra.mxu0 %v2112
    %2592 = vmatpush.msra.mxu0 %v2108
    %2593 = vmatpush.msra.mxu0 %v2104
    %2594 = vmatpush.msra.mxu0 %v2100
    %2595 = vmatpush.msra.mxu0 %v2096
    %2596 = vmatpush.msra.mxu0 %v2092
    %2597 = vmatpush.msra.mxu0 %v2088
    %2598 = vmatpush.msra.mxu0 %v2084
    %2599 = vmatpush.msra.mxu0 %v2080
    %2600 = vmatpush.msra.mxu0 %v2076
    %2601 = vmatpush.msra.mxu0 %v2072
    %2602 = vmatpush.msra.mxu0 %v2068
    %2603 = vmatpush.msra.mxu0 %v2064
    %2604 = vmatmul.f32.gmra.mxu0 %v2567
    %v2605 = vpop.f32.mrf.mxu0
    %v2606 = vadd.f32 0.0, %v2605
    %2607 = vdwg.mxu0
    %2608 = vmatpush.msra.mxu0 %v2125
    %2609 = vmatpush.msra.mxu0 %v2121
    %2610 = vmatpush.msra.mxu0 %v2117
    %2611 = vmatpush.msra.mxu0 %v2113
    %2612 = vmatpush.msra.mxu0 %v2109
    %2613 = vmatpush.msra.mxu0 %v2105
    %2614 = vmatpush.msra.mxu0 %v2101
    %2615 = vmatpush.msra.mxu0 %v2097
    %2616 = vmatpush.msra.mxu0 %v2093
    %2617 = vmatpush.msra.mxu0 %v2089
    %2618 = vmatpush.msra.mxu0 %v2085
    %2619 = vmatpush.msra.mxu0 %v2081
    %2620 = vmatpush.msra.mxu0 %v2077
    %2621 = vmatpush.msra.mxu0 %v2073
    %2622 = vmatpush.msra.mxu0 %v2069
    %2623 = vmatpush.msra.mxu0 %v2065
    %2624 = vmatmul.f32.gmra.mxu0 %v2567
    %v2625 = vpop.f32.mrf.mxu0
    %v2626 = vadd.f32 0.0, %v2625
    %2627 = vdwg.mxu0
    %2628 = vmatpush.msra.mxu0 %v2126
    %2629 = vmatpush.msra.mxu0 %v2122
    %2630 = vmatpush.msra.mxu0 %v2118
    %2631 = vmatpush.msra.mxu0 %v2114
    %2632 = vmatpush.msra.mxu0 %v2110
    %2633 = vmatpush.msra.mxu0 %v2106
    %2634 = vmatpush.msra.mxu0 %v2102
    %2635 = vmatpush.msra.mxu0 %v2098
    %2636 = vmatpush.msra.mxu0 %v2094
    %2637 = vmatpush.msra.mxu0 %v2090
    %2638 = vmatpush.msra.mxu0 %v2086
    %2639 = vmatpush.msra.mxu0 %v2082
    %2640 = vmatpush.msra.mxu0 %v2078
    %2641 = vmatpush.msra.mxu0 %v2074
    %2642 = vmatpush.msra.mxu0 %v2070
    %2643 = vmatpush.msra.mxu0 %v2066
    %2644 = vmatmul.f32.gmra.mxu0 %v2567
    %v2645 = vpop.f32.mrf.mxu0
    %v2646 = vadd.f32 0.0, %v2645
    %2647 = vdwg.mxu0
    %v2648 = vadd.f32 %v1803, %v2586
    %v2649 = vadd.f32 %v1885, %v2606
    %v2650 = vadd.f32 %v1967, %v2626
    %v2651 = vadd.f32 %v2049, %v2646
    %v2652 = vxor.u32 %v2648, 2147483648
    %v2653 = vxor.u32 %v2649, 2147483648
    %v2654 = vxor.u32 %v2650, 2147483648
    %v2655 = vmul.f32 %v2652, 1.442695
    %v2656 = vpow.pop %v2655
    %v2657 = vmul.f32 %v2653, 1.442695
    %v2658 = vpow.pop %v2657
    %v2659 = vmul.f32 %v2654, 1.442695
    %v2660 = vpow.pop %v2659
    %v2661 = vadd.f32 %v2656, 1.0
    %v2662 = vadd.f32 %v2658, 1.0
    %v2663 = vadd.f32 %v2660, 1.0
    %v2664 = vrcp.pop %v2661
    %v2665 = vmul.f32 %v2661, %v2664
    %v2666 = vsub.f32 1.0, %v2665
    %v2667 = vmul.f32 %v2664, %v2666
    %v2668 = vadd.f32 %v2664, %v2667
    %vm2669 = vweird.f32 %v2661
    %vm2670 = vweird.f32 %v2664
    %vm2671 = vmor %vm2669, %vm2670
    %v2672 = vsel %vm2671, %v2664, %v2668
    %v2673 = vand.u32 2147483647, %v2661
    %vm2674 = vcmp.eq.f32.partialorder %v2673, 8.507059e+37
    %v2675 = vand.u32 %v2661, 2147483648
    %v2676 = vor.u32 1.1754944e-38, %v2675
    %v2677 = vsel %vm2674, %v2676, %v2672
    %v2678 = vmul.f32 1.0, %v2677
    %v2679 = vrcp.pop %v2662
    %v2680 = vmul.f32 %v2662, %v2679
    %v2681 = vsub.f32 1.0, %v2680
    %v2682 = vmul.f32 %v2679, %v2681
    %v2683 = vadd.f32 %v2679, %v2682
    %vm2684 = vweird.f32 %v2662
    %vm2685 = vweird.f32 %v2679
    %vm2686 = vmor %vm2684, %vm2685
    %v2687 = vsel %vm2686, %v2679, %v2683
    %v2688 = vand.u32 2147483647, %v2662
    %vm2689 = vcmp.eq.f32.partialorder %v2688, 8.507059e+37
    %v2690 = vand.u32 %v2662, 2147483648
    %v2691 = vor.u32 1.1754944e-38, %v2690
    %v2692 = vsel %vm2689, %v2691, %v2687
    %v2693 = vmul.f32 1.0, %v2692
    %v2694 = vrcp.pop %v2663
    %v2695 = vmul.f32 %v2663, %v2694
    %v2696 = vsub.f32 1.0, %v2695
    %v2697 = vmul.f32 %v2694, %v2696
    %v2698 = vadd.f32 %v2694, %v2697
    %vm2699 = vweird.f32 %v2663
    %vm2700 = vweird.f32 %v2694
    %vm2701 = vmor %vm2699, %vm2700
    %v2702 = vsel %vm2701, %v2694, %v2698
    %v2703 = vand.u32 2147483647, %v2663
    %vm2704 = vcmp.eq.f32.partialorder %v2703, 8.507059e+37
    %v2705 = vand.u32 %v2663, 2147483648
    %v2706 = vor.u32 1.1754944e-38, %v2705
    %v2707 = vsel %vm2704, %v2706, %v2702
    %v2708 = vmul.f32 1.0, %v2707
    %v2709 = vtanh.pop %v2651
    %v2710 = vmul.f32 %v2693, %v2565
    %v2711 = vmul.f32 %v2678, %v2709
    %v2712 = vadd.f32 %v2710, %v2711
    %v2713 = vtanh.pop %v2712
    %v2714 = vmul.f32 %v2708, %v2713
    %2715 = vmatpush.msra.mxu0 %v2123
    %2716 = vmatpush.msra.mxu0 %v2119
    %2717 = vmatpush.msra.mxu0 %v2115
    %2718 = vmatpush.msra.mxu0 %v2111
    %2719 = vmatpush.msra.mxu0 %v2107
    %2720 = vmatpush.msra.mxu0 %v2103
    %2721 = vmatpush.msra.mxu0 %v2099
    %2722 = vmatpush.msra.mxu0 %v2095
    %2723 = vmatpush.msra.mxu0 %v2091
    %2724 = vmatpush.msra.mxu0 %v2087
    %2725 = vmatpush.msra.mxu0 %v2083
    %2726 = vmatpush.msra.mxu0 %v2079
    %2727 = vmatpush.msra.mxu0 %v2075
    %2728 = vmatpush.msra.mxu0 %v2071
    %2729 = vmatpush.msra.mxu0 %v2067
    %2730 = vmatpush.msra.mxu0 %v2063
    %2731 = vmatmul.f32.gmra.mxu0 %v2714
    %v2732 = vpop.f32.mrf.mxu0
    %v2733 = vadd.f32 0.0, %v2732
    %2734 = vdwg.mxu0
    %2735 = vmatpush.msra.mxu0 %v2124
    %2736 = vmatpush.msra.mxu0 %v2120
    %2737 = vmatpush.msra.mxu0 %v2116
    %2738 = vmatpush.msra.mxu0 %v2112
    %2739 = vmatpush.msra.mxu0 %v2108
    %2740 = vmatpush.msra.mxu0 %v2104
    %2741 = vmatpush.msra.mxu0 %v2100
    %2742 = vmatpush.msra.mxu0 %v2096
    %2743 = vmatpush.msra.mxu0 %v2092
    %2744 = vmatpush.msra.mxu0 %v2088
    %2745 = vmatpush.msra.mxu0 %v2084
    %2746 = vmatpush.msra.mxu0 %v2080
    %2747 = vmatpush.msra.mxu0 %v2076
    %2748 = vmatpush.msra.mxu0 %v2072
    %2749 = vmatpush.msra.mxu0 %v2068
    %2750 = vmatpush.msra.mxu0 %v2064
    %2751 = vmatmul.f32.gmra.mxu0 %v2714
    %v2752 = vpop.f32.mrf.mxu0
    %v2753 = vadd.f32 0.0, %v2752
    %2754 = vdwg.mxu0
    %2755 = vmatpush.msra.mxu0 %v2125
    %2756 = vmatpush.msra.mxu0 %v2121
    %2757 = vmatpush.msra.mxu0 %v2117
    %2758 = vmatpush.msra.mxu0 %v2113
    %2759 = vmatpush.msra.mxu0 %v2109
    %2760 = vmatpush.msra.mxu0 %v2105
    %2761 = vmatpush.msra.mxu0 %v2101
    %2762 = vmatpush.msra.mxu0 %v2097
    %2763 = vmatpush.msra.mxu0 %v2093
    %2764 = vmatpush.msra.mxu0 %v2089
    %2765 = vmatpush.msra.mxu0 %v2085
    %2766 = vmatpush.msra.mxu0 %v2081
    %2767 = vmatpush.msra.mxu0 %v2077
    %2768 = vmatpush.msra.mxu0 %v2073
    %2769 = vmatpush.msra.mxu0 %v2069
    %2770 = vmatpush.msra.mxu0 %v2065
    %2771 = vmatmul.f32.gmra.mxu0 %v2714
    %v2772 = vpop.f32.mrf.mxu0
    %v2773 = vadd.f32 0.0, %v2772
    %2774 = vdwg.mxu0
    %2775 = vmatpush.msra.mxu0 %v2126
    %2776 = vmatpush.msra.mxu0 %v2122
    %2777 = vmatpush.msra.mxu0 %v2118
    %2778 = vmatpush.msra.mxu0 %v2114
    %2779 = vmatpush.msra.mxu0 %v2110
    %2780 = vmatpush.msra.mxu0 %v2106
    %2781 = vmatpush.msra.mxu0 %v2102
    %2782 = vmatpush.msra.mxu0 %v2098
    %2783 = vmatpush.msra.mxu0 %v2094
    %2784 = vmatpush.msra.mxu0 %v2090
    %2785 = vmatpush.msra.mxu0 %v2086
    %2786 = vmatpush.msra.mxu0 %v2082
    %2787 = vmatpush.msra.mxu0 %v2078
    %2788 = vmatpush.msra.mxu0 %v2074
    %2789 = vmatpush.msra.mxu0 %v2070
    %2790 = vmatpush.msra.mxu0 %v2066
    %2791 = vmatmul.f32.gmra.mxu0 %v2714
    %v2792 = vpop.f32.mrf.mxu0
    %v2793 = vadd.f32 0.0, %v2792
    %2794 = vdwg.mxu0
    %v2795 = vadd.f32 %v1806, %v2733
    %v2796 = vadd.f32 %v1888, %v2753
    %v2797 = vadd.f32 %v1970, %v2773
    %v2798 = vadd.f32 %v2052, %v2793
    %v2799 = vxor.u32 %v2795, 2147483648
    %v2800 = vxor.u32 %v2796, 2147483648
    %v2801 = vxor.u32 %v2797, 2147483648
    %v2802 = vmul.f32 %v2799, 1.442695
    %v2803 = vpow.pop %v2802
    %v2804 = vmul.f32 %v2800, 1.442695
    %v2805 = vpow.pop %v2804
    %v2806 = vmul.f32 %v2801, 1.442695
    %v2807 = vpow.pop %v2806
    %v2808 = vadd.f32 %v2803, 1.0
    %v2809 = vadd.f32 %v2805, 1.0
    %v2810 = vadd.f32 %v2807, 1.0
    %v2811 = vrcp.pop %v2808
    %v2812 = vmul.f32 %v2808, %v2811
    %v2813 = vsub.f32 1.0, %v2812
    %v2814 = vmul.f32 %v2811, %v2813
    %v2815 = vadd.f32 %v2811, %v2814
    %vm2816 = vweird.f32 %v2808
    %vm2817 = vweird.f32 %v2811
    %vm2818 = vmor %vm2816, %vm2817
    %v2819 = vsel %vm2818, %v2811, %v2815
    %v2820 = vand.u32 2147483647, %v2808
    %vm2821 = vcmp.eq.f32.partialorder %v2820, 8.507059e+37
    %v2822 = vand.u32 %v2808, 2147483648
    %v2823 = vor.u32 1.1754944e-38, %v2822
    %v2824 = vsel %vm2821, %v2823, %v2819
    %v2825 = vmul.f32 1.0, %v2824
    %v2826 = vrcp.pop %v2809
    %v2827 = vmul.f32 %v2809, %v2826
    %v2828 = vsub.f32 1.0, %v2827
    %v2829 = vmul.f32 %v2826, %v2828
    %v2830 = vadd.f32 %v2826, %v2829
    %vm2831 = vweird.f32 %v2809
    %vm2832 = vweird.f32 %v2826
    %vm2833 = vmor %vm2831, %vm2832
    %v2834 = vsel %vm2833, %v2826, %v2830
    %v2835 = vand.u32 2147483647, %v2809
    %vm2836 = vcmp.eq.f32.partialorder %v2835, 8.507059e+37
    %v2837 = vand.u32 %v2809, 2147483648
    %v2838 = vor.u32 1.1754944e-38, %v2837
    %v2839 = vsel %vm2836, %v2838, %v2834
    %v2840 = vmul.f32 1.0, %v2839
    %v2841 = vrcp.pop %v2810
    %v2842 = vmul.f32 %v2810, %v2841
    %v2843 = vsub.f32 1.0, %v2842
    %v2844 = vmul.f32 %v2841, %v2843
    %v2845 = vadd.f32 %v2841, %v2844
    %vm2846 = vweird.f32 %v2810
    %vm2847 = vweird.f32 %v2841
    %vm2848 = vmor %vm2846, %vm2847
    %v2849 = vsel %vm2848, %v2841, %v2845
    %v2850 = vand.u32 2147483647, %v2810
    %vm2851 = vcmp.eq.f32.partialorder %v2850, 8.507059e+37
    %v2852 = vand.u32 %v2810, 2147483648
    %v2853 = vor.u32 1.1754944e-38, %v2852
    %v2854 = vsel %vm2851, %v2853, %v2849
    %v2855 = vmul.f32 1.0, %v2854
    %v2856 = vtanh.pop %v2798
    %v2857 = vmul.f32 %v2840, %v2712
    %v2858 = vmul.f32 %v2825, %v2856
    %v2859 = vadd.f32 %v2857, %v2858
    %v2860 = vtanh.pop %v2859
    %v2861 = vmul.f32 %v2855, %v2860
    %2862 = vmatpush.msra.mxu0 %v2123
    %2863 = vmatpush.msra.mxu0 %v2119
    %2864 = vmatpush.msra.mxu0 %v2115
    %2865 = vmatpush.msra.mxu0 %v2111
    %2866 = vmatpush.msra.mxu0 %v2107
    %2867 = vmatpush.msra.mxu0 %v2103
    %2868 = vmatpush.msra.mxu0 %v2099
    %2869 = vmatpush.msra.mxu0 %v2095
    %2870 = vmatpush.msra.mxu0 %v2091
    %2871 = vmatpush.msra.mxu0 %v2087
    %2872 = vmatpush.msra.mxu0 %v2083
    %2873 = vmatpush.msra.mxu0 %v2079
    %2874 = vmatpush.msra.mxu0 %v2075
    %2875 = vmatpush.msra.mxu0 %v2071
    %2876 = vmatpush.msra.mxu0 %v2067
    %2877 = vmatpush.msra.mxu0 %v2063
    %2878 = vmatmul.f32.gmra.mxu0 %v2861
    %v2879 = vpop.f32.mrf.mxu0
    %v2880 = vadd.f32 0.0, %v2879
    %2881 = vdwg.mxu0
    %2882 = vmatpush.msra.mxu0 %v2124
    %2883 = vmatpush.msra.mxu0 %v2120
    %2884 = vmatpush.msra.mxu0 %v2116
    %2885 = vmatpush.msra.mxu0 %v2112
    %2886 = vmatpush.msra.mxu0 %v2108
    %2887 = vmatpush.msra.mxu0 %v2104
    %2888 = vmatpush.msra.mxu0 %v2100
    %2889 = vmatpush.msra.mxu0 %v2096
    %2890 = vmatpush.msra.mxu0 %v2092
    %2891 = vmatpush.msra.mxu0 %v2088
    %2892 = vmatpush.msra.mxu0 %v2084
    %2893 = vmatpush.msra.mxu0 %v2080
    %2894 = vmatpush.msra.mxu0 %v2076
    %2895 = vmatpush.msra.mxu0 %v2072
    %2896 = vmatpush.msra.mxu0 %v2068
    %2897 = vmatpush.msra.mxu0 %v2064
    %2898 = vmatmul.f32.gmra.mxu0 %v2861
    %v2899 = vpop.f32.mrf.mxu0
    %v2900 = vadd.f32 0.0, %v2899
    %2901 = vdwg.mxu0
    %2902 = vmatpush.msra.mxu0 %v2125
    %2903 = vmatpush.msra.mxu0 %v2121
    %2904 = vmatpush.msra.mxu0 %v2117
    %2905 = vmatpush.msra.mxu0 %v2113
    %2906 = vmatpush.msra.mxu0 %v2109
    %2907 = vmatpush.msra.mxu0 %v2105
    %2908 = vmatpush.msra.mxu0 %v2101
    %2909 = vmatpush.msra.mxu0 %v2097
    %2910 = vmatpush.msra.mxu0 %v2093
    %2911 = vmatpush.msra.mxu0 %v2089
    %2912 = vmatpush.msra.mxu0 %v2085
    %2913 = vmatpush.msra.mxu0 %v2081
    %2914 = vmatpush.msra.mxu0 %v2077
    %2915 = vmatpush.msra.mxu0 %v2073
    %2916 = vmatpush.msra.mxu0 %v2069
    %2917 = vmatpush.msra.mxu0 %v2065
    %2918 = vmatmul.f32.gmra.mxu0 %v2861
    %v2919 = vpop.f32.mrf.mxu0
    %v2920 = vadd.f32 0.0, %v2919
    %2921 = vdwg.mxu0
    %2922 = vmatpush.msra.mxu0 %v2126
    %2923 = vmatpush.msra.mxu0 %v2122
    %2924 = vmatpush.msra.mxu0 %v2118
    %2925 = vmatpush.msra.mxu0 %v2114
    %2926 = vmatpush.msra.mxu0 %v2110
    %2927 = vmatpush.msra.mxu0 %v2106
    %2928 = vmatpush.msra.mxu0 %v2102
    %2929 = vmatpush.msra.mxu0 %v2098
    %2930 = vmatpush.msra.mxu0 %v2094
    %2931 = vmatpush.msra.mxu0 %v2090
    %2932 = vmatpush.msra.mxu0 %v2086
    %2933 = vmatpush.msra.mxu0 %v2082
    %2934 = vmatpush.msra.mxu0 %v2078
    %2935 = vmatpush.msra.mxu0 %v2074
    %2936 = vmatpush.msra.mxu0 %v2070
    %2937 = vmatpush.msra.mxu0 %v2066
    %2938 = vmatmul.f32.gmra.mxu0 %v2861
    %v2939 = vpop.f32.mrf.mxu0
    %v2940 = vadd.f32 0.0, %v2939
    %2941 = vdwg.mxu0
    %v2942 = vadd.f32 %v1809, %v2880
    %v2943 = vadd.f32 %v1891, %v2900
    %v2944 = vadd.f32 %v1973, %v2920
    %v2945 = vadd.f32 %v2055, %v2940
    %v2946 = vxor.u32 %v2942, 2147483648
    %v2947 = vxor.u32 %v2943, 2147483648
    %v2948 = vxor.u32 %v2944, 2147483648
    %v2949 = vmul.f32 %v2946, 1.442695
    %v2950 = vpow.pop %v2949
    %v2951 = vmul.f32 %v2947, 1.442695
    %v2952 = vpow.pop %v2951
    %v2953 = vmul.f32 %v2948, 1.442695
    %v2954 = vpow.pop %v2953
    %v2955 = vadd.f32 %v2950, 1.0
    %v2956 = vadd.f32 %v2952, 1.0
    %v2957 = vadd.f32 %v2954, 1.0
    %v2958 = vrcp.pop %v2955
    %v2959 = vmul.f32 %v2955, %v2958
    %v2960 = vsub.f32 1.0, %v2959
    %v2961 = vmul.f32 %v2958, %v2960
    %v2962 = vadd.f32 %v2958, %v2961
    %vm2963 = vweird.f32 %v2955
    %vm2964 = vweird.f32 %v2958
    %vm2965 = vmor %vm2963, %vm2964
    %v2966 = vsel %vm2965, %v2958, %v2962
    %v2967 = vand.u32 2147483647, %v2955
    %vm2968 = vcmp.eq.f32.partialorder %v2967, 8.507059e+37
    %v2969 = vand.u32 %v2955, 2147483648
    %v2970 = vor.u32 1.1754944e-38, %v2969
    %v2971 = vsel %vm2968, %v2970, %v2966
    %v2972 = vmul.f32 1.0, %v2971
    %v2973 = vrcp.pop %v2956
    %v2974 = vmul.f32 %v2956, %v2973
    %v2975 = vsub.f32 1.0, %v2974
    %v2976 = vmul.f32 %v2973, %v2975
    %v2977 = vadd.f32 %v2973, %v2976
    %vm2978 = vweird.f32 %v2956
    %vm2979 = vweird.f32 %v2973
    %vm2980 = vmor %vm2978, %vm2979
    %v2981 = vsel %vm2980, %v2973, %v2977
    %v2982 = vand.u32 2147483647, %v2956
    %vm2983 = vcmp.eq.f32.partialorder %v2982, 8.507059e+37
    %v2984 = vand.u32 %v2956, 2147483648
    %v2985 = vor.u32 1.1754944e-38, %v2984
    %v2986 = vsel %vm2983, %v2985, %v2981
    %v2987 = vmul.f32 1.0, %v2986
    %v2988 = vrcp.pop %v2957
    %v2989 = vmul.f32 %v2957, %v2988
    %v2990 = vsub.f32 1.0, %v2989
    %v2991 = vmul.f32 %v2988, %v2990
    %v2992 = vadd.f32 %v2988, %v2991
    %vm2993 = vweird.f32 %v2957
    %vm2994 = vweird.f32 %v2988
    %vm2995 = vmor %vm2993, %vm2994
    %v2996 = vsel %vm2995, %v2988, %v2992
    %v2997 = vand.u32 2147483647, %v2957
    %vm2998 = vcmp.eq.f32.partialorder %v2997, 8.507059e+37
    %v2999 = vand.u32 %v2957, 2147483648
    %v3000 = vor.u32 1.1754944e-38, %v2999
    %v3001 = vsel %vm2998, %v3000, %v2996
    %v3002 = vmul.f32 1.0, %v3001
    %v3003 = vtanh.pop %v2945
    %v3004 = vmul.f32 %v2987, %v2859
    %v3005 = vmul.f32 %v2972, %v3003
    %v3006 = vadd.f32 %v3004, %v3005
    %v3007 = vtanh.pop %v3006
    %v3008 = vmul.f32 %v3002, %v3007
    %3009 = vmatpush.msra.mxu0 %v2123
    %3010 = vmatpush.msra.mxu0 %v2119
    %3011 = vmatpush.msra.mxu0 %v2115
    %3012 = vmatpush.msra.mxu0 %v2111
    %3013 = vmatpush.msra.mxu0 %v2107
    %3014 = vmatpush.msra.mxu0 %v2103
    %3015 = vmatpush.msra.mxu0 %v2099
    %3016 = vmatpush.msra.mxu0 %v2095
    %3017 = vmatpush.msra.mxu0 %v2091
    %3018 = vmatpush.msra.mxu0 %v2087
    %3019 = vmatpush.msra.mxu0 %v2083
    %3020 = vmatpush.msra.mxu0 %v2079
    %3021 = vmatpush.msra.mxu0 %v2075
    %3022 = vmatpush.msra.mxu0 %v2071
    %3023 = vmatpush.msra.mxu0 %v2067
    %3024 = vmatpush.msra.mxu0 %v2063
    %3025 = vmatmul.f32.gmra.mxu0 %v3008
    %v3026 = vpop.f32.mrf.mxu0
    %v3027 = vadd.f32 0.0, %v3026
    %3028 = vdwg.mxu0
    %3029 = vmatpush.msra.mxu0 %v2124
    %3030 = vmatpush.msra.mxu0 %v2120
    %3031 = vmatpush.msra.mxu0 %v2116
    %3032 = vmatpush.msra.mxu0 %v2112
    %3033 = vmatpush.msra.mxu0 %v2108
    %3034 = vmatpush.msra.mxu0 %v2104
    %3035 = vmatpush.msra.mxu0 %v2100
    %3036 = vmatpush.msra.mxu0 %v2096
    %3037 = vmatpush.msra.mxu0 %v2092
    %3038 = vmatpush.msra.mxu0 %v2088
    %3039 = vmatpush.msra.mxu0 %v2084
    %3040 = vmatpush.msra.mxu0 %v2080
    %3041 = vmatpush.msra.mxu0 %v2076
    %3042 = vmatpush.msra.mxu0 %v2072
    %3043 = vmatpush.msra.mxu0 %v2068
    %3044 = vmatpush.msra.mxu0 %v2064
    %3045 = vmatmul.f32.gmra.mxu0 %v3008
    %v3046 = vpop.f32.mrf.mxu0
    %v3047 = vadd.f32 0.0, %v3046
    %3048 = vdwg.mxu0
    %3049 = vmatpush.msra.mxu0 %v2125
    %3050 = vmatpush.msra.mxu0 %v2121
    %3051 = vmatpush.msra.mxu0 %v2117
    %3052 = vmatpush.msra.mxu0 %v2113
    %3053 = vmatpush.msra.mxu0 %v2109
    %3054 = vmatpush.msra.mxu0 %v2105
    %3055 = vmatpush.msra.mxu0 %v2101
    %3056 = vmatpush.msra.mxu0 %v2097
    %3057 = vmatpush.msra.mxu0 %v2093
    %3058 = vmatpush.msra.mxu0 %v2089
    %3059 = vmatpush.msra.mxu0 %v2085
    %3060 = vmatpush.msra.mxu0 %v2081
    %3061 = vmatpush.msra.mxu0 %v2077
    %3062 = vmatpush.msra.mxu0 %v2073
    %3063 = vmatpush.msra.mxu0 %v2069
    %3064 = vmatpush.msra.mxu0 %v2065
    %3065 = vmatmul.f32.gmra.mxu0 %v3008
    %v3066 = vpop.f32.mrf.mxu0
    %v3067 = vadd.f32 0.0, %v3066
    %3068 = vdwg.mxu0
    %3069 = vmatpush.msra.mxu0 %v2126
    %3070 = vmatpush.msra.mxu0 %v2122
    %3071 = vmatpush.msra.mxu0 %v2118
    %3072 = vmatpush.msra.mxu0 %v2114
    %3073 = vmatpush.msra.mxu0 %v2110
    %3074 = vmatpush.msra.mxu0 %v2106
    %3075 = vmatpush.msra.mxu0 %v2102
    %3076 = vmatpush.msra.mxu0 %v2098
    %3077 = vmatpush.msra.mxu0 %v2094
    %3078 = vmatpush.msra.mxu0 %v2090
    %3079 = vmatpush.msra.mxu0 %v2086
    %3080 = vmatpush.msra.mxu0 %v2082
    %3081 = vmatpush.msra.mxu0 %v2078
    %3082 = vmatpush.msra.mxu0 %v2074
    %3083 = vmatpush.msra.mxu0 %v2070
    %3084 = vmatpush.msra.mxu0 %v2066
    %3085 = vmatmul.f32.gmra.mxu0 %v3008
    %v3086 = vpop.f32.mrf.mxu0
    %v3087 = vadd.f32 0.0, %v3086
    %3088 = vdwg.mxu0
    %v3089 = vadd.f32 %v1812, %v3027
    %v3090 = vadd.f32 %v1894, %v3047
    %v3091 = vadd.f32 %v1976, %v3067
    %v3092 = vadd.f32 %v2058, %v3087
    %v3093 = vxor.u32 %v3089, 2147483648
    %v3094 = vxor.u32 %v3090, 2147483648
    %v3095 = vxor.u32 %v3091, 2147483648
    %v3096 = vmul.f32 %v3093, 1.442695
    %v3097 = vpow.pop %v3096
    %v3098 = vmul.f32 %v3094, 1.442695
    %v3099 = vpow.pop %v3098
    %v3100 = vmul.f32 %v3095, 1.442695
    %v3101 = vpow.pop %v3100
    %v3102 = vadd.f32 %v3097, 1.0
    %v3103 = vadd.f32 %v3099, 1.0
    %v3104 = vadd.f32 %v3101, 1.0
    %v3105 = vrcp.pop %v3102
    %v3106 = vmul.f32 %v3102, %v3105
    %v3107 = vsub.f32 1.0, %v3106
    %v3108 = vmul.f32 %v3105, %v3107
    %v3109 = vadd.f32 %v3105, %v3108
    %vm3110 = vweird.f32 %v3102
    %vm3111 = vweird.f32 %v3105
    %vm3112 = vmor %vm3110, %vm3111
    %v3113 = vsel %vm3112, %v3105, %v3109
    %v3114 = vand.u32 2147483647, %v3102
    %vm3115 = vcmp.eq.f32.partialorder %v3114, 8.507059e+37
    %v3116 = vand.u32 %v3102, 2147483648
    %v3117 = vor.u32 1.1754944e-38, %v3116
    %v3118 = vsel %vm3115, %v3117, %v3113
    %v3119 = vmul.f32 1.0, %v3118
    %v3120 = vrcp.pop %v3103
    %v3121 = vmul.f32 %v3103, %v3120
    %v3122 = vsub.f32 1.0, %v3121
    %v3123 = vmul.f32 %v3120, %v3122
    %v3124 = vadd.f32 %v3120, %v3123
    %vm3125 = vweird.f32 %v3103
    %vm3126 = vweird.f32 %v3120
    %vm3127 = vmor %vm3125, %vm3126
    %v3128 = vsel %vm3127, %v3120, %v3124
    %v3129 = vand.u32 2147483647, %v3103
    %vm3130 = vcmp.eq.f32.partialorder %v3129, 8.507059e+37
    %v3131 = vand.u32 %v3103, 2147483648
    %v3132 = vor.u32 1.1754944e-38, %v3131
    %v3133 = vsel %vm3130, %v3132, %v3128
    %v3134 = vmul.f32 1.0, %v3133
    %v3135 = vrcp.pop %v3104
    %v3136 = vmul.f32 %v3104, %v3135
    %v3137 = vsub.f32 1.0, %v3136
    %v3138 = vmul.f32 %v3135, %v3137
    %v3139 = vadd.f32 %v3135, %v3138
    %vm3140 = vweird.f32 %v3104
    %vm3141 = vweird.f32 %v3135
    %vm3142 = vmor %vm3140, %vm3141
    %v3143 = vsel %vm3142, %v3135, %v3139
    %v3144 = vand.u32 2147483647, %v3104
    %vm3145 = vcmp.eq.f32.partialorder %v3144, 8.507059e+37
    %v3146 = vand.u32 %v3104, 2147483648
    %v3147 = vor.u32 1.1754944e-38, %v3146
    %v3148 = vsel %vm3145, %v3147, %v3143
    %v3149 = vmul.f32 1.0, %v3148
    %v3150 = vtanh.pop %v3092
    %v3151 = vmul.f32 %v3134, %v3006
    %v3152 = vmul.f32 %v3119, %v3150
    %v3153 = vadd.f32 %v3151, %v3152
    %v3154 = vtanh.pop %v3153
    %v3155 = vmul.f32 %v3149, %v3154
    %3156 = vmatpush.msra.mxu0 %v2123
    %3157 = vmatpush.msra.mxu0 %v2119
    %3158 = vmatpush.msra.mxu0 %v2115
    %3159 = vmatpush.msra.mxu0 %v2111
    %3160 = vmatpush.msra.mxu0 %v2107
    %3161 = vmatpush.msra.mxu0 %v2103
    %3162 = vmatpush.msra.mxu0 %v2099
    %3163 = vmatpush.msra.mxu0 %v2095
    %3164 = vmatpush.msra.mxu0 %v2091
    %3165 = vmatpush.msra.mxu0 %v2087
    %3166 = vmatpush.msra.mxu0 %v2083
    %3167 = vmatpush.msra.mxu0 %v2079
    %3168 = vmatpush.msra.mxu0 %v2075
    %3169 = vmatpush.msra.mxu0 %v2071
    %3170 = vmatpush.msra.mxu0 %v2067
    %3171 = vmatpush.msra.mxu0 %v2063
    %3172 = vmatmul.f32.gmra.mxu0 %v3155
    %v3173 = vpop.f32.mrf.mxu0
    %v3174 = vadd.f32 0.0, %v3173
    %3175 = vdwg.mxu0
    %3176 = vmatpush.msra.mxu0 %v2124
    %3177 = vmatpush.msra.mxu0 %v2120
    %3178 = vmatpush.msra.mxu0 %v2116
    %3179 = vmatpush.msra.mxu0 %v2112
    %3180 = vmatpush.msra.mxu0 %v2108
    %3181 = vmatpush.msra.mxu0 %v2104
    %3182 = vmatpush.msra.mxu0 %v2100
    %3183 = vmatpush.msra.mxu0 %v2096
    %3184 = vmatpush.msra.mxu0 %v2092
    %3185 = vmatpush.msra.mxu0 %v2088
    %3186 = vmatpush.msra.mxu0 %v2084
    %3187 = vmatpush.msra.mxu0 %v2080
    %3188 = vmatpush.msra.mxu0 %v2076
    %3189 = vmatpush.msra.mxu0 %v2072
    %3190 = vmatpush.msra.mxu0 %v2068
    %3191 = vmatpush.msra.mxu0 %v2064
    %3192 = vmatmul.f32.gmra.mxu0 %v3155
    %v3193 = vpop.f32.mrf.mxu0
    %v3194 = vadd.f32 0.0, %v3193
    %3195 = vdwg.mxu0
    %3196 = vmatpush.msra.mxu0 %v2125
    %3197 = vmatpush.msra.mxu0 %v2121
    %3198 = vmatpush.msra.mxu0 %v2117
    %3199 = vmatpush.msra.mxu0 %v2113
    %3200 = vmatpush.msra.mxu0 %v2109
    %3201 = vmatpush.msra.mxu0 %v2105
    %3202 = vmatpush.msra.mxu0 %v2101
    %3203 = vmatpush.msra.mxu0 %v2097
    %3204 = vmatpush.msra.mxu0 %v2093
    %3205 = vmatpush.msra.mxu0 %v2089
    %3206 = vmatpush.msra.mxu0 %v2085
    %3207 = vmatpush.msra.mxu0 %v2081
    %3208 = vmatpush.msra.mxu0 %v2077
    %3209 = vmatpush.msra.mxu0 %v2073
    %3210 = vmatpush.msra.mxu0 %v2069
    %3211 = vmatpush.msra.mxu0 %v2065
    %3212 = vmatmul.f32.gmra.mxu0 %v3155
    %v3213 = vpop.f32.mrf.mxu0
    %v3214 = vadd.f32 0.0, %v3213
    %3215 = vdwg.mxu0
    %3216 = vmatpush.msra.mxu0 %v2126
    %3217 = vmatpush.msra.mxu0 %v2122
    %3218 = vmatpush.msra.mxu0 %v2118
    %3219 = vmatpush.msra.mxu0 %v2114
    %3220 = vmatpush.msra.mxu0 %v2110
    %3221 = vmatpush.msra.mxu0 %v2106
    %3222 = vmatpush.msra.mxu0 %v2102
    %3223 = vmatpush.msra.mxu0 %v2098
    %3224 = vmatpush.msra.mxu0 %v2094
    %3225 = vmatpush.msra.mxu0 %v2090
    %3226 = vmatpush.msra.mxu0 %v2086
    %3227 = vmatpush.msra.mxu0 %v2082
    %3228 = vmatpush.msra.mxu0 %v2078
    %3229 = vmatpush.msra.mxu0 %v2074
    %3230 = vmatpush.msra.mxu0 %v2070
    %3231 = vmatpush.msra.mxu0 %v2066
    %3232 = vmatmul.f32.gmra.mxu0 %v3155
    %v3233 = vpop.f32.mrf.mxu0
    %v3234 = vadd.f32 0.0, %v3233
    %3235 = vdwg.mxu0
    %v3236 = vadd.f32 %v1815, %v3174
    %v3237 = vadd.f32 %v1897, %v3194
    %v3238 = vadd.f32 %v1979, %v3214
    %v3239 = vadd.f32 %v2061, %v3234
    %v3240 = vxor.u32 %v3236, 2147483648
    %v3241 = vxor.u32 %v3237, 2147483648
    %v3242 = vxor.u32 %v3238, 2147483648
    %v3243 = vmul.f32 %v3240, 1.442695
    %v3244 = vpow.pop %v3243
    %v3245 = vmul.f32 %v3241, 1.442695
    %v3246 = vpow.pop %v3245
    %v3247 = vmul.f32 %v3242, 1.442695
    %v3248 = vpow.pop %v3247
    %v3249 = vadd.f32 %v3244, 1.0
    %v3250 = vadd.f32 %v3246, 1.0
    %v3251 = vadd.f32 %v3248, 1.0
    %v3252 = vrcp.pop %v3249
    %v3253 = vmul.f32 %v3249, %v3252
    %v3254 = vsub.f32 1.0, %v3253
    %v3255 = vmul.f32 %v3252, %v3254
    %v3256 = vadd.f32 %v3252, %v3255
    %vm3257 = vweird.f32 %v3249
    %vm3258 = vweird.f32 %v3252
    %vm3259 = vmor %vm3257, %vm3258
    %v3260 = vsel %vm3259, %v3252, %v3256
    %v3261 = vand.u32 2147483647, %v3249
    %vm3262 = vcmp.eq.f32.partialorder %v3261, 8.507059e+37
    %v3263 = vand.u32 %v3249, 2147483648
    %v3264 = vor.u32 1.1754944e-38, %v3263
    %v3265 = vsel %vm3262, %v3264, %v3260
    %v3266 = vmul.f32 1.0, %v3265
    %v3267 = vrcp.pop %v3250
    %v3268 = vmul.f32 %v3250, %v3267
    %v3269 = vsub.f32 1.0, %v3268
    %v3270 = vmul.f32 %v3267, %v3269
    %v3271 = vadd.f32 %v3267, %v3270
    %vm3272 = vweird.f32 %v3250
    %vm3273 = vweird.f32 %v3267
    %vm3274 = vmor %vm3272, %vm3273
    %v3275 = vsel %vm3274, %v3267, %v3271
    %v3276 = vand.u32 2147483647, %v3250
    %vm3277 = vcmp.eq.f32.partialorder %v3276, 8.507059e+37
    %v3278 = vand.u32 %v3250, 2147483648
    %v3279 = vor.u32 1.1754944e-38, %v3278
    %v3280 = vsel %vm3277, %v3279, %v3275
    %v3281 = vmul.f32 1.0, %v3280
    %v3282 = vrcp.pop %v3251
    %v3283 = vmul.f32 %v3251, %v3282
    %v3284 = vsub.f32 1.0, %v3283
    %v3285 = vmul.f32 %v3282, %v3284
    %v3286 = vadd.f32 %v3282, %v3285
    %vm3287 = vweird.f32 %v3251
    %vm3288 = vweird.f32 %v3282
    %vm3289 = vmor %vm3287, %vm3288
    %v3290 = vsel %vm3289, %v3282, %v3286
    %v3291 = vand.u32 2147483647, %v3251
    %vm3292 = vcmp.eq.f32.partialorder %v3291, 8.507059e+37
    %v3293 = vand.u32 %v3251, 2147483648
    %v3294 = vor.u32 1.1754944e-38, %v3293
    %v3295 = vsel %vm3292, %v3294, %v3290
    %v3296 = vmul.f32 1.0, %v3295
    %v3297 = vtanh.pop %v3239
    %v3298 = vmul.f32 %v3281, %v3153
    %v3299 = vmul.f32 %v3266, %v3297
    %v3300 = vadd.f32 %v3298, %v3299
    %v3301 = vtanh.pop %v3300
    %v3302 = vmul.f32 %v3296, %v3301
    %v3303 = vld [vmem:[%s7] sm:$0xff]
    %v3304 = vld [vmem:[%s7 + $0x8] sm:$0xff]
    %v3305 = vld [vmem:[%s7 + $0x10] sm:$0xff]
    %v3306 = vld [vmem:[%s7 + $0x18] sm:$0xff]
    %v3307 = vld [vmem:[%s7 + $0x20] sm:$0xff]
    %v3308 = vld [vmem:[%s7 + $0x28] sm:$0xff]
    %v3309 = vld [vmem:[%s7 + $0x30] sm:$0xff]
    %v3310 = vld [vmem:[%s7 + $0x38] sm:$0xff]
    %v3311 = vld [vmem:[%s7 + $0x40] sm:$0xff]
    %v3312 = vld [vmem:[%s7 + $0x48] sm:$0xff]
    %v3313 = vld [vmem:[%s7 + $0x50] sm:$0xff]
    %v3314 = vld [vmem:[%s7 + $0x58] sm:$0xff]
    %v3315 = vld [vmem:[%s7 + $0x60] sm:$0xff]
    %v3316 = vld [vmem:[%s7 + $0x68] sm:$0xff]
    %v3317 = vld [vmem:[%s7 + $0x70] sm:$0xff]
    %v3318 = vld [vmem:[%s7 + $0x78] sm:$0xff]
    %v3319 = vld [vmem:[%s7 + $0x80] sm:$0xff]
    %v3320 = vld [vmem:[%s7 + $0x88] sm:$0xff]
    %v3321 = vld [vmem:[%s7 + $0x90] sm:$0xff]
    %v3322 = vld [vmem:[%s7 + $0x98] sm:$0xff]
    %v3323 = vld [vmem:[%s7 + $0xa0] sm:$0xff]
    %v3324 = vld [vmem:[%s7 + $0xa8] sm:$0xff]
    %v3325 = vld [vmem:[%s7 + $0xb0] sm:$0xff]
    %v3326 = vld [vmem:[%s7 + $0xb8] sm:$0xff]
    %v3327 = vld [vmem:[%s7 + $0xc0] sm:$0xff]
    %v3328 = vld [vmem:[%s7 + $0xc8] sm:$0xff]
    %v3329 = vld [vmem:[%s7 + $0xd0] sm:$0xff]
    %v3330 = vld [vmem:[%s7 + $0xd8] sm:$0xff]
    %v3331 = vld [vmem:[%s7 + $0xe0] sm:$0xff]
    %v3332 = vld [vmem:[%s7 + $0xe8] sm:$0xff]
    %v3333 = vld [vmem:[%s7 + $0xf0] sm:$0xff]
    %v3334 = vld [vmem:[%s7 + $0xf8] sm:$0xff]
    %v3335 = vld [vmem:[%s8] sm:$0x1]
    %v3337 = vperm.slane %v3335, 0
    %3339 = vmatpush.msra.mxu0 %v3318
    %3340 = vmatpush.msra.mxu0 %v3317
    %3341 = vmatpush.msra.mxu0 %v3316
    %3342 = vmatpush.msra.mxu0 %v3315
    %3343 = vmatpush.msra.mxu0 %v3314
    %3344 = vmatpush.msra.mxu0 %v3313
    %3345 = vmatpush.msra.mxu0 %v3312
    %3346 = vmatpush.msra.mxu0 %v3311
    %3347 = vmatpush.msra.mxu0 %v3310
    %3348 = vmatpush.msra.mxu0 %v3309
    %3349 = vmatpush.msra.mxu0 %v3308
    %3350 = vmatpush.msra.mxu0 %v3307
    %3351 = vmatpush.msra.mxu0 %v3306
    %3352 = vmatpush.msra.mxu0 %v3305
    %3353 = vmatpush.msra.mxu0 %v3304
    %3354 = vmatpush.msra.mxu0 %v3303
    %3355 = vmatmul.f32.gmra.mxu0 %v1578
    %v3356 = vpop.f32.mrf.mxu0
    %v3357 = vadd.f32 %v3337, %v3356
    %3358 = vdwg.mxu0
    %3359 = vmatpush.msra.mxu0 %v3334
    %3360 = vmatpush.msra.mxu0 %v3333
    %3361 = vmatpush.msra.mxu0 %v3332
    %3362 = vmatpush.msra.mxu0 %v3331
    %3363 = vmatpush.msra.mxu0 %v3330
    %3364 = vmatpush.msra.mxu0 %v3329
    %3365 = vmatpush.msra.mxu0 %v3328
    %3366 = vmatpush.msra.mxu0 %v3327
    %3367 = vmatpush.msra.mxu0 %v3326
    %3368 = vmatpush.msra.mxu0 %v3325
    %3369 = vmatpush.msra.mxu0 %v3324
    %3370 = vmatpush.msra.mxu0 %v3323
    %3371 = vmatpush.msra.mxu0 %v3322
    %3372 = vmatpush.msra.mxu0 %v3321
    %3373 = vmatpush.msra.mxu0 %v3320
    %3374 = vmatpush.msra.mxu0 %v3319
    %3375 = vmatmul.f32.gmra.mxu0 %v3302
    %v3376 = vpop.f32.mrf.mxu0
    %v3377 = vadd.f32 %v3357, %v3376
    %3378 = vdwg.mxu0
    %v3379 = vxor.u32 %v3377, 2147483648
    %v3380 = vmul.f32 %v3379, 1.442695
    %v3381 = vpow.pop %v3380
    %v3382 = vadd.f32 %v3381, 1.0
    %v3383 = vrcp.pop %v3382
    %v3384 = vmul.f32 %v3382, %v3383
    %v3385 = vsub.f32 1.0, %v3384
    %v3386 = vmul.f32 %v3383, %v3385
    %v3387 = vadd.f32 %v3383, %v3386
    %vm3388 = vweird.f32 %v3382
    %vm3389 = vweird.f32 %v3383
    %vm3390 = vmor %vm3388, %vm3389
    %v3391 = vsel %vm3390, %v3383, %v3387
    %v3392 = vand.u32 2147483647, %v3382
    %vm3393 = vcmp.eq.f32.partialorder %v3392, 8.507059e+37
    %v3394 = vand.u32 %v3382, 2147483648
    %v3395 = vor.u32 1.1754944e-38, %v3394
    %v3396 = vsel %vm3393, %v3395, %v3391
    %v3397 = vmul.f32 1.0, %v3396
    %v3398 = vld [vmem:[%s9] sm:$0xff]
    %v3399 = vld [vmem:[%s9 + $0x8] sm:$0xff]
    %v3400 = vld [vmem:[%s9 + $0x10] sm:$0xff]
    %v3401 = vld [vmem:[%s9 + $0x18] sm:$0xff]
    %v3402 = vld [vmem:[%s9 + $0x20] sm:$0xff]
    %v3403 = vld [vmem:[%s9 + $0x28] sm:$0xff]
    %v3404 = vld [vmem:[%s9 + $0x30] sm:$0xff]
    %v3405 = vld [vmem:[%s9 + $0x38] sm:$0xff]
    %v3406 = vld [vmem:[%s10] sm:$0x1]
    %v3408 = vperm.slane %v3406, 0
    %v3411 = vsel %vm136, %v3397, 0
    %3413 = vmatpush.msra.mxu0 0.0
    %3414 = vmatpush.msra.mxu0 0.0
    %3415 = vmatpush.msra.mxu0 0.0
    %3416 = vmatpush.msra.mxu0 0.0
    %3417 = vmatpush.msra.mxu0 0.0
    %3418 = vmatpush.msra.mxu0 0.0
    %3419 = vmatpush.msra.mxu0 0.0
    %3420 = vmatpush.msra.mxu0 0.0
    %3421 = vmatpush.msra.mxu0 %v3405
    %3422 = vmatpush.msra.mxu0 %v3404
    %3423 = vmatpush.msra.mxu0 %v3403
    %3424 = vmatpush.msra.mxu0 %v3402
    %3425 = vmatpush.msra.mxu0 %v3401
    %3426 = vmatpush.msra.mxu0 %v3400
    %3427 = vmatpush.msra.mxu0 %v3399
    %3428 = vmatpush.msra.mxu0 %v3398
    %3429 = vmatmul.f32.gmra.mxu0 %v3411
    %v3430 = vpop.f32.mrf.mxu0
    %v3431 = vadd.f32 %v3408, %v3430
    %3432 = vdwg.mxu0
    %vm3433 = vcmask 15360
    %v3434 = vsel %vm3433, %v3431, -inf
    %3435 = vmax.xlane.f32.xlu0 %v3434
    %v3436 = vpop.xlane.xlu0 %3435
    %v3437 = vsub.f32 %v3431, %v3436
    %v3438 = vmul.f32 %v3437, 1.442695
    %v3439 = vpow.pop %v3438
    %v3440 = vsel %vm3433, %v3439, 0.0
    %3441 = vadd.xlane.f32.xlu0 %v3440
    %v3442 = vpop.xlane.xlu0 %3441
    %v3443 = vrcp.pop %v3442
    %v3444 = vmul.f32 %v3442, %v3443
    %v3445 = vsub.f32 1.0, %v3444
    %v3446 = vmul.f32 %v3443, %v3445
    %v3447 = vadd.f32 %v3443, %v3446
    %vm3448 = vweird.f32 %v3442
    %vm3449 = vweird.f32 %v3443
    %vm3450 = vmor %vm3448, %vm3449
    %v3451 = vsel %vm3450, %v3443, %v3447
    %v3452 = vand.u32 2147483647, %v3442
    %vm3453 = vcmp.eq.f32.partialorder %v3452, 8.507059e+37
    %v3454 = vand.u32 %v3442, 2147483648
    %v3455 = vor.u32 1.1754944e-38, %v3454
    %v3456 = vsel %vm3453, %v3455, %v3451
    %v3457 = vmul.f32 %v3439, %v3456
    %vm3458 = vcmask 9216
    %3459 = vst.msk [vmem:[#allocation9] sm:$0x3] %vm3458, %v3457
    // Predicated region
    $region58: #{my_lstm_forward.1} parent=1 // pred_check
      _
    $region59: #{my_lstm_forward.1} parent=1 // pred_check_branch
      %3461 = sbr.rel (0) target = $region61
    $region60: #{my_lstm_forward.1} parent=1 // pred_region
      %3463 = vsyncadd [#allocation5], 0
      %s3465 = sshll.u32 [#allocation9], 4
      %s3466 = int_to_ptr.vmem [resolvable:$true] %s3465
      %s3467 = sshll.u32 %s11, 4
      %s3468 = int_to_ptr.hbm [resolvable:$true] %s3467
      %3470 = dma.vmem_to_hbm [thread:$0]  %s3466, 32, %s3468, [#allocation5]
    $region61: #{my_lstm_forward.1} parent=1 // pred_fallthru
      _
    // Predicated region
    $region62: #{my_lstm_forward.1} parent=1 // pred_check
      _
    $region63: #{my_lstm_forward.1} parent=1 // pred_check_branch
      %3472 = sbr.rel (0) target = $region65
    $region64: #{my_lstm_forward.1} parent=1 // pred_region
      %3474 = dma.done [#allocation5], 32
    $region65: #{my_lstm_forward.1} parent=1 // pred_fallthru
      _
    %3475 = vsyncpa [#allocation4], 1
    %3476 = vsyncpa [#allocation7], 1
    %3477 = vsyncpa [#allocation5], 1

</llo_original>
